<compile_context>
chip_gen: v5e
topology: v5e:2x2
jax: 0.10.0
libtpu: 0.0.40
codegen_flags: <defaults>
</compile_context>

<pallas_src>
import functools

import jax
import jax.numpy as jnp
from jax import lax
from jax.experimental import pallas as pl
from jax.experimental.pallas import tpu as pltpu


def _round_up(x, m):
    return ((x + m - 1) // m) * m


def _unroll_for(n_steps):
    # Full unroll for short chunks; partial unroll for long ones (keeps the
    # LLO scheduling win without the vreg-pressure cliff of a full unroll).
    return True if n_steps <= 8 else 4


def _vmem_limit_bytes(seq_len, b_blk, e_p, h_p, t_c, param_dtype):
    w_it = jnp.dtype(param_dtype).itemsize
    f32 = 4
    # Pipeline inputs/outputs are double-buffered by default.
    buffered = 2 * (seq_len * b_blk * e_p * w_it        # x0 (layer-0 input)
                    + e_p * 4 * h_p * w_it              # w_ih0
                    + 2 * h_p * 4 * h_p * w_it          # w_ihr + w_hh
                    + 4 * h_p * f32                     # bias
                    + 2 * b_blk * h_p * f32)            # hidden + cell blocks
    scratch = (seq_len * b_blk * h_p * w_it             # xbuf
               + t_c * b_blk * 4 * h_p * f32)           # gbuf
    need = buffered + scratch
    # Generous headroom for compiler-internal scratch; never below the default
    # scoped limit, never above v7x's 64 MiB physical VMEM.
    return int(min(max(2 * need + (4 << 20), 32 << 20), 64 << 20))


def _make_encoder_kernel(seq_len, b_blk, e_p, h_p, n_layers, t_c, w_dtype):
    """Fused multi-layer LSTM kernel; grid = (batch_blocks, n_layers)."""
    n_chunks = pl.cdiv(seq_len, t_c)

    def kernel(x0_ref, w_ih0_ref, w_ihr_ref, w_hh_ref, b_ref,
               hid_ref, cell_ref, xbuf, gbuf):
        # x0_ref   : (S, B_blk, E_p)    layer-0 embedded input (VMEM-resident)
        # w_ih0_ref: (E_p, 4*H_p)       layer-0 input weights  (VMEM-resident)
        # w_ihr_ref: (H_p, 4*H_p)       this layer's input weights (l >= 1)
        # w_hh_ref : (H_p, 4*H_p)       this layer's hidden weights
        # b_ref    : (1, 4*H_p) f32     this layer's combined bias
        # xbuf     : (S, B_blk, H_p)    inter-layer activations (persistent scratch)
        # gbuf     : (T_c, B_blk, 4H_p) hoisted input-projection gates (f32)
        layer = pl.program_id(1)
        bias = b_ref[...]                       # (1, 4*H_p), tiny

        h = jnp.zeros((b_blk, h_p), jnp.float32)
        c = jnp.zeros((b_blk, h_p), jnp.float32)

        for ci in range(n_chunks):              # static chunk loop
            c0 = ci * t_c
            clen = min(t_c, seq_len - c0)

            # Hoisted, time-parallel input projection (+bias) for this time
            # chunk: one big MXU matmul off the serial critical path.  Layer 0
            # reads the embedded tokens; layers >= 1 read the previous layer's
            # activations straight out of VMEM (xbuf).
            @pl.when(layer == 0)
            def _(c0=c0, clen=clen):
                x = x0_ref[c0:c0 + clen].reshape(clen * b_blk, e_p)
                g = jnp.dot(x, w_ih0_ref[...],
                            preferred_element_type=jnp.float32) + bias
                gbuf[0:clen] = g.reshape(clen, b_blk, 4 * h_p)

            @pl.when(layer > 0)
            def _(c0=c0, clen=clen):
                x = xbuf[c0:c0 + clen].reshape(clen * b_blk, h_p)
                g = jnp.dot(x, w_ihr_ref[...],
                            preferred_element_type=jnp.float32) + bias
                gbuf[0:clen] = g.reshape(clen, b_blk, 4 * h_p)

            def step(j, carry, c0=c0):
                h, c = carry
                # Small (B_blk, H_p) x (H_p, 4H_p) hidden projection, reading
                # the weight tile straight from its VMEM block (no copy).
                gates = gbuf[j] + jnp.dot(
                    h.astype(w_dtype), w_hh_ref[...],
                    preferred_element_type=jnp.float32)
                # PyTorch gate order [i, f, g, o]; every slice is a
                # 128-lane-aligned block of width H_p.
                i_g = jax.nn.sigmoid(gates[:, 0 * h_p:1 * h_p])
                f_g = jax.nn.sigmoid(gates[:, 1 * h_p:2 * h_p])
                g_g = jnp.tanh(gates[:, 2 * h_p:3 * h_p])
                o_g = jax.nn.sigmoid(gates[:, 3 * h_p:4 * h_p])
                c_new = f_g * c + i_g * g_g
                h_new = o_g * jnp.tanh(c_new)
                # Stage this layer's output as the next layer's input (never
                # leaves VMEM).  The (S, B_blk, H_p) layout keeps each slice a
                # whole aligned tile; the write is redundant on the last layer
                # but keeping the hot loop branch-free is cheaper.
                xbuf[c0 + j] = h_new.astype(xbuf.dtype)
                return h_new, c_new

            h, c = lax.fori_loop(0, clen, step, (h, c),
                                 unroll=_unroll_for(clen))

        # Lane-dense (B_blk, H_p) final-state slabs.
        hid_ref[...] = h
        cell_ref[...] = c

    return kernel


def _encoder_lstm(x0, w_ih0, w_ihr, w_hh, b, *, seq_len, b_p, b_blk, e_p, h_p,
                  n_layers, t_c, param_dtype):
    n_bblk = b_p // b_blk
    kernel = _make_encoder_kernel(seq_len, b_blk, e_p, h_p, n_layers, t_c,
                                  param_dtype)
    out_shape = (
        jax.ShapeDtypeStruct((n_layers, b_p, h_p), jnp.float32),   # hidden
        jax.ShapeDtypeStruct((n_layers, b_p, h_p), jnp.float32),   # cell
    )
    vmem_limit = _vmem_limit_bytes(seq_len, b_blk, e_p, h_p, t_c, param_dtype)
    return pl.pallas_call(
        kernel,
        out_shape=out_shape,
        grid=(n_bblk, n_layers),
        in_specs=[
            # Layer-0 input + weights: constant block index along the layer
            # axis => stay VMEM-resident across layers (no re-DMA).
            pl.BlockSpec((seq_len, b_blk, e_p), lambda bi, li: (0, bi, 0)),
            pl.BlockSpec((e_p, 4 * h_p), lambda bi, li: (0, 0)),
            # Per-layer weights/bias stream through VMEM one layer at a time;
            # default double-buffering prefetches layer l+1's weights behind
            # layer l's serial recurrence.
            pl.BlockSpec((None, h_p, 4 * h_p), lambda bi, li: (li, 0, 0)),
            pl.BlockSpec((None, h_p, 4 * h_p), lambda bi, li: (li, 0, 0)),
            pl.BlockSpec((None, 1, 4 * h_p), lambda bi, li: (li, 0, 0)),
        ],
        out_specs=(
            pl.BlockSpec((None, b_blk, h_p), lambda bi, li: (li, bi, 0)),
            pl.BlockSpec((None, b_blk, h_p), lambda bi, li: (li, bi, 0)),
        ),
        scratch_shapes=[
            pltpu.VMEM((seq_len, b_blk, h_p), param_dtype),        # xbuf
            pltpu.VMEM((t_c, b_blk, 4 * h_p), jnp.float32),        # gbuf
        ],
        compiler_params=pltpu.CompilerParams(
            dimension_semantics=("parallel", "arbitrary"),
            vmem_limit_bytes=vmem_limit),
    )(x0, w_ih0, w_ihr, w_hh, b)


@functools.partial(
    jax.jit,
    static_argnames=("hid_dim", "n_layers", "param_dtype", "batch_blocks",
                     "time_chunk"))
def encoder_forward(src, params, *, hid_dim, n_layers,
                    param_dtype=jnp.bfloat16, batch_blocks=1, time_chunk=16):
    """Equivalent of Encoder.forward(src) -> (hidden, cell)."""
    emb = params["embedding"][src]            # (S, B, E) gather (glue)
    # TODO(synk): self.dropout(embedded) and inter-layer LSTM dropout treated
    # as identity (eval / inference mode).
    S, B, E = emb.shape
    H = hid_dim
    H_p = _round_up(H, 128)                            # lane-pad hidden, per gate
    E_p = _round_up(E, 128)                            # layer-0 contraction width only
    sub = 8 * (4 // jnp.dtype(param_dtype).itemsize)   # 8 for f32, 16 for bf16
    B_p = _round_up(B, sub * batch_blocks)             # sublane-pad batch
    b_blk = B_p // batch_blocks
    t_c = max(1, min(time_chunk, S))

    # Layer-0 input: (S, B_p, E_p), cast to the compute dtype.
    x0 = jnp.pad(emb, ((0, 0), (0, B_p - B), (0, E_p - E))).astype(param_dtype)

    # Pre-transpose and gate-wise pad weights ONCE in the wrapper
    # (no per-timestep transposes inside the kernel).
    w_ihr_l, w_hh_l, b_l = [], [], []
    w_ih0 = None
    for layer in range(n_layers):
        w_ih = params[f"w_ih_{layer}"]        # (4H, in_dim), PyTorch layout
        w_hh = params[f"w_hh_{layer}"]        # (4H, H)
        bias = params[f"b_{layer}"]           # (4H,)  == b_ih + b_hh
        in_dim = w_ih.shape[1]
        in_p = E_p if layer == 0 else H_p

        w_ih_t = w_ih.T.reshape(in_dim, 4, H)                 # keep [i,f,g,o] groups
        w_ih_t = jnp.pad(w_ih_t, ((0, in_p - in_dim), (0, 0), (0, H_p - H)))
        w_ih_t = w_ih_t.reshape(in_p, 4 * H_p).astype(param_dtype)
        if layer == 0:
            w_ih0 = w_ih_t
            w_ihr_l.append(jnp.zeros((H_p, 4 * H_p), param_dtype))  # unused slot 0
        else:
            w_ihr_l.append(w_ih_t)

        w_hh_t = w_hh.T.reshape(H, 4, H)
        w_hh_t = jnp.pad(w_hh_t, ((0, H_p - H), (0, 0), (0, H_p - H)))
        w_hh_l.append(w_hh_t.reshape(H_p, 4 * H_p).astype(param_dtype))

        b4 = jnp.pad(bias.reshape(4, H), ((0, 0), (0, H_p - H)))
        b_l.append(b4.reshape(1, 4 * H_p).astype(jnp.float32))

    w_ihr = jnp.stack(w_ihr_l, 0)             # (L, H_p, 4*H_p)  (slot 0 unused)
    w_hh_all = jnp.stack(w_hh_l, 0)           # (L, H_p, 4*H_p)
    b_all = jnp.stack(b_l, 0)                 # (L, 1,   4*H_p)  f32

    hidden_p, cell_p = _encoder_lstm(
        x0, w_ih0, w_ihr, w_hh_all, b_all,
        seq_len=S, b_p=B_p, b_blk=b_blk, e_p=E_p, h_p=H_p,
        n_layers=n_layers, t_c=t_c, param_dtype=param_dtype)
    return hidden_p[:, :B, :H], cell_p[:, :B, :H]


def init_encoder_params(key, input_dim, emb_dim, hid_dim, n_layers):
    """Deterministic synthetic parameters matching nn.Embedding + nn.LSTM shapes."""
    params = {}
    key, k_emb = jax.random.split(key)
    params["embedding"] = jax.random.normal(
        k_emb, (input_dim, emb_dim), jnp.float32) * 0.1
    for layer in range(n_layers):
        in_dim = emb_dim if layer == 0 else hid_dim
        key, k1, k2, k3, k4 = jax.random.split(key, 5)
        scale = 1.0 / jnp.sqrt(hid_dim)
        params[f"w_ih_{layer}"] = jax.random.uniform(
            k1, (4 * hid_dim, in_dim), jnp.float32, -scale, scale)
        params[f"w_hh_{layer}"] = jax.random.uniform(
            k2, (4 * hid_dim, hid_dim), jnp.float32, -scale, scale)
        b_ih = jax.random.uniform(k3, (4 * hid_dim,), jnp.float32, -scale, scale)
        b_hh = jax.random.uniform(k4, (4 * hid_dim,), jnp.float32, -scale, scale)
        params[f"b_{layer}"] = b_ih + b_hh            # combined bias (4H,)
    return params


def _reference_forward(src, params, *, hid_dim, n_layers):
    """Pure-JAX scan reference for correctness checking."""
    x = params["embedding"][src]
    H = hid_dim
    hs, cs = [], []
    for layer in range(n_layers):
        w_ih = params[f"w_ih_{layer}"]
        w_hh = params[f"w_hh_{layer}"]
        b = params[f"b_{layer}"]
        B = x.shape[1]

        def step(carry, x_t, w_ih=w_ih, w_hh=w_hh, b=b):
            h, c = carry
            gates = x_t @ w_ih.T + h @ w_hh.T + b
            i = jax.nn.sigmoid(gates[:, 0 * H:1 * H])
            f = jax.nn.sigmoid(gates[:, 1 * H:2 * H])
            g = jnp.tanh(gates[:, 2 * H:3 * H])
            o = jax.nn.sigmoid(gates[:, 3 * H:4 * H])
            c = f * c + i * g
            h = o * jnp.tanh(c)
            return (h, c), h

        init = (jnp.zeros((B, H), jnp.float32), jnp.zeros((B, H), jnp.float32))
        (h_n, c_n), outs = lax.scan(step, init, x)
        hs.append(h_n)
        cs.append(c_n)
        x = outs
    return jnp.stack(hs, 0), jnp.stack(cs, 0)


if __name__ == "__main__":
    # Small, module-consistent shapes.
    input_dim = 50    # vocab size
    emb_dim = 16
    hid_dim = 32
    n_layers = 2
    seq_len = 8
    batch = 2

    key = jax.random.PRNGKey(0)
    key, k_src, k_params = jax.random.split(key, 3)

    src = jax.random.randint(k_src, (seq_len, batch), 0, input_dim, jnp.int32)
    params = init_encoder_params(k_params, input_dim, emb_dim, hid_dim, n_layers)

    h_ref, c_ref = _reference_forward(src, params, hid_dim=hid_dim,
                                      n_layers=n_layers)

    # 1) Exact-semantics check in f32.
    hidden, cell = encoder_forward(src, params, hid_dim=hid_dim,
                                   n_layers=n_layers, param_dtype=jnp.float32)
    hidden = jax.block_until_ready(hidden)
    cell = jax.block_until_ready(cell)
    assert hidden.shape == (n_layers, batch, hid_dim)
    assert cell.shape == (n_layers, batch, hid_dim)
    assert jnp.allclose(hidden, h_ref, atol=1e-4, rtol=1e-4), (
        float(jnp.max(jnp.abs(hidden - h_ref))))
    assert jnp.allclose(cell, c_ref, atol=1e-4, rtol=1e-4), (
        float(jnp.max(jnp.abs(cell - c_ref))))

    # 2) Production path: bf16 weights/activations, f32 accumulation & state.
    hidden_bf, cell_bf = encoder_forward(src, params, hid_dim=hid_dim,
                                         n_layers=n_layers,
                                         param_dtype=jnp.bfloat16)
    hidden_bf = jax.block_until_ready(hidden_bf)
    assert jnp.allclose(hidden_bf, h_ref, atol=3e-2, rtol=3e-2), (
        float(jnp.max(jnp.abs(hidden_bf - h_ref))))
    assert jnp.allclose(cell_bf, c_ref, atol=3e-2, rtol=3e-2), (
        float(jnp.max(jnp.abs(cell_bf - c_ref))))

    # 3) Exercise the (v7x-oriented) parallel batch-block grid axis.
    batch2 = 16
    key, k_src2 = jax.random.split(key)
    src2 = jax.random.randint(k_src2, (seq_len, batch2), 0, input_dim, jnp.int32)
    h2, c2 = encoder_forward(src2, params, hid_dim=hid_dim, n_layers=n_layers,
                             param_dtype=jnp.float32, batch_blocks=2)
    h2 = jax.block_until_ready(h2)
    h2_ref, c2_ref = _reference_forward(src2, params, hid_dim=hid_dim,
                                        n_layers=n_layers)
    assert jnp.allclose(h2, h2_ref, atol=1e-4, rtol=1e-4), (
        float(jnp.max(jnp.abs(h2 - h2_ref))))
    assert jnp.allclose(c2, c2_ref, atol=1e-4, rtol=1e-4), (
        float(jnp.max(jnp.abs(c2 - c2_ref))))

    print("KERNEL_OK")
</pallas_src>

<mosaic_0001>
module attributes {stable_mosaic.version = 11 : i64} {
  func.func @kernel(%arg0: i32, %arg1: i32, %arg2: memref<8x8x128xf32, #tpu.memory_space<vmem>>, %arg3: memref<128x512xf32, #tpu.memory_space<vmem>>, %arg4: memref<1x128x512xf32, #tpu.memory_space<vmem>>, %arg5: memref<1x128x512xf32, #tpu.memory_space<vmem>>, %arg6: memref<1x1x512xf32, #tpu.memory_space<vmem>>, %arg7: memref<1x8x128xf32, #tpu.memory_space<vmem>>, %arg8: memref<1x8x128xf32, #tpu.memory_space<vmem>>, %arg9: memref<8x8x128xf32, #tpu.memory_space<vmem>>, %arg10: memref<8x8x512xf32, #tpu.memory_space<vmem>>) attributes {dimension_semantics = [#tpu.dimension_semantics<parallel>, #tpu.dimension_semantics<arbitrary>], iteration_bounds = array<i64: 1, 2>, scalar_prefetch = 0 : i64, scratch_operands = 2 : i64, tpu.core_type = #tpu.core_type<tc>, window_params = [{transform_indices = @transform_0, window_bounds = array<i64: 8, 8, 128>}, {pipeline_mode = #tpu.pipeline_mode<synchronous>, transform_indices = @transform_1, window_bounds = array<i64: 128, 512>}, {transform_indices = @transform_2, window_bounds = array<i64: 1, 128, 512>}, {transform_indices = @transform_3, window_bounds = array<i64: 1, 128, 512>}, {transform_indices = @transform_4, window_bounds = array<i64: 1, 1, 512>}, {transform_indices = @transform_5, window_bounds = array<i64: 1, 8, 128>}, {transform_indices = @transform_6, window_bounds = array<i64: 1, 8, 128>}]} {
    %c0 = arith.constant 0 : index
    %c0_0 = arith.constant 0 : index
    %c0_1 = arith.constant 0 : index
    %0 = vector.load %arg6[%c0, %c0_0, %c0_1] : memref<1x1x512xf32, #tpu.memory_space<vmem>>, vector<1x1x512xf32>
    %1 = vector.shape_cast %0 : vector<1x1x512xf32> to vector<1x512xf32>
    %cst = arith.constant 0.000000e+00 : f32
    %2 = vector.broadcast %cst : f32 to vector<8x128xf32>
    %cst_2 = arith.constant 0.000000e+00 : f32
    %3 = vector.broadcast %cst_2 : f32 to vector<8x128xf32>
    %c0_i32 = arith.constant 0 : i32
    %4 = arith.cmpi eq, %arg1, %c0_i32 : i32
    %5 = arith.extui %4 : i1 to i32
    %c0_i32_3 = arith.constant 0 : i32
    %6 = arith.cmpi ne, %5, %c0_i32_3 : i32
    scf.if %6 {
      %c0_109 = arith.constant 0 : index
      %c0_110 = arith.constant 0 : index
      %c0_111 = arith.constant 0 : index
      %312 = vector.load %arg2[%c0_109, %c0_110, %c0_111] : memref<8x8x128xf32, #tpu.memory_space<vmem>>, vector<8x8x128xf32>
      %313 = vector.shape_cast %312 : vector<8x8x128xf32> to vector<64x128xf32>
      %c0_112 = arith.constant 0 : index
      %c0_113 = arith.constant 0 : index
      %314 = vector.load %arg3[%c0_112, %c0_113] : memref<128x512xf32, #tpu.memory_space<vmem>>, vector<128x512xf32>
      %cst_114 = arith.constant dense<0.000000e+00> : vector<64x512xf32>
      %315 = tpu.matmul %313, %314, %cst_114 {dimension_numbers = #tpu.dot_dimension_numbers<[1], [0], [0], [1], [0, 0, 1, 1], [], []>} : vector<64x128xf32>, vector<128x512xf32>, vector<64x512xf32> -> vector<64x512xf32>
      %316 = vector.broadcast %1 : vector<1x512xf32> to vector<64x512xf32>
      %317 = arith.addf %315, %316 : vector<64x512xf32>
      %318 = vector.shape_cast %317 : vector<64x512xf32> to vector<8x8x512xf32>
      %c0_115 = arith.constant 0 : index
      %c0_116 = arith.constant 0 : index
      %c0_117 = arith.constant 0 : index
      %319 = vector.load %arg10[%c0_115, %c0_116, %c0_117] : memref<8x8x512xf32, #tpu.memory_space<vmem>>, vector<8x8x512xf32>
      tpu.vector_store %arg10[%c0_115, %c0_116, %c0_117], %318 {strides = array<i32>} : memref<8x8x512xf32, #tpu.memory_space<vmem>>, vector<8x8x512xf32>,
    } else {
    }
    %c0_i32_4 = arith.constant 0 : i32
    %7 = arith.cmpi sgt, %arg1, %c0_i32_4 : i32
    %8 = arith.extui %7 : i1 to i32
    %c0_i32_5 = arith.constant 0 : i32
    %9 = arith.cmpi ne, %8, %c0_i32_5 : i32
    scf.if %9 {
      %c0_109 = arith.constant 0 : index
      %c0_110 = arith.constant 0 : index
      %c0_111 = arith.constant 0 : index
      %312 = vector.load %arg9[%c0_109, %c0_110, %c0_111] : memref<8x8x128xf32, #tpu.memory_space<vmem>>, vector<8x8x128xf32>
      %313 = vector.shape_cast %312 : vector<8x8x128xf32> to vector<64x128xf32>
      %c0_112 = arith.constant 0 : index
      %c0_113 = arith.constant 0 : index
      %c0_114 = arith.constant 0 : index
      %314 = vector.load %arg4[%c0_112, %c0_113, %c0_114] : memref<1x128x512xf32, #tpu.memory_space<vmem>>, vector<1x128x512xf32>
      %315 = vector.shape_cast %314 : vector<1x128x512xf32> to vector<128x512xf32>
      %cst_115 = arith.constant dense<0.000000e+00> : vector<64x512xf32>
      %316 = tpu.matmul %313, %315, %cst_115 {dimension_numbers = #tpu.dot_dimension_numbers<[1], [0], [0], [1], [0, 0, 1, 1], [], []>} : vector<64x128xf32>, vector<128x512xf32>, vector<64x512xf32> -> vector<64x512xf32>
      %317 = vector.broadcast %1 : vector<1x512xf32> to vector<64x512xf32>
      %318 = arith.addf %316, %317 : vector<64x512xf32>
      %319 = vector.shape_cast %318 : vector<64x512xf32> to vector<8x8x512xf32>
      %c0_116 = arith.constant 0 : index
      %c0_117 = arith.constant 0 : index
      %c0_118 = arith.constant 0 : index
      %320 = vector.load %arg10[%c0_116, %c0_117, %c0_118] : memref<8x8x512xf32, #tpu.memory_space<vmem>>, vector<8x8x512xf32>
      tpu.vector_store %arg10[%c0_116, %c0_117, %c0_118], %319 {strides = array<i32>} : memref<8x8x512xf32, #tpu.memory_space<vmem>>, vector<8x8x512xf32>,
    } else {
    }
    %c0_i32_6 = arith.constant 0 : i32
    %10 = arith.index_cast %c0_i32_6 : i32 to index
    %c0_7 = arith.constant 0 : index
    %c0_8 = arith.constant 0 : index
    %11 = vector.load %arg10[%10, %c0_7, %c0_8] : memref<8x8x512xf32, #tpu.memory_space<vmem>>, vector<1x8x512xf32>
    %12 = vector.shape_cast %11 : vector<1x8x512xf32> to vector<8x512xf32>
    %c0_9 = arith.constant 0 : index
    %c0_10 = arith.constant 0 : index
    %c0_11 = arith.constant 0 : index
    %13 = vector.load %arg5[%c0_9, %c0_10, %c0_11] : memref<1x128x512xf32, #tpu.memory_space<vmem>>, vector<1x128x512xf32>
    %14 = vector.shape_cast %13 : vector<1x128x512xf32> to vector<128x512xf32>
    %cst_12 = arith.constant dense<0.000000e+00> : vector<8x512xf32>
    %15 = tpu.matmul %2, %14, %cst_12 {dimension_numbers = #tpu.dot_dimension_numbers<[1], [0], [0], [1], [0, 0, 1, 1], [], []>} : vector<8x128xf32>, vector<128x512xf32>, vector<8x512xf32> -> vector<8x512xf32>
    %16 = arith.addf %12, %15 : vector<8x512xf32>
    %17 = vector.extract_strided_slice %16 {offsets = [0, 0], sizes = [8, 128], strides = [1, 1]} : vector<8x512xf32> to vector<8x128xf32>
    %18 = arith.negf %17 : vector<8x128xf32>
    %19 = math.exp %18 : vector<8x128xf32>
    %cst_13 = arith.constant 1.000000e+00 : f32
    %20 = vector.broadcast %cst_13 : f32 to vector<8x128xf32>
    %21 = arith.addf %20, %19 : vector<8x128xf32>
    %22 = arith.divf %20, %21 : vector<8x128xf32>
    %23 = vector.extract_strided_slice %16 {offsets = [0, 128], sizes = [8, 128], strides = [1, 1]} : vector<8x512xf32> to vector<8x128xf32>
    %24 = arith.negf %23 : vector<8x128xf32>
    %25 = math.exp %24 : vector<8x128xf32>
    %cst_14 = arith.constant 1.000000e+00 : f32
    %26 = vector.broadcast %cst_14 : f32 to vector<8x128xf32>
    %27 = arith.addf %26, %25 : vector<8x128xf32>
    %28 = arith.divf %26, %27 : vector<8x128xf32>
    %29 = vector.extract_strided_slice %16 {offsets = [0, 256], sizes = [8, 128], strides = [1, 1]} : vector<8x512xf32> to vector<8x128xf32>
    %30 = math.tanh %29 : vector<8x128xf32>
    %31 = vector.extract_strided_slice %16 {offsets = [0, 384], sizes = [8, 128], strides = [1, 1]} : vector<8x512xf32> to vector<8x128xf32>
    %32 = arith.negf %31 : vector<8x128xf32>
    %33 = math.exp %32 : vector<8x128xf32>
    %cst_15 = arith.constant 1.000000e+00 : f32
    %34 = vector.broadcast %cst_15 : f32 to vector<8x128xf32>
    %35 = arith.addf %34, %33 : vector<8x128xf32>
    %36 = arith.divf %34, %35 : vector<8x128xf32>
    %37 = arith.mulf %28, %3 : vector<8x128xf32>
    %38 = arith.mulf %22, %30 : vector<8x128xf32>
    %39 = arith.addf %37, %38 : vector<8x128xf32>
    %40 = math.tanh %39 : vector<8x128xf32>
    %41 = arith.mulf %36, %40 : vector<8x128xf32>
    %c0_i32_16 = arith.constant 0 : i32
    %42 = arith.addi %c0_i32_16, %c0_i32_6 : i32
    %43 = arith.index_cast %42 : i32 to index
    %c0_17 = arith.constant 0 : index
    %c0_18 = arith.constant 0 : index
    %44 = vector.load %arg9[%43, %c0_17, %c0_18] : memref<8x8x128xf32, #tpu.memory_space<vmem>>, vector<1x8x128xf32>
    %45 = vector.shape_cast %44 : vector<1x8x128xf32> to vector<8x128xf32>
    %46 = vector.shape_cast %41 : vector<8x128xf32> to vector<1x8x128xf32>
    tpu.vector_store %arg9[%43, %c0_17, %c0_18], %46 {strides = array<i32>} : memref<8x8x128xf32, #tpu.memory_space<vmem>>, vector<1x8x128xf32>,
    %c1_i32 = arith.constant 1 : i32
    %47 = arith.index_cast %c1_i32 : i32 to index
    %c0_19 = arith.constant 0 : index
    %c0_20 = arith.constant 0 : index
    %48 = vector.load %arg10[%47, %c0_19, %c0_20] : memref<8x8x512xf32, #tpu.memory_space<vmem>>, vector<1x8x512xf32>
    %49 = vector.shape_cast %48 : vector<1x8x512xf32> to vector<8x512xf32>
    %c0_21 = arith.constant 0 : index
    %c0_22 = arith.constant 0 : index
    %c0_23 = arith.constant 0 : index
    %50 = vector.load %arg5[%c0_21, %c0_22, %c0_23] : memref<1x128x512xf32, #tpu.memory_space<vmem>>, vector<1x128x512xf32>
    %51 = vector.shape_cast %50 : vector<1x128x512xf32> to vector<128x512xf32>
    %cst_24 = arith.constant dense<0.000000e+00> : vector<8x512xf32>
    %52 = tpu.matmul %41, %51, %cst_24 {dimension_numbers = #tpu.dot_dimension_numbers<[1], [0], [0], [1], [0, 0, 1, 1], [], []>} : vector<8x128xf32>, vector<128x512xf32>, vector<8x512xf32> -> vector<8x512xf32>
    %53 = arith.addf %49, %52 : vector<8x512xf32>
    %54 = vector.extract_strided_slice %53 {offsets = [0, 0], sizes = [8, 128], strides = [1, 1]} : vector<8x512xf32> to vector<8x128xf32>
    %55 = arith.negf %54 : vector<8x128xf32>
    %56 = math.exp %55 : vector<8x128xf32>
    %cst_25 = arith.constant 1.000000e+00 : f32
    %57 = vector.broadcast %cst_25 : f32 to vector<8x128xf32>
    %58 = arith.addf %57, %56 : vector<8x128xf32>
    %59 = arith.divf %57, %58 : vector<8x128xf32>
    %60 = vector.extract_strided_slice %53 {offsets = [0, 128], sizes = [8, 128], strides = [1, 1]} : vector<8x512xf32> to vector<8x128xf32>
    %61 = arith.negf %60 : vector<8x128xf32>
    %62 = math.exp %61 : vector<8x128xf32>
    %cst_26 = arith.constant 1.000000e+00 : f32
    %63 = vector.broadcast %cst_26 : f32 to vector<8x128xf32>
    %64 = arith.addf %63, %62 : vector<8x128xf32>
    %65 = arith.divf %63, %64 : vector<8x128xf32>
    %66 = vector.extract_strided_slice %53 {offsets = [0, 256], sizes = [8, 128], strides = [1, 1]} : vector<8x512xf32> to vector<8x128xf32>
    %67 = math.tanh %66 : vector<8x128xf32>
    %68 = vector.extract_strided_slice %53 {offsets = [0, 384], sizes = [8, 128], strides = [1, 1]} : vector<8x512xf32> to vector<8x128xf32>
    %69 = arith.negf %68 : vector<8x128xf32>
    %70 = math.exp %69 : vector<8x128xf32>
    %cst_27 = arith.constant 1.000000e+00 : f32
    %71 = vector.broadcast %cst_27 : f32 to vector<8x128xf32>
    %72 = arith.addf %71, %70 : vector<8x128xf32>
    %73 = arith.divf %71, %72 : vector<8x128xf32>
    %74 = arith.mulf %65, %39 : vector<8x128xf32>
    %75 = arith.mulf %59, %67 : vector<8x128xf32>
    %76 = arith.addf %74, %75 : vector<8x128xf32>
    %77 = math.tanh %76 : vector<8x128xf32>
    %78 = arith.mulf %73, %77 : vector<8x128xf32>
    %c0_i32_28 = arith.constant 0 : i32
    %79 = arith.addi %c0_i32_28, %c1_i32 : i32
    %80 = arith.index_cast %79 : i32 to index
    %c0_29 = arith.constant 0 : index
    %c0_30 = arith.constant 0 : index
    %81 = vector.load %arg9[%80, %c0_29, %c0_30] : memref<8x8x128xf32, #tpu.memory_space<vmem>>, vector<1x8x128xf32>
    %82 = vector.shape_cast %81 : vector<1x8x128xf32> to vector<8x128xf32>
    %83 = vector.shape_cast %78 : vector<8x128xf32> to vector<1x8x128xf32>
    tpu.vector_store %arg9[%80, %c0_29, %c0_30], %83 {strides = array<i32>} : memref<8x8x128xf32, #tpu.memory_space<vmem>>, vector<1x8x128xf32>,
    %c2_i32 = arith.constant 2 : i32
    %84 = arith.index_cast %c2_i32 : i32 to index
    %c0_31 = arith.constant 0 : index
    %c0_32 = arith.constant 0 : index
    %85 = vector.load %arg10[%84, %c0_31, %c0_32] : memref<8x8x512xf32, #tpu.memory_space<vmem>>, vector<1x8x512xf32>
    %86 = vector.shape_cast %85 : vector<1x8x512xf32> to vector<8x512xf32>
    %c0_33 = arith.constant 0 : index
    %c0_34 = arith.constant 0 : index
    %c0_35 = arith.constant 0 : index
    %87 = vector.load %arg5[%c0_33, %c0_34, %c0_35] : memref<1x128x512xf32, #tpu.memory_space<vmem>>, vector<1x128x512xf32>
    %88 = vector.shape_cast %87 : vector<1x128x512xf32> to vector<128x512xf32>
    %cst_36 = arith.constant dense<0.000000e+00> : vector<8x512xf32>
    %89 = tpu.matmul %78, %88, %cst_36 {dimension_numbers = #tpu.dot_dimension_numbers<[1], [0], [0], [1], [0, 0, 1, 1], [], []>} : vector<8x128xf32>, vector<128x512xf32>, vector<8x512xf32> -> vector<8x512xf32>
    %90 = arith.addf %86, %89 : vector<8x512xf32>
    %91 = vector.extract_strided_slice %90 {offsets = [0, 0], sizes = [8, 128], strides = [1, 1]} : vector<8x512xf32> to vector<8x128xf32>
    %92 = arith.negf %91 : vector<8x128xf32>
    %93 = math.exp %92 : vector<8x128xf32>
    %cst_37 = arith.constant 1.000000e+00 : f32
    %94 = vector.broadcast %cst_37 : f32 to vector<8x128xf32>
    %95 = arith.addf %94, %93 : vector<8x128xf32>
    %96 = arith.divf %94, %95 : vector<8x128xf32>
    %97 = vector.extract_strided_slice %90 {offsets = [0, 128], sizes = [8, 128], strides = [1, 1]} : vector<8x512xf32> to vector<8x128xf32>
    %98 = arith.negf %97 : vector<8x128xf32>
    %99 = math.exp %98 : vector<8x128xf32>
    %cst_38 = arith.constant 1.000000e+00 : f32
    %100 = vector.broadcast %cst_38 : f32 to vector<8x128xf32>
    %101 = arith.addf %100, %99 : vector<8x128xf32>
    %102 = arith.divf %100, %101 : vector<8x128xf32>
    %103 = vector.extract_strided_slice %90 {offsets = [0, 256], sizes = [8, 128], strides = [1, 1]} : vector<8x512xf32> to vector<8x128xf32>
    %104 = math.tanh %103 : vector<8x128xf32>
    %105 = vector.extract_strided_slice %90 {offsets = [0, 384], sizes = [8, 128], strides = [1, 1]} : vector<8x512xf32> to vector<8x128xf32>
    %106 = arith.negf %105 : vector<8x128xf32>
    %107 = math.exp %106 : vector<8x128xf32>
    %cst_39 = arith.constant 1.000000e+00 : f32
    %108 = vector.broadcast %cst_39 : f32 to vector<8x128xf32>
    %109 = arith.addf %108, %107 : vector<8x128xf32>
    %110 = arith.divf %108, %109 : vector<8x128xf32>
    %111 = arith.mulf %102, %76 : vector<8x128xf32>
    %112 = arith.mulf %96, %104 : vector<8x128xf32>
    %113 = arith.addf %111, %112 : vector<8x128xf32>
    %114 = math.tanh %113 : vector<8x128xf32>
    %115 = arith.mulf %110, %114 : vector<8x128xf32>
    %c0_i32_40 = arith.constant 0 : i32
    %116 = arith.addi %c0_i32_40, %c2_i32 : i32
    %117 = arith.index_cast %116 : i32 to index
    %c0_41 = arith.constant 0 : index
    %c0_42 = arith.constant 0 : index
    %118 = vector.load %arg9[%117, %c0_41, %c0_42] : memref<8x8x128xf32, #tpu.memory_space<vmem>>, vector<1x8x128xf32>
    %119 = vector.shape_cast %118 : vector<1x8x128xf32> to vector<8x128xf32>
    %120 = vector.shape_cast %115 : vector<8x128xf32> to vector<1x8x128xf32>
    tpu.vector_store %arg9[%117, %c0_41, %c0_42], %120 {strides = array<i32>} : memref<8x8x128xf32, #tpu.memory_space<vmem>>, vector<1x8x128xf32>,
    %c3_i32 = arith.constant 3 : i32
    %121 = arith.index_cast %c3_i32 : i32 to index
    %c0_43 = arith.constant 0 : index
    %c0_44 = arith.constant 0 : index
    %122 = vector.load %arg10[%121, %c0_43, %c0_44] : memref<8x8x512xf32, #tpu.memory_space<vmem>>, vector<1x8x512xf32>
    %123 = vector.shape_cast %122 : vector<1x8x512xf32> to vector<8x512xf32>
    %c0_45 = arith.constant 0 : index
    %c0_46 = arith.constant 0 : index
    %c0_47 = arith.constant 0 : index
    %124 = vector.load %arg5[%c0_45, %c0_46, %c0_47] : memref<1x128x512xf32, #tpu.memory_space<vmem>>, vector<1x128x512xf32>
    %125 = vector.shape_cast %124 : vector<1x128x512xf32> to vector<128x512xf32>
    %cst_48 = arith.constant dense<0.000000e+00> : vector<8x512xf32>
    %126 = tpu.matmul %115, %125, %cst_48 {dimension_numbers = #tpu.dot_dimension_numbers<[1], [0], [0], [1], [0, 0, 1, 1], [], []>} : vector<8x128xf32>, vector<128x512xf32>, vector<8x512xf32> -> vector<8x512xf32>
    %127 = arith.addf %123, %126 : vector<8x512xf32>
    %128 = vector.extract_strided_slice %127 {offsets = [0, 0], sizes = [8, 128], strides = [1, 1]} : vector<8x512xf32> to vector<8x128xf32>
    %129 = arith.negf %128 : vector<8x128xf32>
    %130 = math.exp %129 : vector<8x128xf32>
    %cst_49 = arith.constant 1.000000e+00 : f32
    %131 = vector.broadcast %cst_49 : f32 to vector<8x128xf32>
    %132 = arith.addf %131, %130 : vector<8x128xf32>
    %133 = arith.divf %131, %132 : vector<8x128xf32>
    %134 = vector.extract_strided_slice %127 {offsets = [0, 128], sizes = [8, 128], strides = [1, 1]} : vector<8x512xf32> to vector<8x128xf32>
    %135 = arith.negf %134 : vector<8x128xf32>
    %136 = math.exp %135 : vector<8x128xf32>
    %cst_50 = arith.constant 1.000000e+00 : f32
    %137 = vector.broadcast %cst_50 : f32 to vector<8x128xf32>
    %138 = arith.addf %137, %136 : vector<8x128xf32>
    %139 = arith.divf %137, %138 : vector<8x128xf32>
    %140 = vector.extract_strided_slice %127 {offsets = [0, 256], sizes = [8, 128], strides = [1, 1]} : vector<8x512xf32> to vector<8x128xf32>
    %141 = math.tanh %140 : vector<8x128xf32>
    %142 = vector.extract_strided_slice %127 {offsets = [0, 384], sizes = [8, 128], strides = [1, 1]} : vector<8x512xf32> to vector<8x128xf32>
    %143 = arith.negf %142 : vector<8x128xf32>
    %144 = math.exp %143 : vector<8x128xf32>
    %cst_51 = arith.constant 1.000000e+00 : f32
    %145 = vector.broadcast %cst_51 : f32 to vector<8x128xf32>
    %146 = arith.addf %145, %144 : vector<8x128xf32>
    %147 = arith.divf %145, %146 : vector<8x128xf32>
    %148 = arith.mulf %139, %113 : vector<8x128xf32>
    %149 = arith.mulf %133, %141 : vector<8x128xf32>
    %150 = arith.addf %148, %149 : vector<8x128xf32>
    %151 = math.tanh %150 : vector<8x128xf32>
    %152 = arith.mulf %147, %151 : vector<8x128xf32>
    %c0_i32_52 = arith.constant 0 : i32
    %153 = arith.addi %c0_i32_52, %c3_i32 : i32
    %154 = arith.index_cast %153 : i32 to index
    %c0_53 = arith.constant 0 : index
    %c0_54 = arith.constant 0 : index
    %155 = vector.load %arg9[%154, %c0_53, %c0_54] : memref<8x8x128xf32, #tpu.memory_space<vmem>>, vector<1x8x128xf32>
    %156 = vector.shape_cast %155 : vector<1x8x128xf32> to vector<8x128xf32>
    %157 = vector.shape_cast %152 : vector<8x128xf32> to vector<1x8x128xf32>
    tpu.vector_store %arg9[%154, %c0_53, %c0_54], %157 {strides = array<i32>} : memref<8x8x128xf32, #tpu.memory_space<vmem>>, vector<1x8x128xf32>,
    %c4_i32 = arith.constant 4 : i32
    %158 = arith.index_cast %c4_i32 : i32 to index
    %c0_55 = arith.constant 0 : index
    %c0_56 = arith.constant 0 : index
    %159 = vector.load %arg10[%158, %c0_55, %c0_56] : memref<8x8x512xf32, #tpu.memory_space<vmem>>, vector<1x8x512xf32>
    %160 = vector.shape_cast %159 : vector<1x8x512xf32> to vector<8x512xf32>
    %c0_57 = arith.constant 0 : index
    %c0_58 = arith.constant 0 : index
    %c0_59 = arith.constant 0 : index
    %161 = vector.load %arg5[%c0_57, %c0_58, %c0_59] : memref<1x128x512xf32, #tpu.memory_space<vmem>>, vector<1x128x512xf32>
    %162 = vector.shape_cast %161 : vector<1x128x512xf32> to vector<128x512xf32>
    %cst_60 = arith.constant dense<0.000000e+00> : vector<8x512xf32>
    %163 = tpu.matmul %152, %162, %cst_60 {dimension_numbers = #tpu.dot_dimension_numbers<[1], [0], [0], [1], [0, 0, 1, 1], [], []>} : vector<8x128xf32>, vector<128x512xf32>, vector<8x512xf32> -> vector<8x512xf32>
    %164 = arith.addf %160, %163 : vector<8x512xf32>
    %165 = vector.extract_strided_slice %164 {offsets = [0, 0], sizes = [8, 128], strides = [1, 1]} : vector<8x512xf32> to vector<8x128xf32>
    %166 = arith.negf %165 : vector<8x128xf32>
    %167 = math.exp %166 : vector<8x128xf32>
    %cst_61 = arith.constant 1.000000e+00 : f32
    %168 = vector.broadcast %cst_61 : f32 to vector<8x128xf32>
    %169 = arith.addf %168, %167 : vector<8x128xf32>
    %170 = arith.divf %168, %169 : vector<8x128xf32>
    %171 = vector.extract_strided_slice %164 {offsets = [0, 128], sizes = [8, 128], strides = [1, 1]} : vector<8x512xf32> to vector<8x128xf32>
    %172 = arith.negf %171 : vector<8x128xf32>
    %173 = math.exp %172 : vector<8x128xf32>
    %cst_62 = arith.constant 1.000000e+00 : f32
    %174 = vector.broadcast %cst_62 : f32 to vector<8x128xf32>
    %175 = arith.addf %174, %173 : vector<8x128xf32>
    %176 = arith.divf %174, %175 : vector<8x128xf32>
    %177 = vector.extract_strided_slice %164 {offsets = [0, 256], sizes = [8, 128], strides = [1, 1]} : vector<8x512xf32> to vector<8x128xf32>
    %178 = math.tanh %177 : vector<8x128xf32>
    %179 = vector.extract_strided_slice %164 {offsets = [0, 384], sizes = [8, 128], strides = [1, 1]} : vector<8x512xf32> to vector<8x128xf32>
    %180 = arith.negf %179 : vector<8x128xf32>
    %181 = math.exp %180 : vector<8x128xf32>
    %cst_63 = arith.constant 1.000000e+00 : f32
    %182 = vector.broadcast %cst_63 : f32 to vector<8x128xf32>
    %183 = arith.addf %182, %181 : vector<8x128xf32>
    %184 = arith.divf %182, %183 : vector<8x128xf32>
    %185 = arith.mulf %176, %150 : vector<8x128xf32>
    %186 = arith.mulf %170, %178 : vector<8x128xf32>
    %187 = arith.addf %185, %186 : vector<8x128xf32>
    %188 = math.tanh %187 : vector<8x128xf32>
    %189 = arith.mulf %184, %188 : vector<8x128xf32>
    %c0_i32_64 = arith.constant 0 : i32
    %190 = arith.addi %c0_i32_64, %c4_i32 : i32
    %191 = arith.index_cast %190 : i32 to index
    %c0_65 = arith.constant 0 : index
    %c0_66 = arith.constant 0 : index
    %192 = vector.load %arg9[%191, %c0_65, %c0_66] : memref<8x8x128xf32, #tpu.memory_space<vmem>>, vector<1x8x128xf32>
    %193 = vector.shape_cast %192 : vector<1x8x128xf32> to vector<8x128xf32>
    %194 = vector.shape_cast %189 : vector<8x128xf32> to vector<1x8x128xf32>
    tpu.vector_store %arg9[%191, %c0_65, %c0_66], %194 {strides = array<i32>} : memref<8x8x128xf32, #tpu.memory_space<vmem>>, vector<1x8x128xf32>,
    %c5_i32 = arith.constant 5 : i32
    %195 = arith.index_cast %c5_i32 : i32 to index
    %c0_67 = arith.constant 0 : index
    %c0_68 = arith.constant 0 : index
    %196 = vector.load %arg10[%195, %c0_67, %c0_68] : memref<8x8x512xf32, #tpu.memory_space<vmem>>, vector<1x8x512xf32>
    %197 = vector.shape_cast %196 : vector<1x8x512xf32> to vector<8x512xf32>
    %c0_69 = arith.constant 0 : index
    %c0_70 = arith.constant 0 : index
    %c0_71 = arith.constant 0 : index
    %198 = vector.load %arg5[%c0_69, %c0_70, %c0_71] : memref<1x128x512xf32, #tpu.memory_space<vmem>>, vector<1x128x512xf32>
    %199 = vector.shape_cast %198 : vector<1x128x512xf32> to vector<128x512xf32>
    %cst_72 = arith.constant dense<0.000000e+00> : vector<8x512xf32>
    %200 = tpu.matmul %189, %199, %cst_72 {dimension_numbers = #tpu.dot_dimension_numbers<[1], [0], [0], [1], [0, 0, 1, 1], [], []>} : vector<8x128xf32>, vector<128x512xf32>, vector<8x512xf32> -> vector<8x512xf32>
    %201 = arith.addf %197, %200 : vector<8x512xf32>
    %202 = vector.extract_strided_slice %201 {offsets = [0, 0], sizes = [8, 128], strides = [1, 1]} : vector<8x512xf32> to vector<8x128xf32>
    %203 = arith.negf %202 : vector<8x128xf32>
    %204 = math.exp %203 : vector<8x128xf32>
    %cst_73 = arith.constant 1.000000e+00 : f32
    %205 = vector.broadcast %cst_73 : f32 to vector<8x128xf32>
    %206 = arith.addf %205, %204 : vector<8x128xf32>
    %207 = arith.divf %205, %206 : vector<8x128xf32>
    %208 = vector.extract_strided_slice %201 {offsets = [0, 128], sizes = [8, 128], strides = [1, 1]} : vector<8x512xf32> to vector<8x128xf32>
    %209 = arith.negf %208 : vector<8x128xf32>
    %210 = math.exp %209 : vector<8x128xf32>
    %cst_74 = arith.constant 1.000000e+00 : f32
    %211 = vector.broadcast %cst_74 : f32 to vector<8x128xf32>
    %212 = arith.addf %211, %210 : vector<8x128xf32>
    %213 = arith.divf %211, %212 : vector<8x128xf32>
    %214 = vector.extract_strided_slice %201 {offsets = [0, 256], sizes = [8, 128], strides = [1, 1]} : vector<8x512xf32> to vector<8x128xf32>
    %215 = math.tanh %214 : vector<8x128xf32>
    %216 = vector.extract_strided_slice %201 {offsets = [0, 384], sizes = [8, 128], strides = [1, 1]} : vector<8x512xf32> to vector<8x128xf32>
    %217 = arith.negf %216 : vector<8x128xf32>
    %218 = math.exp %217 : vector<8x128xf32>
    %cst_75 = arith.constant 1.000000e+00 : f32
    %219 = vector.broadcast %cst_75 : f32 to vector<8x128xf32>
    %220 = arith.addf %219, %218 : vector<8x128xf32>
    %221 = arith.divf %219, %220 : vector<8x128xf32>
    %222 = arith.mulf %213, %187 : vector<8x128xf32>
    %223 = arith.mulf %207, %215 : vector<8x128xf32>
    %224 = arith.addf %222, %223 : vector<8x128xf32>
    %225 = math.tanh %224 : vector<8x128xf32>
    %226 = arith.mulf %221, %225 : vector<8x128xf32>
    %c0_i32_76 = arith.constant 0 : i32
    %227 = arith.addi %c0_i32_76, %c5_i32 : i32
    %228 = arith.index_cast %227 : i32 to index
    %c0_77 = arith.constant 0 : index
    %c0_78 = arith.constant 0 : index
    %229 = vector.load %arg9[%228, %c0_77, %c0_78] : memref<8x8x128xf32, #tpu.memory_space<vmem>>, vector<1x8x128xf32>
    %230 = vector.shape_cast %229 : vector<1x8x128xf32> to vector<8x128xf32>
    %231 = vector.shape_cast %226 : vector<8x128xf32> to vector<1x8x128xf32>
    tpu.vector_store %arg9[%228, %c0_77, %c0_78], %231 {strides = array<i32>} : memref<8x8x128xf32, #tpu.memory_space<vmem>>, vector<1x8x128xf32>,
    %c6_i32 = arith.constant 6 : i32
    %232 = arith.index_cast %c6_i32 : i32 to index
    %c0_79 = arith.constant 0 : index
    %c0_80 = arith.constant 0 : index
    %233 = vector.load %arg10[%232, %c0_79, %c0_80] : memref<8x8x512xf32, #tpu.memory_space<vmem>>, vector<1x8x512xf32>
    %234 = vector.shape_cast %233 : vector<1x8x512xf32> to vector<8x512xf32>
    %c0_81 = arith.constant 0 : index
    %c0_82 = arith.constant 0 : index
    %c0_83 = arith.constant 0 : index
    %235 = vector.load %arg5[%c0_81, %c0_82, %c0_83] : memref<1x128x512xf32, #tpu.memory_space<vmem>>, vector<1x128x512xf32>
    %236 = vector.shape_cast %235 : vector<1x128x512xf32> to vector<128x512xf32>
    %cst_84 = arith.constant dense<0.000000e+00> : vector<8x512xf32>
    %237 = tpu.matmul %226, %236, %cst_84 {dimension_numbers = #tpu.dot_dimension_numbers<[1], [0], [0], [1], [0, 0, 1, 1], [], []>} : vector<8x128xf32>, vector<128x512xf32>, vector<8x512xf32> -> vector<8x512xf32>
    %238 = arith.addf %234, %237 : vector<8x512xf32>
    %239 = vector.extract_strided_slice %238 {offsets = [0, 0], sizes = [8, 128], strides = [1, 1]} : vector<8x512xf32> to vector<8x128xf32>
    %240 = arith.negf %239 : vector<8x128xf32>
    %241 = math.exp %240 : vector<8x128xf32>
    %cst_85 = arith.constant 1.000000e+00 : f32
    %242 = vector.broadcast %cst_85 : f32 to vector<8x128xf32>
    %243 = arith.addf %242, %241 : vector<8x128xf32>
    %244 = arith.divf %242, %243 : vector<8x128xf32>
    %245 = vector.extract_strided_slice %238 {offsets = [0, 128], sizes = [8, 128], strides = [1, 1]} : vector<8x512xf32> to vector<8x128xf32>
    %246 = arith.negf %245 : vector<8x128xf32>
    %247 = math.exp %246 : vector<8x128xf32>
    %cst_86 = arith.constant 1.000000e+00 : f32
    %248 = vector.broadcast %cst_86 : f32 to vector<8x128xf32>
    %249 = arith.addf %248, %247 : vector<8x128xf32>
    %250 = arith.divf %248, %249 : vector<8x128xf32>
    %251 = vector.extract_strided_slice %238 {offsets = [0, 256], sizes = [8, 128], strides = [1, 1]} : vector<8x512xf32> to vector<8x128xf32>
    %252 = math.tanh %251 : vector<8x128xf32>
    %253 = vector.extract_strided_slice %238 {offsets = [0, 384], sizes = [8, 128], strides = [1, 1]} : vector<8x512xf32> to vector<8x128xf32>
    %254 = arith.negf %253 : vector<8x128xf32>
    %255 = math.exp %254 : vector<8x128xf32>
    %cst_87 = arith.constant 1.000000e+00 : f32
    %256 = vector.broadcast %cst_87 : f32 to vector<8x128xf32>
    %257 = arith.addf %256, %255 : vector<8x128xf32>
    %258 = arith.divf %256, %257 : vector<8x128xf32>
    %259 = arith.mulf %250, %224 : vector<8x128xf32>
    %260 = arith.mulf %244, %252 : vector<8x128xf32>
    %261 = arith.addf %259, %260 : vector<8x128xf32>
    %262 = math.tanh %261 : vector<8x128xf32>
    %263 = arith.mulf %258, %262 : vector<8x128xf32>
    %c0_i32_88 = arith.constant 0 : i32
    %264 = arith.addi %c0_i32_88, %c6_i32 : i32
    %265 = arith.index_cast %264 : i32 to index
    %c0_89 = arith.constant 0 : index
    %c0_90 = arith.constant 0 : index
    %266 = vector.load %arg9[%265, %c0_89, %c0_90] : memref<8x8x128xf32, #tpu.memory_space<vmem>>, vector<1x8x128xf32>
    %267 = vector.shape_cast %266 : vector<1x8x128xf32> to vector<8x128xf32>
    %268 = vector.shape_cast %263 : vector<8x128xf32> to vector<1x8x128xf32>
    tpu.vector_store %arg9[%265, %c0_89, %c0_90], %268 {strides = array<i32>} : memref<8x8x128xf32, #tpu.memory_space<vmem>>, vector<1x8x128xf32>,
    %c7_i32 = arith.constant 7 : i32
    %269 = arith.index_cast %c7_i32 : i32 to index
    %c0_91 = arith.constant 0 : index
    %c0_92 = arith.constant 0 : index
    %270 = vector.load %arg10[%269, %c0_91, %c0_92] : memref<8x8x512xf32, #tpu.memory_space<vmem>>, vector<1x8x512xf32>
    %271 = vector.shape_cast %270 : vector<1x8x512xf32> to vector<8x512xf32>
    %c0_93 = arith.constant 0 : index
    %c0_94 = arith.constant 0 : index
    %c0_95 = arith.constant 0 : index
    %272 = vector.load %arg5[%c0_93, %c0_94, %c0_95] : memref<1x128x512xf32, #tpu.memory_space<vmem>>, vector<1x128x512xf32>
    %273 = vector.shape_cast %272 : vector<1x128x512xf32> to vector<128x512xf32>
    %cst_96 = arith.constant dense<0.000000e+00> : vector<8x512xf32>
    %274 = tpu.matmul %263, %273, %cst_96 {dimension_numbers = #tpu.dot_dimension_numbers<[1], [0], [0], [1], [0, 0, 1, 1], [], []>} : vector<8x128xf32>, vector<128x512xf32>, vector<8x512xf32> -> vector<8x512xf32>
    %275 = arith.addf %271, %274 : vector<8x512xf32>
    %276 = vector.extract_strided_slice %275 {offsets = [0, 0], sizes = [8, 128], strides = [1, 1]} : vector<8x512xf32> to vector<8x128xf32>
    %277 = arith.negf %276 : vector<8x128xf32>
    %278 = math.exp %277 : vector<8x128xf32>
    %cst_97 = arith.constant 1.000000e+00 : f32
    %279 = vector.broadcast %cst_97 : f32 to vector<8x128xf32>
    %280 = arith.addf %279, %278 : vector<8x128xf32>
    %281 = arith.divf %279, %280 : vector<8x128xf32>
    %282 = vector.extract_strided_slice %275 {offsets = [0, 128], sizes = [8, 128], strides = [1, 1]} : vector<8x512xf32> to vector<8x128xf32>
    %283 = arith.negf %282 : vector<8x128xf32>
    %284 = math.exp %283 : vector<8x128xf32>
    %cst_98 = arith.constant 1.000000e+00 : f32
    %285 = vector.broadcast %cst_98 : f32 to vector<8x128xf32>
    %286 = arith.addf %285, %284 : vector<8x128xf32>
    %287 = arith.divf %285, %286 : vector<8x128xf32>
    %288 = vector.extract_strided_slice %275 {offsets = [0, 256], sizes = [8, 128], strides = [1, 1]} : vector<8x512xf32> to vector<8x128xf32>
    %289 = math.tanh %288 : vector<8x128xf32>
    %290 = vector.extract_strided_slice %275 {offsets = [0, 384], sizes = [8, 128], strides = [1, 1]} : vector<8x512xf32> to vector<8x128xf32>
    %291 = arith.negf %290 : vector<8x128xf32>
    %292 = math.exp %291 : vector<8x128xf32>
    %cst_99 = arith.constant 1.000000e+00 : f32
    %293 = vector.broadcast %cst_99 : f32 to vector<8x128xf32>
    %294 = arith.addf %293, %292 : vector<8x128xf32>
    %295 = arith.divf %293, %294 : vector<8x128xf32>
    %296 = arith.mulf %287, %261 : vector<8x128xf32>
    %297 = arith.mulf %281, %289 : vector<8x128xf32>
    %298 = arith.addf %296, %297 : vector<8x128xf32>
    %299 = math.tanh %298 : vector<8x128xf32>
    %300 = arith.mulf %295, %299 : vector<8x128xf32>
    %c0_i32_100 = arith.constant 0 : i32
    %301 = arith.addi %c0_i32_100, %c7_i32 : i32
    %302 = arith.index_cast %301 : i32 to index
    %c0_101 = arith.constant 0 : index
    %c0_102 = arith.constant 0 : index
    %303 = vector.load %arg9[%302, %c0_101, %c0_102] : memref<8x8x128xf32, #tpu.memory_space<vmem>>, vector<1x8x128xf32>
    %304 = vector.shape_cast %303 : vector<1x8x128xf32> to vector<8x128xf32>
    %305 = vector.shape_cast %300 : vector<8x128xf32> to vector<1x8x128xf32>
    tpu.vector_store %arg9[%302, %c0_101, %c0_102], %305 {strides = array<i32>} : memref<8x8x128xf32, #tpu.memory_space<vmem>>, vector<1x8x128xf32>,
    %c8_i32 = arith.constant 8 : i32
    %c0_103 = arith.constant 0 : index
    %c0_104 = arith.constant 0 : index
    %c0_105 = arith.constant 0 : index
    %306 = vector.load %arg7[%c0_103, %c0_104, %c0_105] : memref<1x8x128xf32, #tpu.memory_space<vmem>>, vector<1x8x128xf32>
    %307 = vector.shape_cast %306 : vector<1x8x128xf32> to vector<8x128xf32>
    %308 = vector.shape_cast %300 : vector<8x128xf32> to vector<1x8x128xf32>
    tpu.vector_store %arg7[%c0_103, %c0_104, %c0_105], %308 {strides = array<i32>} : memref<1x8x128xf32, #tpu.memory_space<vmem>>, vector<1x8x128xf32>,
    %c0_106 = arith.constant 0 : index
    %c0_107 = arith.constant 0 : index
    %c0_108 = arith.constant 0 : index
    %309 = vector.load %arg8[%c0_106, %c0_107, %c0_108] : memref<1x8x128xf32, #tpu.memory_space<vmem>>, vector<1x8x128xf32>
    %310 = vector.shape_cast %309 : vector<1x8x128xf32> to vector<8x128xf32>
    %311 = vector.shape_cast %298 : vector<8x128xf32> to vector<1x8x128xf32>
    tpu.vector_store %arg8[%c0_106, %c0_107, %c0_108], %311 {strides = array<i32>} : memref<1x8x128xf32, #tpu.memory_space<vmem>>, vector<1x8x128xf32>,
    return
  }
  func.func @transform_0(%arg0: i32, %arg1: i32) -> (i32, i32, i32) {
    %c0_i32 = arith.constant 0 : i32
    %c0_i32_0 = arith.constant 0 : i32
    %c0_i32_1 = arith.constant 0 : i32
    return %c0_i32, %arg0, %c0_i32_0 : i32, i32, i32
  }
  func.func @transform_1(%arg0: i32, %arg1: i32) -> (i32, i32) {
    %c0_i32 = arith.constant 0 : i32
    %c0_i32_0 = arith.constant 0 : i32
    %c0_i32_1 = arith.constant 0 : i32
    return %c0_i32, %c0_i32_0 : i32, i32
  }
  func.func @transform_2(%arg0: i32, %arg1: i32) -> (i32, i32, i32) {
    %c0_i32 = arith.constant 0 : i32
    %c0_i32_0 = arith.constant 0 : i32
    %c0_i32_1 = arith.constant 0 : i32
    return %arg1, %c0_i32, %c0_i32_0 : i32, i32, i32
  }
  func.func @transform_3(%arg0: i32, %arg1: i32) -> (i32, i32, i32) {
    %c0_i32 = arith.constant 0 : i32
    %c0_i32_0 = arith.constant 0 : i32
    %c0_i32_1 = arith.constant 0 : i32
    return %arg1, %c0_i32, %c0_i32_0 : i32, i32, i32
  }
  func.func @transform_4(%arg0: i32, %arg1: i32) -> (i32, i32, i32) {
    %c0_i32 = arith.constant 0 : i32
    %c0_i32_0 = arith.constant 0 : i32
    %c0_i32_1 = arith.constant 0 : i32
    return %arg1, %c0_i32, %c0_i32_0 : i32, i32, i32
  }
  func.func @transform_5(%arg0: i32, %arg1: i32) -> (i32, i32, i32) {
    %c0_i32 = arith.constant 0 : i32
    %c0_i32_0 = arith.constant 0 : i32
    return %arg1, %arg0, %c0_i32 : i32, i32, i32
  }
  func.func @transform_6(%arg0: i32, %arg1: i32) -> (i32, i32, i32) {
    %c0_i32 = arith.constant 0 : i32
    %c0_i32_0 = arith.constant 0 : i32
    return %arg1, %arg0, %c0_i32 : i32, i32, i32
  }
}

</mosaic_0001>

<llo_original>
// kernel: encoder_forward.1
$region0: #{encoder_forward.1}
  #allocation0 [shape = 'u32[]', space=smem, size = 0x4, offset = 0x4, fixed_abs, tag = 'smem constant byte address 0x4 - core index']
  #allocation1 [shape = 'u32[72,128]{1,0:T(1,128)}', space=vmem, size = 0x9000, scoped, tag = 'internal scratch']
  #allocation2 [shape = 'f32[8,8,128]{2,1,0:T(8,128)}', space=vmem, size = 0x8000, scoped, tag = 'scratch operand']
  #allocation3 [shape = 'f32[8,8,512]{2,1,0:T(8,128)}', space=vmem, size = 0x20000, scoped, tag = 'scratch operand']
  %s0 = inlined_call_operand.vmem [shape: f32[8,8,128], index: 0, kind: input, shape index: {}]
  %s1 = inlined_call_operand.vmem [shape: f32[128,512], index: 1, kind: input, shape index: {}]
  %s2 = inlined_call_operand.vmem [shape: f32[2,128,512], index: 2, kind: input, shape index: {}]
  %s3 = inlined_call_operand.vmem [shape: f32[2,128,512], index: 3, kind: input, shape index: {}]
  %s4 = inlined_call_operand.vmem [shape: f32[2,1,512], index: 4, kind: input, shape index: {}]
  %s5 = inlined_call_operand.vmem [shape: f32[2,8,128], index: 5, kind: output, shape index: {0}]
  %s6 = inlined_call_operand.vmem [shape: f32[2,8,128], index: 6, kind: output, shape index: {1}]
  %7 = xla_tuple %s5, %s6
  %s8 = sld [smem:[#allocation0]]
  $region69: #{encoder_forward.1} parent=0
    _
  %s10 = ssub.s32 1, %s8
  %s11 = scalar_select 0, %s10, %s8
  loop: start=0, step=1, limit=4
  $region2: #{encoder_forward.1} parent=0 // loop_pre_header
    _
  $region3: #{encoder_forward.1} parent=0 // loop_header
    %s13 = sphi 0, %s17
    %p14 = scmp.ge.s32.totalorder %s13, 4
    %s20 = sphi 0, %s32
    %s21 = sphi 0, %s28
    %s22 = sphi 0, %s20
    %s23 = sphi 0, %s21
    %s24 = sphi 0, %s22
    %s25 = sphi 0, %s23
    %s35 = sphi 0, %s37
    %s38 = sphi 0, %s35
    %s39 = sphi 0, %s38
    %s55 = sphi 0, %s39
    %s59 = sphi 0, %s59
    %s61 = sphi 0, %s59
    %s62 = sphi 0, %s61
    %s76 = sphi 0, %s62
    %s82 = sphi 0, %s84
    %s85 = sphi 0, %s82
    %s86 = sphi 0, %s85
    %s102 = sphi 0, %s86
    %s108 = sphi 0, %s110
    %s111 = sphi 0, %s108
    %s112 = sphi 0, %s111
    %s128 = sphi 0, %s112
    %s134 = sphi 0, %s136
    %s137 = sphi 0, %s134
    %s138 = sphi 0, %s137
    %s154 = sphi 0, %s138
    %s162 = sphi 0, %s164
    %s165 = sphi 0, %s162
    %s166 = sphi 0, %s165
    %s182 = sphi 0, %s166
    %s190 = sphi 0, %s192
    %s193 = sphi 0, %s190
    %s194 = sphi 0, %s193
    %s210 = sphi 0, %s194
  $region4: #{encoder_forward.1} parent=0 // loop_header_branch
    %16 = sbr.rel (%p14) target = $region8
  $region5: #{encoder_forward.1} parent=0 // loop_body
    %s18 = ssub.s32 %s13, 1
    %s19 = ssub.s32 %s13, 2
    %s26 = sadd.s32 1, %s21
    %p27 = scmp.ge.s32.totalorder %s26, 2
    %s28 = scalar_select %p27, 0, %s26
    %s29 = sadd.s32 1, %s20
    %s30 = scalar_select %p27, %s29, %s20
    %p31 = scmp.ge.s32.totalorder %s30, 1
    %s32 = scalar_select %p31, 0, %s30
    %s33 = ssub.s32 %s20, %s32
    %p34 = scmp.eq.s32.totalorder %s33, 0
    %s36 = sadd.s32 %s35, 1
    %s37 = scalar_select %p34, %s35, %s36
    %p40 = pneg %p34
    %p41 = scmp.eq.s32.totalorder %s13, 1
    %p42 = por %p40, %p41
    %p43 = scmp.ne.s32.totalorder %s35, %s38
    %p44 = scmp.eq.s32.totalorder %s13, 0
    %p45 = por %p43, %p44
    %p46 = scmp.ne.s32.totalorder %s35, %s38
    %p47 = scmp.eq.s32.totalorder %s18, 1
    %p48 = por %p46, %p47
    %p49 = scmp.ne.s32.totalorder %s38, %s39
    %p50 = scmp.eq.s32.totalorder %s18, 0
    %p51 = por %p49, %p50
    %p52 = scmp.ne.s32.totalorder %s38, %s39
    %p53 = scmp.eq.s32.totalorder %s19, 1
    %p54 = por %p52, %p53
    %p56 = scmp.ne.s32.totalorder %s39, %s55
    %p57 = scmp.eq.s32.totalorder %s19, 0
    %p58 = por %p56, %p57
    %s60 = sadd.s32 %s59, 1
    %p63 = scmp.eq.s32.totalorder %s13, 1
    %p64 = scmp.ne.s32.totalorder %s59, %s61
    %p65 = scmp.eq.s32.totalorder %s13, 0
    %p66 = por %p64, %p65
    %p67 = scmp.ne.s32.totalorder %s59, %s61
    %p68 = scmp.eq.s32.totalorder %s18, 1
    %p69 = por %p67, %p68
    %p70 = scmp.ne.s32.totalorder %s61, %s62
    %p71 = scmp.eq.s32.totalorder %s18, 0
    %p72 = por %p70, %p71
    %p73 = scmp.ne.s32.totalorder %s61, %s62
    %p74 = scmp.eq.s32.totalorder %s19, 1
    %p75 = por %p73, %p74
    %p77 = scmp.ne.s32.totalorder %s62, %s76
    %p78 = scmp.eq.s32.totalorder %s19, 0
    %p79 = por %p77, %p78
    %s80 = ssub.s32 %s21, %s28
    %p81 = scmp.eq.s32.totalorder %s80, 0
    %s83 = sadd.s32 %s82, 1
    %s84 = scalar_select %p81, %s82, %s83
    %p87 = pneg %p81
    %p88 = scmp.eq.s32.totalorder %s13, 1
    %p89 = por %p87, %p88
    %p90 = scmp.ne.s32.totalorder %s82, %s85
    %p91 = scmp.eq.s32.totalorder %s13, 0
    %p92 = por %p90, %p91
    %p93 = scmp.ne.s32.totalorder %s82, %s85
    %p94 = scmp.eq.s32.totalorder %s18, 1
    %p95 = por %p93, %p94
    %p96 = scmp.ne.s32.totalorder %s85, %s86
    %p97 = scmp.eq.s32.totalorder %s18, 0
    %p98 = por %p96, %p97
    %p99 = scmp.ne.s32.totalorder %s85, %s86
    %p100 = scmp.eq.s32.totalorder %s19, 1
    %p101 = por %p99, %p100
    %p103 = scmp.ne.s32.totalorder %s86, %s102
    %p104 = scmp.eq.s32.totalorder %s19, 0
    %p105 = por %p103, %p104
    %s106 = ssub.s32 %s21, %s28
    %p107 = scmp.eq.s32.totalorder %s106, 0
    %s109 = sadd.s32 %s108, 1
    %s110 = scalar_select %p107, %s108, %s109
    %p113 = pneg %p107
    %p114 = scmp.eq.s32.totalorder %s13, 1
    %p115 = por %p113, %p114
    %p116 = scmp.ne.s32.totalorder %s108, %s111
    %p117 = scmp.eq.s32.totalorder %s13, 0
    %p118 = por %p116, %p117
    %p119 = scmp.ne.s32.totalorder %s108, %s111
    %p120 = scmp.eq.s32.totalorder %s18, 1
    %p121 = por %p119, %p120
    %p122 = scmp.ne.s32.totalorder %s111, %s112
    %p123 = scmp.eq.s32.totalorder %s18, 0
    %p124 = por %p122, %p123
    %p125 = scmp.ne.s32.totalorder %s111, %s112
    %p126 = scmp.eq.s32.totalorder %s19, 1
    %p127 = por %p125, %p126
    %p129 = scmp.ne.s32.totalorder %s112, %s128
    %p130 = scmp.eq.s32.totalorder %s19, 0
    %p131 = por %p129, %p130
    %s132 = ssub.s32 %s21, %s28
    %p133 = scmp.eq.s32.totalorder %s132, 0
    %s135 = sadd.s32 %s134, 1
    %s136 = scalar_select %p133, %s134, %s135
    %p139 = pneg %p133
    %p140 = scmp.eq.s32.totalorder %s13, 1
    %p141 = por %p139, %p140
    %p142 = scmp.ne.s32.totalorder %s134, %s137
    %p143 = scmp.eq.s32.totalorder %s13, 0
    %p144 = por %p142, %p143
    %p145 = scmp.ne.s32.totalorder %s134, %s137
    %p146 = scmp.eq.s32.totalorder %s18, 1
    %p147 = por %p145, %p146
    %p148 = scmp.ne.s32.totalorder %s137, %s138
    %p149 = scmp.eq.s32.totalorder %s18, 0
    %p150 = por %p148, %p149
    %p151 = scmp.ne.s32.totalorder %s137, %s138
    %p152 = scmp.eq.s32.totalorder %s19, 1
    %p153 = por %p151, %p152
    %p155 = scmp.ne.s32.totalorder %s138, %s154
    %p156 = scmp.eq.s32.totalorder %s19, 0
    %p157 = por %p155, %p156
    %s158 = ssub.s32 %s21, %s28
    %s159 = ssub.s32 %s20, %s32
    %s160 = sor.u32 %s158, %s159
    %p161 = scmp.eq.s32.totalorder %s160, 0
    %s163 = sadd.s32 %s162, 1
    %s164 = scalar_select %p161, %s162, %s163
    %p167 = pneg %p161
    %p168 = scmp.eq.s32.totalorder %s13, 1
    %p169 = por %p167, %p168
    %p170 = scmp.ne.s32.totalorder %s162, %s165
    %p171 = scmp.eq.s32.totalorder %s13, 0
    %p172 = por %p170, %p171
    %p173 = scmp.ne.s32.totalorder %s162, %s165
    %p174 = scmp.eq.s32.totalorder %s18, 1
    %p175 = por %p173, %p174
    %p176 = scmp.ne.s32.totalorder %s165, %s166
    %p177 = scmp.eq.s32.totalorder %s18, 0
    %p178 = por %p176, %p177
    %p179 = scmp.ne.s32.totalorder %s165, %s166
    %p180 = scmp.eq.s32.totalorder %s19, 1
    %p181 = por %p179, %p180
    %p183 = scmp.ne.s32.totalorder %s166, %s182
    %p184 = scmp.eq.s32.totalorder %s19, 0
    %p185 = por %p183, %p184
    %s186 = ssub.s32 %s21, %s28
    %s187 = ssub.s32 %s20, %s32
    %s188 = sor.u32 %s186, %s187
    %p189 = scmp.eq.s32.totalorder %s188, 0
    %s191 = sadd.s32 %s190, 1
    %s192 = scalar_select %p189, %s190, %s191
    %p195 = pneg %p189
    %p196 = scmp.eq.s32.totalorder %s13, 1
    %p197 = por %p195, %p196
    %p198 = scmp.ne.s32.totalorder %s190, %s193
    %p199 = scmp.eq.s32.totalorder %s13, 0
    %p200 = por %p198, %p199
    %p201 = scmp.ne.s32.totalorder %s190, %s193
    %p202 = scmp.eq.s32.totalorder %s18, 1
    %p203 = por %p201, %p202
    %p204 = scmp.ne.s32.totalorder %s193, %s194
    %p205 = scmp.eq.s32.totalorder %s18, 0
    %p206 = por %p204, %p205
    %p207 = scmp.ne.s32.totalorder %s193, %s194
    %p208 = scmp.eq.s32.totalorder %s19, 1
    %p209 = por %p207, %p208
    %p211 = scmp.ne.s32.totalorder %s194, %s210
    %p212 = scmp.eq.s32.totalorder %s19, 0
    %p213 = por %p211, %p212
    %p214 = scmp.le.s32.totalorder 1, %s13
    %p215 = scmp.lt.s32.totalorder %s13, 3
    %p216 = pnand %p214, %p215
    %p217 = pneg %p216
    // Predicated region
    $region9: #{encoder_forward.1} parent=5 // pred_check
      _
    $region10: #{encoder_forward.1} parent=5 // pred_check_branch
      %219 = sbr.rel (%p216) target = $region12
    $region11: #{encoder_forward.1} parent=5 // pred_region
      %s220 = ssub.s32 %s13, 1
      // Predicated region
      $region13: #{encoder_forward.1} parent=11 // pred_check
        %p221 = pneg %p51
      $region14: #{encoder_forward.1} parent=11 // pred_check_branch
        %223 = sbr.rel (%p221) target = $region16
      $region15: #{encoder_forward.1} parent=11 // pred_region
        %p224 = scmp.lt.s32.totalorder %s22, 0
        %s225 = scalar_select %p224, %s22, 0
        %s226 = smul.addr %s225, 8
        %s227 = scalar_lea.vmem %s0, %s226
      $region16: #{encoder_forward.1} parent=11 // pred_fallthru
        _
      // Predicated region
      $region17: #{encoder_forward.1} parent=11 // pred_check
        %p228 = pneg %p72
      $region18: #{encoder_forward.1} parent=11 // pred_check_branch
        %230 = sbr.rel (%p228) target = $region20
      $region19: #{encoder_forward.1} parent=11 // pred_region
        _
      $region20: #{encoder_forward.1} parent=11 // pred_fallthru
        _
    $region12: #{encoder_forward.1} parent=5 // pred_fallthru
      _
    %p231 = scmp.lt.s32.totalorder %s13, 2
    // Predicated region
    $region21: #{encoder_forward.1} parent=5 // pred_check
      %p232 = pneg %p231
    $region22: #{encoder_forward.1} parent=5 // pred_check_branch
      %234 = sbr.rel (%p232) target = $region24
    $region23: #{encoder_forward.1} parent=5 // pred_region
      // Predicated region
      $region25: #{encoder_forward.1} parent=23 // pred_check
        %p235 = pneg %p92
      $region26: #{encoder_forward.1} parent=23 // pred_check_branch
        %237 = sbr.rel (%p235) target = $region28
      $region27: #{encoder_forward.1} parent=23 // pred_region
        %p238 = scmp.lt.s32.totalorder %s21, 1
        %s239 = scalar_select %p238, %s21, 1
        %s240 = smul.addr %s239, 64
        %s241 = smul.addr %s240, 8
        %s242 = scalar_lea.vmem %s2, %s241
      $region28: #{encoder_forward.1} parent=23 // pred_fallthru
        _
      // Predicated region
      $region29: #{encoder_forward.1} parent=23 // pred_check
        %p243 = pneg %p118
      $region30: #{encoder_forward.1} parent=23 // pred_check_branch
        %245 = sbr.rel (%p243) target = $region32
      $region31: #{encoder_forward.1} parent=23 // pred_region
        %p246 = scmp.lt.s32.totalorder %s21, 1
        %s247 = scalar_select %p246, %s21, 1
        %s248 = smul.addr %s247, 64
        %s249 = smul.addr %s248, 8
        %s250 = scalar_lea.vmem %s3, %s249
      $region32: #{encoder_forward.1} parent=23 // pred_fallthru
        _
      // Predicated region
      $region33: #{encoder_forward.1} parent=23 // pred_check
        %p251 = pneg %p144
      $region34: #{encoder_forward.1} parent=23 // pred_check_branch
        %253 = sbr.rel (%p251) target = $region36
      $region35: #{encoder_forward.1} parent=23 // pred_region
        %p254 = scmp.lt.s32.totalorder %s21, 1
        %s255 = scalar_select %p254, %s21, 1
        %s256 = smul.addr %s255, 4
        %s257 = scalar_lea.vmem %s4, %s256
      $region36: #{encoder_forward.1} parent=23 // pred_fallthru
        _
    $region24: #{encoder_forward.1} parent=5 // pred_fallthru
      _
    %p258 = scmp.le.s32.totalorder 1, %s13
    %p259 = scmp.lt.s32.totalorder %s13, 3
    %p260 = pnand %p258, %p259
    %p261 = pneg %p260
    // Predicated region
    $region37: #{encoder_forward.1} parent=5 // pred_check
      _
    $region38: #{encoder_forward.1} parent=5 // pred_check_branch
      %263 = sbr.rel (%p260) target = $region40
    $region39: #{encoder_forward.1} parent=5 // pred_region
      %s264 = ssub.s32 %s13, 1
      %p265 = scmp.lt.s32.totalorder %s22, 0
      %s266 = scalar_select %p265, %s22, 0
      %s267 = smul.addr %s266, 8
      %s268 = scalar_lea.vmem %s0, %s267
      %p269 = pneg %p51
      %p270 = pneg %p48
      %p271 = pneg %p72
      %p272 = pneg %p69
      %p273 = scmp.lt.s32.totalorder %s23, 1
      %s274 = scalar_select %p273, %s23, 1
      %s275 = smul.addr %s274, 64
      %s276 = smul.addr %s275, 8
      %s277 = scalar_lea.vmem %s2, %s276
      %p278 = pneg %p98
      %p279 = pneg %p95
      %p280 = scmp.lt.s32.totalorder %s23, 1
      %s281 = scalar_select %p280, %s23, 1
      %s282 = smul.addr %s281, 64
      %s283 = smul.addr %s282, 8
      %s284 = scalar_lea.vmem %s3, %s283
      %p285 = pneg %p124
      %p286 = pneg %p121
      %p287 = scmp.lt.s32.totalorder %s23, 1
      %s288 = scalar_select %p287, %s23, 1
      %s289 = smul.addr %s288, 4
      %s290 = scalar_lea.vmem %s4, %s289
      %p291 = pneg %p150
      %p292 = pneg %p147
      %p293 = pneg %p178
      %p294 = pneg %p175
      %p295 = scmp.lt.s32.totalorder %s23, 1
      %s296 = scalar_select %p295, %s23, 1
      %p297 = scmp.lt.s32.totalorder %s22, 0
      %s298 = scalar_select %p297, %s22, 0
      %s299 = sadd.s32 %s298, %s296
      %s300 = smul.addr %s299, 8
      %s301 = scalar_lea.vmem %s5, %s300
      %p302 = pneg %p206
      %p303 = pneg %p203
      %p304 = scmp.lt.s32.totalorder %s23, 1
      %s305 = scalar_select %p304, %s23, 1
      %p306 = scmp.lt.s32.totalorder %s22, 0
      %s307 = scalar_select %p306, %s22, 0
      %s308 = sadd.s32 %s307, %s305
      %s309 = smul.addr %s308, 8
      %s310 = scalar_lea.vmem %s6, %s309
      %p311 = scmp.lt.s32.totalorder %s22, 0
      %s312 = scalar_select %p311, %s22, 0
      %s313 = smul.addr %s312, 8
      %s314 = scalar_lea.vmem %s0, %s313
      %p315 = scmp.lt.s32.totalorder %s23, 1
      %s316 = scalar_select %p315, %s23, 1
      %s317 = smul.addr %s316, 64
      %s318 = smul.addr %s317, 8
      %s319 = scalar_lea.vmem %s2, %s318
      %p320 = scmp.lt.s32.totalorder %s23, 1
      %s321 = scalar_select %p320, %s23, 1
      %s322 = smul.addr %s321, 64
      %s323 = smul.addr %s322, 8
      %s324 = scalar_lea.vmem %s3, %s323
      %p325 = scmp.lt.s32.totalorder %s23, 1
      %s326 = scalar_select %p325, %s23, 1
      %s327 = smul.addr %s326, 4
      %s328 = scalar_lea.vmem %s4, %s327
      %p329 = scmp.lt.s32.totalorder %s23, 1
      %s330 = scalar_select %p329, %s23, 1
      %p331 = scmp.lt.s32.totalorder %s22, 0
      %s332 = scalar_select %p331, %s22, 0
      %s333 = sadd.s32 %s332, %s330
      %s334 = smul.addr %s333, 8
      %s335 = scalar_lea.vmem %s5, %s334
      %p336 = scmp.lt.s32.totalorder %s23, 1
      %s337 = scalar_select %p336, %s23, 1
      %p338 = scmp.lt.s32.totalorder %s22, 0
      %s339 = scalar_select %p338, %s22, 0
      %s340 = sadd.s32 %s339, %s337
      %s341 = smul.addr %s340, 8
      %s342 = scalar_lea.vmem %s6, %s341
      %v343 = vld [vmem:[%s328] sm:$0xf]
      %p344 = scmp.eq.s32.totalorder %s23, 0
      // Predicated region
      $region41: #{encoder_forward.1} parent=39 // pred_check
        %p345 = pneg %p344
      $region42: #{encoder_forward.1} parent=39 // pred_check_branch
        %347 = sbr.rel (%p345) target = $region44
      $region43: #{encoder_forward.1} parent=39 // pred_region
        %v348 = vld [vmem:[%s314] sm:$0xff]
        %v349 = vld [vmem:[%s314 + $0x8] sm:$0xff]
        %v350 = vld [vmem:[%s314 + $0x10] sm:$0xff]
        %v351 = vld [vmem:[%s314 + $0x18] sm:$0xff]
        %v352 = vld [vmem:[%s314 + $0x20] sm:$0xff]
        %v353 = vld [vmem:[%s314 + $0x28] sm:$0xff]
        %v354 = vld [vmem:[%s314 + $0x30] sm:$0xff]
        %v355 = vld [vmem:[%s314 + $0x38] sm:$0xff]
        %v356 = vld [vmem:[%s1] sm:$0xff]
        %v357 = vld [vmem:[%s1 + $0x8] sm:$0xff]
        %v358 = vld [vmem:[%s1 + $0x10] sm:$0xff]
        %v359 = vld [vmem:[%s1 + $0x18] sm:$0xff]
        %v360 = vld [vmem:[%s1 + $0x20] sm:$0xff]
        %v361 = vld [vmem:[%s1 + $0x28] sm:$0xff]
        %v362 = vld [vmem:[%s1 + $0x30] sm:$0xff]
        %v363 = vld [vmem:[%s1 + $0x38] sm:$0xff]
        %v364 = vld [vmem:[%s1 + $0x40] sm:$0xff]
        %v365 = vld [vmem:[%s1 + $0x48] sm:$0xff]
        %v366 = vld [vmem:[%s1 + $0x50] sm:$0xff]
        %v367 = vld [vmem:[%s1 + $0x58] sm:$0xff]
        %v368 = vld [vmem:[%s1 + $0x60] sm:$0xff]
        %v369 = vld [vmem:[%s1 + $0x68] sm:$0xff]
        %v370 = vld [vmem:[%s1 + $0x70] sm:$0xff]
        %v371 = vld [vmem:[%s1 + $0x78] sm:$0xff]
        %v372 = vld [vmem:[%s1 + $0x80] sm:$0xff]
        %v373 = vld [vmem:[%s1 + $0x88] sm:$0xff]
        %v374 = vld [vmem:[%s1 + $0x90] sm:$0xff]
        %v375 = vld [vmem:[%s1 + $0x98] sm:$0xff]
        %v376 = vld [vmem:[%s1 + $0xa0] sm:$0xff]
        %v377 = vld [vmem:[%s1 + $0xa8] sm:$0xff]
        %v378 = vld [vmem:[%s1 + $0xb0] sm:$0xff]
        %v379 = vld [vmem:[%s1 + $0xb8] sm:$0xff]
        %v380 = vld [vmem:[%s1 + $0xc0] sm:$0xff]
        %v381 = vld [vmem:[%s1 + $0xc8] sm:$0xff]
        %v382 = vld [vmem:[%s1 + $0xd0] sm:$0xff]
        %v383 = vld [vmem:[%s1 + $0xd8] sm:$0xff]
        %v384 = vld [vmem:[%s1 + $0xe0] sm:$0xff]
        %v385 = vld [vmem:[%s1 + $0xe8] sm:$0xff]
        %v386 = vld [vmem:[%s1 + $0xf0] sm:$0xff]
        %v387 = vld [vmem:[%s1 + $0xf8] sm:$0xff]
        %v388 = vld [vmem:[%s1 + $0x100] sm:$0xff]
        %v389 = vld [vmem:[%s1 + $0x108] sm:$0xff]
        %v390 = vld [vmem:[%s1 + $0x110] sm:$0xff]
        %v391 = vld [vmem:[%s1 + $0x118] sm:$0xff]
        %v392 = vld [vmem:[%s1 + $0x120] sm:$0xff]
        %v393 = vld [vmem:[%s1 + $0x128] sm:$0xff]
        %v394 = vld [vmem:[%s1 + $0x130] sm:$0xff]
        %v395 = vld [vmem:[%s1 + $0x138] sm:$0xff]
        %v396 = vld [vmem:[%s1 + $0x140] sm:$0xff]
        %v397 = vld [vmem:[%s1 + $0x148] sm:$0xff]
        %v398 = vld [vmem:[%s1 + $0x150] sm:$0xff]
        %v399 = vld [vmem:[%s1 + $0x158] sm:$0xff]
        %v400 = vld [vmem:[%s1 + $0x160] sm:$0xff]
        %v401 = vld [vmem:[%s1 + $0x168] sm:$0xff]
        %v402 = vld [vmem:[%s1 + $0x170] sm:$0xff]
        %v403 = vld [vmem:[%s1 + $0x178] sm:$0xff]
        %v404 = vld [vmem:[%s1 + $0x180] sm:$0xff]
        %v405 = vld [vmem:[%s1 + $0x188] sm:$0xff]
        %v406 = vld [vmem:[%s1 + $0x190] sm:$0xff]
        %v407 = vld [vmem:[%s1 + $0x198] sm:$0xff]
        %v408 = vld [vmem:[%s1 + $0x1a0] sm:$0xff]
        %v409 = vld [vmem:[%s1 + $0x1a8] sm:$0xff]
        %v410 = vld [vmem:[%s1 + $0x1b0] sm:$0xff]
        %v411 = vld [vmem:[%s1 + $0x1b8] sm:$0xff]
        %v412 = vld [vmem:[%s1 + $0x1c0] sm:$0xff]
        %v413 = vld [vmem:[%s1 + $0x1c8] sm:$0xff]
        %v414 = vld [vmem:[%s1 + $0x1d0] sm:$0xff]
        %v415 = vld [vmem:[%s1 + $0x1d8] sm:$0xff]
        %v416 = vld [vmem:[%s1 + $0x1e0] sm:$0xff]
        %v417 = vld [vmem:[%s1 + $0x1e8] sm:$0xff]
        %v418 = vld [vmem:[%s1 + $0x1f0] sm:$0xff]
        %v419 = vld [vmem:[%s1 + $0x1f8] sm:$0xff]
        %v421 = vperm.slane %v343, 0
        %v422 = vperm.slane %v343, 1
        %v423 = vperm.slane %v343, 2
        %v424 = vperm.slane %v343, 3
        %429 = vmatpush.msra.mxu0 %v416
        %430 = vmatpush.msra.mxu0 %v412
        %431 = vmatpush.msra.mxu0 %v408
        %432 = vmatpush.msra.mxu0 %v404
        %433 = vmatpush.msra.mxu0 %v400
        %434 = vmatpush.msra.mxu0 %v396
        %435 = vmatpush.msra.mxu0 %v392
        %436 = vmatpush.msra.mxu0 %v388
        %437 = vmatpush.msra.mxu0 %v384
        %438 = vmatpush.msra.mxu0 %v380
        %439 = vmatpush.msra.mxu0 %v376
        %440 = vmatpush.msra.mxu0 %v372
        %441 = vmatpush.msra.mxu0 %v368
        %442 = vmatpush.msra.mxu0 %v364
        %443 = vmatpush.msra.mxu0 %v360
        %444 = vmatpush.msra.mxu0 %v356
        %445 = vmatmul.f32.gmra.mxu0 %v348
        %v446 = vpop.f32.mrf.mxu0
        %v447 = vadd.f32 %v421, %v446
        %448 = vmatmul.f32.gmra.mxu0 %v349
        %v449 = vpop.f32.mrf.mxu0
        %v450 = vadd.f32 %v421, %v449
        %451 = vmatmul.f32.gmra.mxu0 %v350
        %v452 = vpop.f32.mrf.mxu0
        %v453 = vadd.f32 %v421, %v452
        %454 = vmatmul.f32.gmra.mxu0 %v351
        %v455 = vpop.f32.mrf.mxu0
        %v456 = vadd.f32 %v421, %v455
        %457 = vmatmul.f32.gmra.mxu0 %v352
        %v458 = vpop.f32.mrf.mxu0
        %v459 = vadd.f32 %v421, %v458
        %460 = vmatmul.f32.gmra.mxu0 %v353
        %v461 = vpop.f32.mrf.mxu0
        %v462 = vadd.f32 %v421, %v461
        %463 = vmatmul.f32.gmra.mxu0 %v354
        %v464 = vpop.f32.mrf.mxu0
        %v465 = vadd.f32 %v421, %v464
        %466 = vmatmul.f32.gmra.mxu0 %v355
        %v467 = vpop.f32.mrf.mxu0
        %v468 = vadd.f32 %v421, %v467
        %469 = vdwg.mxu0
        %470 = vmatpush.msra.mxu0 %v417
        %471 = vmatpush.msra.mxu0 %v413
        %472 = vmatpush.msra.mxu0 %v409
        %473 = vmatpush.msra.mxu0 %v405
        %474 = vmatpush.msra.mxu0 %v401
        %475 = vmatpush.msra.mxu0 %v397
        %476 = vmatpush.msra.mxu0 %v393
        %477 = vmatpush.msra.mxu0 %v389
        %478 = vmatpush.msra.mxu0 %v385
        %479 = vmatpush.msra.mxu0 %v381
        %480 = vmatpush.msra.mxu0 %v377
        %481 = vmatpush.msra.mxu0 %v373
        %482 = vmatpush.msra.mxu0 %v369
        %483 = vmatpush.msra.mxu0 %v365
        %484 = vmatpush.msra.mxu0 %v361
        %485 = vmatpush.msra.mxu0 %v357
        %486 = vmatmul.f32.gmra.mxu0 %v348
        %v487 = vpop.f32.mrf.mxu0
        %v488 = vadd.f32 %v422, %v487
        %489 = vmatmul.f32.gmra.mxu0 %v349
        %v490 = vpop.f32.mrf.mxu0
        %v491 = vadd.f32 %v422, %v490
        %492 = vmatmul.f32.gmra.mxu0 %v350
        %v493 = vpop.f32.mrf.mxu0
        %v494 = vadd.f32 %v422, %v493
        %495 = vmatmul.f32.gmra.mxu0 %v351
        %v496 = vpop.f32.mrf.mxu0
        %v497 = vadd.f32 %v422, %v496
        %498 = vmatmul.f32.gmra.mxu0 %v352
        %v499 = vpop.f32.mrf.mxu0
        %v500 = vadd.f32 %v422, %v499
        %501 = vmatmul.f32.gmra.mxu0 %v353
        %v502 = vpop.f32.mrf.mxu0
        %v503 = vadd.f32 %v422, %v502
        %504 = vmatmul.f32.gmra.mxu0 %v354
        %v505 = vpop.f32.mrf.mxu0
        %v506 = vadd.f32 %v422, %v505
        %507 = vmatmul.f32.gmra.mxu0 %v355
        %v508 = vpop.f32.mrf.mxu0
        %v509 = vadd.f32 %v422, %v508
        %510 = vdwg.mxu0
        %511 = vmatpush.msra.mxu0 %v418
        %512 = vmatpush.msra.mxu0 %v414
        %513 = vmatpush.msra.mxu0 %v410
        %514 = vmatpush.msra.mxu0 %v406
        %515 = vmatpush.msra.mxu0 %v402
        %516 = vmatpush.msra.mxu0 %v398
        %517 = vmatpush.msra.mxu0 %v394
        %518 = vmatpush.msra.mxu0 %v390
        %519 = vmatpush.msra.mxu0 %v386
        %520 = vmatpush.msra.mxu0 %v382
        %521 = vmatpush.msra.mxu0 %v378
        %522 = vmatpush.msra.mxu0 %v374
        %523 = vmatpush.msra.mxu0 %v370
        %524 = vmatpush.msra.mxu0 %v366
        %525 = vmatpush.msra.mxu0 %v362
        %526 = vmatpush.msra.mxu0 %v358
        %527 = vmatmul.f32.gmra.mxu0 %v348
        %v528 = vpop.f32.mrf.mxu0
        %v529 = vadd.f32 %v423, %v528
        %530 = vmatmul.f32.gmra.mxu0 %v349
        %v531 = vpop.f32.mrf.mxu0
        %v532 = vadd.f32 %v423, %v531
        %533 = vmatmul.f32.gmra.mxu0 %v350
        %v534 = vpop.f32.mrf.mxu0
        %v535 = vadd.f32 %v423, %v534
        %536 = vmatmul.f32.gmra.mxu0 %v351
        %v537 = vpop.f32.mrf.mxu0
        %v538 = vadd.f32 %v423, %v537
        %539 = vmatmul.f32.gmra.mxu0 %v352
        %v540 = vpop.f32.mrf.mxu0
        %v541 = vadd.f32 %v423, %v540
        %542 = vmatmul.f32.gmra.mxu0 %v353
        %v543 = vpop.f32.mrf.mxu0
        %v544 = vadd.f32 %v423, %v543
        %545 = vmatmul.f32.gmra.mxu0 %v354
        %v546 = vpop.f32.mrf.mxu0
        %v547 = vadd.f32 %v423, %v546
        %548 = vmatmul.f32.gmra.mxu0 %v355
        %v549 = vpop.f32.mrf.mxu0
        %v550 = vadd.f32 %v423, %v549
        %551 = vdwg.mxu0
        %552 = vmatpush.msra.mxu0 %v419
        %553 = vmatpush.msra.mxu0 %v415
        %554 = vmatpush.msra.mxu0 %v411
        %555 = vmatpush.msra.mxu0 %v407
        %556 = vmatpush.msra.mxu0 %v403
        %557 = vmatpush.msra.mxu0 %v399
        %558 = vmatpush.msra.mxu0 %v395
        %559 = vmatpush.msra.mxu0 %v391
        %560 = vmatpush.msra.mxu0 %v387
        %561 = vmatpush.msra.mxu0 %v383
        %562 = vmatpush.msra.mxu0 %v379
        %563 = vmatpush.msra.mxu0 %v375
        %564 = vmatpush.msra.mxu0 %v371
        %565 = vmatpush.msra.mxu0 %v367
        %566 = vmatpush.msra.mxu0 %v363
        %567 = vmatpush.msra.mxu0 %v359
        %568 = vmatmul.f32.gmra.mxu0 %v348
        %v569 = vpop.f32.mrf.mxu0
        %v570 = vadd.f32 %v424, %v569
        %571 = vmatmul.f32.gmra.mxu0 %v349
        %v572 = vpop.f32.mrf.mxu0
        %v573 = vadd.f32 %v424, %v572
        %574 = vmatmul.f32.gmra.mxu0 %v350
        %v575 = vpop.f32.mrf.mxu0
        %v576 = vadd.f32 %v424, %v575
        %577 = vmatmul.f32.gmra.mxu0 %v351
        %v578 = vpop.f32.mrf.mxu0
        %v579 = vadd.f32 %v424, %v578
        %580 = vmatmul.f32.gmra.mxu0 %v352
        %v581 = vpop.f32.mrf.mxu0
        %v582 = vadd.f32 %v424, %v581
        %583 = vmatmul.f32.gmra.mxu0 %v353
        %v584 = vpop.f32.mrf.mxu0
        %v585 = vadd.f32 %v424, %v584
        %586 = vmatmul.f32.gmra.mxu0 %v354
        %v587 = vpop.f32.mrf.mxu0
        %v588 = vadd.f32 %v424, %v587
        %589 = vmatmul.f32.gmra.mxu0 %v355
        %v590 = vpop.f32.mrf.mxu0
        %v591 = vadd.f32 %v424, %v590
        %592 = vdwg.mxu0
        %593 = vst [vmem:[#allocation3] sm:$0xff] %v447
        %594 = vst [vmem:[#allocation3 + $0x8] sm:$0xff] %v488
        %595 = vst [vmem:[#allocation3 + $0x10] sm:$0xff] %v529
        %596 = vst [vmem:[#allocation3 + $0x18] sm:$0xff] %v570
        %597 = vst [vmem:[#allocation3 + $0x20] sm:$0xff] %v450
        %598 = vst [vmem:[#allocation3 + $0x28] sm:$0xff] %v491
        %599 = vst [vmem:[#allocation3 + $0x30] sm:$0xff] %v532
        %600 = vst [vmem:[#allocation3 + $0x38] sm:$0xff] %v573
        %601 = vst [vmem:[#allocation3 + $0x40] sm:$0xff] %v453
        %602 = vst [vmem:[#allocation3 + $0x48] sm:$0xff] %v494
        %603 = vst [vmem:[#allocation3 + $0x50] sm:$0xff] %v535
        %604 = vst [vmem:[#allocation3 + $0x58] sm:$0xff] %v576
        %605 = vst [vmem:[#allocation3 + $0x60] sm:$0xff] %v456
        %606 = vst [vmem:[#allocation3 + $0x68] sm:$0xff] %v497
        %607 = vst [vmem:[#allocation3 + $0x70] sm:$0xff] %v538
        %608 = vst [vmem:[#allocation3 + $0x78] sm:$0xff] %v579
        %609 = vst [vmem:[#allocation3 + $0x80] sm:$0xff] %v459
        %610 = vst [vmem:[#allocation3 + $0x88] sm:$0xff] %v500
        %611 = vst [vmem:[#allocation3 + $0x90] sm:$0xff] %v541
        %612 = vst [vmem:[#allocation3 + $0x98] sm:$0xff] %v582
        %613 = vst [vmem:[#allocation3 + $0xa0] sm:$0xff] %v462
        %614 = vst [vmem:[#allocation3 + $0xa8] sm:$0xff] %v503
        %615 = vst [vmem:[#allocation3 + $0xb0] sm:$0xff] %v544
        %616 = vst [vmem:[#allocation3 + $0xb8] sm:$0xff] %v585
        %617 = vst [vmem:[#allocation3 + $0xc0] sm:$0xff] %v465
        %618 = vst [vmem:[#allocation3 + $0xc8] sm:$0xff] %v506
        %619 = vst [vmem:[#allocation3 + $0xd0] sm:$0xff] %v547
        %620 = vst [vmem:[#allocation3 + $0xd8] sm:$0xff] %v588
        %621 = vst [vmem:[#allocation3 + $0xe0] sm:$0xff] %v468
        %622 = vst [vmem:[#allocation3 + $0xe8] sm:$0xff] %v509
        %623 = vst [vmem:[#allocation3 + $0xf0] sm:$0xff] %v550
        %624 = vst [vmem:[#allocation3 + $0xf8] sm:$0xff] %v591
      $region44: #{encoder_forward.1} parent=39 // pred_fallthru
        _
      %p625 = scmp.gt.s32.totalorder %s23, 0
      // Predicated region
      $region45: #{encoder_forward.1} parent=39 // pred_check
        %p626 = pneg %p625
      $region46: #{encoder_forward.1} parent=39 // pred_check_branch
        %628 = sbr.rel (%p626) target = $region48
      $region47: #{encoder_forward.1} parent=39 // pred_region
        %v629 = vld [vmem:[#allocation2] sm:$0xff]
        %v630 = vld [vmem:[#allocation2 + $0x8] sm:$0xff]
        %v631 = vld [vmem:[#allocation2 + $0x10] sm:$0xff]
        %v632 = vld [vmem:[#allocation2 + $0x18] sm:$0xff]
        %v633 = vld [vmem:[#allocation2 + $0x20] sm:$0xff]
        %v634 = vld [vmem:[#allocation2 + $0x28] sm:$0xff]
        %v635 = vld [vmem:[#allocation2 + $0x30] sm:$0xff]
        %v636 = vld [vmem:[#allocation2 + $0x38] sm:$0xff]
        %v637 = vld [vmem:[%s319] sm:$0xff]
        %v638 = vld [vmem:[%s319 + $0x8] sm:$0xff]
        %v639 = vld [vmem:[%s319 + $0x10] sm:$0xff]
        %v640 = vld [vmem:[%s319 + $0x18] sm:$0xff]
        %v641 = vld [vmem:[%s319 + $0x20] sm:$0xff]
        %v642 = vld [vmem:[%s319 + $0x28] sm:$0xff]
        %v643 = vld [vmem:[%s319 + $0x30] sm:$0xff]
        %v644 = vld [vmem:[%s319 + $0x38] sm:$0xff]
        %v645 = vld [vmem:[%s319 + $0x40] sm:$0xff]
        %v646 = vld [vmem:[%s319 + $0x48] sm:$0xff]
        %v647 = vld [vmem:[%s319 + $0x50] sm:$0xff]
        %v648 = vld [vmem:[%s319 + $0x58] sm:$0xff]
        %v649 = vld [vmem:[%s319 + $0x60] sm:$0xff]
        %v650 = vld [vmem:[%s319 + $0x68] sm:$0xff]
        %v651 = vld [vmem:[%s319 + $0x70] sm:$0xff]
        %v652 = vld [vmem:[%s319 + $0x78] sm:$0xff]
        %v653 = vld [vmem:[%s319 + $0x80] sm:$0xff]
        %v654 = vld [vmem:[%s319 + $0x88] sm:$0xff]
        %v655 = vld [vmem:[%s319 + $0x90] sm:$0xff]
        %v656 = vld [vmem:[%s319 + $0x98] sm:$0xff]
        %v657 = vld [vmem:[%s319 + $0xa0] sm:$0xff]
        %v658 = vld [vmem:[%s319 + $0xa8] sm:$0xff]
        %v659 = vld [vmem:[%s319 + $0xb0] sm:$0xff]
        %v660 = vld [vmem:[%s319 + $0xb8] sm:$0xff]
        %v661 = vld [vmem:[%s319 + $0xc0] sm:$0xff]
        %v662 = vld [vmem:[%s319 + $0xc8] sm:$0xff]
        %v663 = vld [vmem:[%s319 + $0xd0] sm:$0xff]
        %v664 = vld [vmem:[%s319 + $0xd8] sm:$0xff]
        %v665 = vld [vmem:[%s319 + $0xe0] sm:$0xff]
        %v666 = vld [vmem:[%s319 + $0xe8] sm:$0xff]
        %v667 = vld [vmem:[%s319 + $0xf0] sm:$0xff]
        %v668 = vld [vmem:[%s319 + $0xf8] sm:$0xff]
        %v669 = vld [vmem:[%s319 + $0x100] sm:$0xff]
        %v670 = vld [vmem:[%s319 + $0x108] sm:$0xff]
        %v671 = vld [vmem:[%s319 + $0x110] sm:$0xff]
        %v672 = vld [vmem:[%s319 + $0x118] sm:$0xff]
        %v673 = vld [vmem:[%s319 + $0x120] sm:$0xff]
        %v674 = vld [vmem:[%s319 + $0x128] sm:$0xff]
        %v675 = vld [vmem:[%s319 + $0x130] sm:$0xff]
        %v676 = vld [vmem:[%s319 + $0x138] sm:$0xff]
        %v677 = vld [vmem:[%s319 + $0x140] sm:$0xff]
        %v678 = vld [vmem:[%s319 + $0x148] sm:$0xff]
        %v679 = vld [vmem:[%s319 + $0x150] sm:$0xff]
        %v680 = vld [vmem:[%s319 + $0x158] sm:$0xff]
        %v681 = vld [vmem:[%s319 + $0x160] sm:$0xff]
        %v682 = vld [vmem:[%s319 + $0x168] sm:$0xff]
        %v683 = vld [vmem:[%s319 + $0x170] sm:$0xff]
        %v684 = vld [vmem:[%s319 + $0x178] sm:$0xff]
        %v685 = vld [vmem:[%s319 + $0x180] sm:$0xff]
        %v686 = vld [vmem:[%s319 + $0x188] sm:$0xff]
        %v687 = vld [vmem:[%s319 + $0x190] sm:$0xff]
        %v688 = vld [vmem:[%s319 + $0x198] sm:$0xff]
        %v689 = vld [vmem:[%s319 + $0x1a0] sm:$0xff]
        %v690 = vld [vmem:[%s319 + $0x1a8] sm:$0xff]
        %v691 = vld [vmem:[%s319 + $0x1b0] sm:$0xff]
        %v692 = vld [vmem:[%s319 + $0x1b8] sm:$0xff]
        %v693 = vld [vmem:[%s319 + $0x1c0] sm:$0xff]
        %v694 = vld [vmem:[%s319 + $0x1c8] sm:$0xff]
        %v695 = vld [vmem:[%s319 + $0x1d0] sm:$0xff]
        %v696 = vld [vmem:[%s319 + $0x1d8] sm:$0xff]
        %v697 = vld [vmem:[%s319 + $0x1e0] sm:$0xff]
        %v698 = vld [vmem:[%s319 + $0x1e8] sm:$0xff]
        %v699 = vld [vmem:[%s319 + $0x1f0] sm:$0xff]
        %v700 = vld [vmem:[%s319 + $0x1f8] sm:$0xff]
        %v702 = vperm.slane %v343, 0
        %v703 = vperm.slane %v343, 1
        %v704 = vperm.slane %v343, 2
        %v705 = vperm.slane %v343, 3
        %710 = vmatpush.msra.mxu0 %v697
        %711 = vmatpush.msra.mxu0 %v693
        %712 = vmatpush.msra.mxu0 %v689
        %713 = vmatpush.msra.mxu0 %v685
        %714 = vmatpush.msra.mxu0 %v681
        %715 = vmatpush.msra.mxu0 %v677
        %716 = vmatpush.msra.mxu0 %v673
        %717 = vmatpush.msra.mxu0 %v669
        %718 = vmatpush.msra.mxu0 %v665
        %719 = vmatpush.msra.mxu0 %v661
        %720 = vmatpush.msra.mxu0 %v657
        %721 = vmatpush.msra.mxu0 %v653
        %722 = vmatpush.msra.mxu0 %v649
        %723 = vmatpush.msra.mxu0 %v645
        %724 = vmatpush.msra.mxu0 %v641
        %725 = vmatpush.msra.mxu0 %v637
        %726 = vmatmul.f32.gmra.mxu0 %v629
        %v727 = vpop.f32.mrf.mxu0
        %v728 = vadd.f32 %v702, %v727
        %729 = vmatmul.f32.gmra.mxu0 %v630
        %v730 = vpop.f32.mrf.mxu0
        %v731 = vadd.f32 %v702, %v730
        %732 = vmatmul.f32.gmra.mxu0 %v631
        %v733 = vpop.f32.mrf.mxu0
        %v734 = vadd.f32 %v702, %v733
        %735 = vmatmul.f32.gmra.mxu0 %v632
        %v736 = vpop.f32.mrf.mxu0
        %v737 = vadd.f32 %v702, %v736
        %738 = vmatmul.f32.gmra.mxu0 %v633
        %v739 = vpop.f32.mrf.mxu0
        %v740 = vadd.f32 %v702, %v739
        %741 = vmatmul.f32.gmra.mxu0 %v634
        %v742 = vpop.f32.mrf.mxu0
        %v743 = vadd.f32 %v702, %v742
        %744 = vmatmul.f32.gmra.mxu0 %v635
        %v745 = vpop.f32.mrf.mxu0
        %v746 = vadd.f32 %v702, %v745
        %747 = vmatmul.f32.gmra.mxu0 %v636
        %v748 = vpop.f32.mrf.mxu0
        %v749 = vadd.f32 %v702, %v748
        %750 = vdwg.mxu0
        %751 = vmatpush.msra.mxu0 %v698
        %752 = vmatpush.msra.mxu0 %v694
        %753 = vmatpush.msra.mxu0 %v690
        %754 = vmatpush.msra.mxu0 %v686
        %755 = vmatpush.msra.mxu0 %v682
        %756 = vmatpush.msra.mxu0 %v678
        %757 = vmatpush.msra.mxu0 %v674
        %758 = vmatpush.msra.mxu0 %v670
        %759 = vmatpush.msra.mxu0 %v666
        %760 = vmatpush.msra.mxu0 %v662
        %761 = vmatpush.msra.mxu0 %v658
        %762 = vmatpush.msra.mxu0 %v654
        %763 = vmatpush.msra.mxu0 %v650
        %764 = vmatpush.msra.mxu0 %v646
        %765 = vmatpush.msra.mxu0 %v642
        %766 = vmatpush.msra.mxu0 %v638
        %767 = vmatmul.f32.gmra.mxu0 %v629
        %v768 = vpop.f32.mrf.mxu0
        %v769 = vadd.f32 %v703, %v768
        %770 = vmatmul.f32.gmra.mxu0 %v630
        %v771 = vpop.f32.mrf.mxu0
        %v772 = vadd.f32 %v703, %v771
        %773 = vmatmul.f32.gmra.mxu0 %v631
        %v774 = vpop.f32.mrf.mxu0
        %v775 = vadd.f32 %v703, %v774
        %776 = vmatmul.f32.gmra.mxu0 %v632
        %v777 = vpop.f32.mrf.mxu0
        %v778 = vadd.f32 %v703, %v777
        %779 = vmatmul.f32.gmra.mxu0 %v633
        %v780 = vpop.f32.mrf.mxu0
        %v781 = vadd.f32 %v703, %v780
        %782 = vmatmul.f32.gmra.mxu0 %v634
        %v783 = vpop.f32.mrf.mxu0
        %v784 = vadd.f32 %v703, %v783
        %785 = vmatmul.f32.gmra.mxu0 %v635
        %v786 = vpop.f32.mrf.mxu0
        %v787 = vadd.f32 %v703, %v786
        %788 = vmatmul.f32.gmra.mxu0 %v636
        %v789 = vpop.f32.mrf.mxu0
        %v790 = vadd.f32 %v703, %v789
        %791 = vdwg.mxu0
        %792 = vmatpush.msra.mxu0 %v699
        %793 = vmatpush.msra.mxu0 %v695
        %794 = vmatpush.msra.mxu0 %v691
        %795 = vmatpush.msra.mxu0 %v687
        %796 = vmatpush.msra.mxu0 %v683
        %797 = vmatpush.msra.mxu0 %v679
        %798 = vmatpush.msra.mxu0 %v675
        %799 = vmatpush.msra.mxu0 %v671
        %800 = vmatpush.msra.mxu0 %v667
        %801 = vmatpush.msra.mxu0 %v663
        %802 = vmatpush.msra.mxu0 %v659
        %803 = vmatpush.msra.mxu0 %v655
        %804 = vmatpush.msra.mxu0 %v651
        %805 = vmatpush.msra.mxu0 %v647
        %806 = vmatpush.msra.mxu0 %v643
        %807 = vmatpush.msra.mxu0 %v639
        %808 = vmatmul.f32.gmra.mxu0 %v629
        %v809 = vpop.f32.mrf.mxu0
        %v810 = vadd.f32 %v704, %v809
        %811 = vmatmul.f32.gmra.mxu0 %v630
        %v812 = vpop.f32.mrf.mxu0
        %v813 = vadd.f32 %v704, %v812
        %814 = vmatmul.f32.gmra.mxu0 %v631
        %v815 = vpop.f32.mrf.mxu0
        %v816 = vadd.f32 %v704, %v815
        %817 = vmatmul.f32.gmra.mxu0 %v632
        %v818 = vpop.f32.mrf.mxu0
        %v819 = vadd.f32 %v704, %v818
        %820 = vmatmul.f32.gmra.mxu0 %v633
        %v821 = vpop.f32.mrf.mxu0
        %v822 = vadd.f32 %v704, %v821
        %823 = vmatmul.f32.gmra.mxu0 %v634
        %v824 = vpop.f32.mrf.mxu0
        %v825 = vadd.f32 %v704, %v824
        %826 = vmatmul.f32.gmra.mxu0 %v635
        %v827 = vpop.f32.mrf.mxu0
        %v828 = vadd.f32 %v704, %v827
        %829 = vmatmul.f32.gmra.mxu0 %v636
        %v830 = vpop.f32.mrf.mxu0
        %v831 = vadd.f32 %v704, %v830
        %832 = vdwg.mxu0
        %833 = vmatpush.msra.mxu0 %v700
        %834 = vmatpush.msra.mxu0 %v696
        %835 = vmatpush.msra.mxu0 %v692
        %836 = vmatpush.msra.mxu0 %v688
        %837 = vmatpush.msra.mxu0 %v684
        %838 = vmatpush.msra.mxu0 %v680
        %839 = vmatpush.msra.mxu0 %v676
        %840 = vmatpush.msra.mxu0 %v672
        %841 = vmatpush.msra.mxu0 %v668
        %842 = vmatpush.msra.mxu0 %v664
        %843 = vmatpush.msra.mxu0 %v660
        %844 = vmatpush.msra.mxu0 %v656
        %845 = vmatpush.msra.mxu0 %v652
        %846 = vmatpush.msra.mxu0 %v648
        %847 = vmatpush.msra.mxu0 %v644
        %848 = vmatpush.msra.mxu0 %v640
        %849 = vmatmul.f32.gmra.mxu0 %v629
        %v850 = vpop.f32.mrf.mxu0
        %v851 = vadd.f32 %v705, %v850
        %852 = vmatmul.f32.gmra.mxu0 %v630
        %v853 = vpop.f32.mrf.mxu0
        %v854 = vadd.f32 %v705, %v853
        %855 = vmatmul.f32.gmra.mxu0 %v631
        %v856 = vpop.f32.mrf.mxu0
        %v857 = vadd.f32 %v705, %v856
        %858 = vmatmul.f32.gmra.mxu0 %v632
        %v859 = vpop.f32.mrf.mxu0
        %v860 = vadd.f32 %v705, %v859
        %861 = vmatmul.f32.gmra.mxu0 %v633
        %v862 = vpop.f32.mrf.mxu0
        %v863 = vadd.f32 %v705, %v862
        %864 = vmatmul.f32.gmra.mxu0 %v634
        %v865 = vpop.f32.mrf.mxu0
        %v866 = vadd.f32 %v705, %v865
        %867 = vmatmul.f32.gmra.mxu0 %v635
        %v868 = vpop.f32.mrf.mxu0
        %v869 = vadd.f32 %v705, %v868
        %870 = vmatmul.f32.gmra.mxu0 %v636
        %v871 = vpop.f32.mrf.mxu0
        %v872 = vadd.f32 %v705, %v871
        %873 = vdwg.mxu0
        %874 = vst [vmem:[#allocation3] sm:$0xff] %v728
        %875 = vst [vmem:[#allocation3 + $0x8] sm:$0xff] %v769
        %876 = vst [vmem:[#allocation3 + $0x10] sm:$0xff] %v810
        %877 = vst [vmem:[#allocation3 + $0x18] sm:$0xff] %v851
        %878 = vst [vmem:[#allocation3 + $0x20] sm:$0xff] %v731
        %879 = vst [vmem:[#allocation3 + $0x28] sm:$0xff] %v772
        %880 = vst [vmem:[#allocation3 + $0x30] sm:$0xff] %v813
        %881 = vst [vmem:[#allocation3 + $0x38] sm:$0xff] %v854
        %882 = vst [vmem:[#allocation3 + $0x40] sm:$0xff] %v734
        %883 = vst [vmem:[#allocation3 + $0x48] sm:$0xff] %v775
        %884 = vst [vmem:[#allocation3 + $0x50] sm:$0xff] %v816
        %885 = vst [vmem:[#allocation3 + $0x58] sm:$0xff] %v857
        %886 = vst [vmem:[#allocation3 + $0x60] sm:$0xff] %v737
        %887 = vst [vmem:[#allocation3 + $0x68] sm:$0xff] %v778
        %888 = vst [vmem:[#allocation3 + $0x70] sm:$0xff] %v819
        %889 = vst [vmem:[#allocation3 + $0x78] sm:$0xff] %v860
        %890 = vst [vmem:[#allocation3 + $0x80] sm:$0xff] %v740
        %891 = vst [vmem:[#allocation3 + $0x88] sm:$0xff] %v781
        %892 = vst [vmem:[#allocation3 + $0x90] sm:$0xff] %v822
        %893 = vst [vmem:[#allocation3 + $0x98] sm:$0xff] %v863
        %894 = vst [vmem:[#allocation3 + $0xa0] sm:$0xff] %v743
        %895 = vst [vmem:[#allocation3 + $0xa8] sm:$0xff] %v784
        %896 = vst [vmem:[#allocation3 + $0xb0] sm:$0xff] %v825
        %897 = vst [vmem:[#allocation3 + $0xb8] sm:$0xff] %v866
        %898 = vst [vmem:[#allocation3 + $0xc0] sm:$0xff] %v746
        %899 = vst [vmem:[#allocation3 + $0xc8] sm:$0xff] %v787
        %900 = vst [vmem:[#allocation3 + $0xd0] sm:$0xff] %v828
        %901 = vst [vmem:[#allocation3 + $0xd8] sm:$0xff] %v869
        %902 = vst [vmem:[#allocation3 + $0xe0] sm:$0xff] %v749
        %903 = vst [vmem:[#allocation3 + $0xe8] sm:$0xff] %v790
        %904 = vst [vmem:[#allocation3 + $0xf0] sm:$0xff] %v831
        %905 = vst [vmem:[#allocation3 + $0xf8] sm:$0xff] %v872
      $region48: #{encoder_forward.1} parent=39 // pred_fallthru
        _
      %v906 = vld [vmem:[#allocation3] sm:$0xff]
      %v907 = vld [vmem:[#allocation3 + $0x8] sm:$0xff]
      %v908 = vld [vmem:[#allocation3 + $0x10] sm:$0xff]
      %v909 = vld [vmem:[#allocation3 + $0x18] sm:$0xff]
      %v910 = vld [vmem:[%s324] sm:$0xff]
      %v911 = vld [vmem:[%s324 + $0x8] sm:$0xff]
      %v912 = vld [vmem:[%s324 + $0x10] sm:$0xff]
      %v913 = vld [vmem:[%s324 + $0x18] sm:$0xff]
      %v914 = vld [vmem:[%s324 + $0x20] sm:$0xff]
      %v915 = vld [vmem:[%s324 + $0x28] sm:$0xff]
      %v916 = vld [vmem:[%s324 + $0x30] sm:$0xff]
      %v917 = vld [vmem:[%s324 + $0x38] sm:$0xff]
      %v918 = vld [vmem:[%s324 + $0x40] sm:$0xff]
      %v919 = vld [vmem:[%s324 + $0x48] sm:$0xff]
      %v920 = vld [vmem:[%s324 + $0x50] sm:$0xff]
      %v921 = vld [vmem:[%s324 + $0x58] sm:$0xff]
      %v922 = vld [vmem:[%s324 + $0x60] sm:$0xff]
      %v923 = vld [vmem:[%s324 + $0x68] sm:$0xff]
      %v924 = vld [vmem:[%s324 + $0x70] sm:$0xff]
      %v925 = vld [vmem:[%s324 + $0x78] sm:$0xff]
      %v926 = vld [vmem:[%s324 + $0x80] sm:$0xff]
      %v927 = vld [vmem:[%s324 + $0x88] sm:$0xff]
      %v928 = vld [vmem:[%s324 + $0x90] sm:$0xff]
      %v929 = vld [vmem:[%s324 + $0x98] sm:$0xff]
      %v930 = vld [vmem:[%s324 + $0xa0] sm:$0xff]
      %v931 = vld [vmem:[%s324 + $0xa8] sm:$0xff]
      %v932 = vld [vmem:[%s324 + $0xb0] sm:$0xff]
      %v933 = vld [vmem:[%s324 + $0xb8] sm:$0xff]
      %v934 = vld [vmem:[%s324 + $0xc0] sm:$0xff]
      %v935 = vld [vmem:[%s324 + $0xc8] sm:$0xff]
      %v936 = vld [vmem:[%s324 + $0xd0] sm:$0xff]
      %v937 = vld [vmem:[%s324 + $0xd8] sm:$0xff]
      %v938 = vld [vmem:[%s324 + $0xe0] sm:$0xff]
      %v939 = vld [vmem:[%s324 + $0xe8] sm:$0xff]
      %v940 = vld [vmem:[%s324 + $0xf0] sm:$0xff]
      %v941 = vld [vmem:[%s324 + $0xf8] sm:$0xff]
      %v942 = vld [vmem:[%s324 + $0x100] sm:$0xff]
      %v943 = vld [vmem:[%s324 + $0x108] sm:$0xff]
      %v944 = vld [vmem:[%s324 + $0x110] sm:$0xff]
      %v945 = vld [vmem:[%s324 + $0x118] sm:$0xff]
      %v946 = vld [vmem:[%s324 + $0x120] sm:$0xff]
      %v947 = vld [vmem:[%s324 + $0x128] sm:$0xff]
      %v948 = vld [vmem:[%s324 + $0x130] sm:$0xff]
      %v949 = vld [vmem:[%s324 + $0x138] sm:$0xff]
      %v950 = vld [vmem:[%s324 + $0x140] sm:$0xff]
      %v951 = vld [vmem:[%s324 + $0x148] sm:$0xff]
      %v952 = vld [vmem:[%s324 + $0x150] sm:$0xff]
      %v953 = vld [vmem:[%s324 + $0x158] sm:$0xff]
      %v954 = vld [vmem:[%s324 + $0x160] sm:$0xff]
      %v955 = vld [vmem:[%s324 + $0x168] sm:$0xff]
      %v956 = vld [vmem:[%s324 + $0x170] sm:$0xff]
      %v957 = vld [vmem:[%s324 + $0x178] sm:$0xff]
      %v958 = vld [vmem:[%s324 + $0x180] sm:$0xff]
      %v959 = vld [vmem:[%s324 + $0x188] sm:$0xff]
      %v960 = vld [vmem:[%s324 + $0x190] sm:$0xff]
      %v961 = vld [vmem:[%s324 + $0x198] sm:$0xff]
      %v962 = vld [vmem:[%s324 + $0x1a0] sm:$0xff]
      %v963 = vld [vmem:[%s324 + $0x1a8] sm:$0xff]
      %v964 = vld [vmem:[%s324 + $0x1b0] sm:$0xff]
      %v965 = vld [vmem:[%s324 + $0x1b8] sm:$0xff]
      %v966 = vld [vmem:[%s324 + $0x1c0] sm:$0xff]
      %v967 = vld [vmem:[%s324 + $0x1c8] sm:$0xff]
      %v968 = vld [vmem:[%s324 + $0x1d0] sm:$0xff]
      %v969 = vld [vmem:[%s324 + $0x1d8] sm:$0xff]
      %v970 = vld [vmem:[%s324 + $0x1e0] sm:$0xff]
      %v971 = vld [vmem:[%s324 + $0x1e8] sm:$0xff]
      %v972 = vld [vmem:[%s324 + $0x1f0] sm:$0xff]
      %v973 = vld [vmem:[%s324 + $0x1f8] sm:$0xff]
      %974 = vmatpush.msra.mxu0 %v970
      %975 = vmatpush.msra.mxu0 %v966
      %976 = vmatpush.msra.mxu0 %v962
      %977 = vmatpush.msra.mxu0 %v958
      %978 = vmatpush.msra.mxu0 %v954
      %979 = vmatpush.msra.mxu0 %v950
      %980 = vmatpush.msra.mxu0 %v946
      %981 = vmatpush.msra.mxu0 %v942
      %982 = vmatpush.msra.mxu0 %v938
      %983 = vmatpush.msra.mxu0 %v934
      %984 = vmatpush.msra.mxu0 %v930
      %985 = vmatpush.msra.mxu0 %v926
      %986 = vmatpush.msra.mxu0 %v922
      %987 = vmatpush.msra.mxu0 %v918
      %988 = vmatpush.msra.mxu0 %v914
      %989 = vmatpush.msra.mxu0 %v910
      %990 = vmatmul.f32.gmra.mxu0 0.0
      %v991 = vpop.f32.mrf.mxu0
      %v992 = vadd.f32 0.0, %v991
      %993 = vdwg.mxu0
      %994 = vmatpush.msra.mxu0 %v971
      %995 = vmatpush.msra.mxu0 %v967
      %996 = vmatpush.msra.mxu0 %v963
      %997 = vmatpush.msra.mxu0 %v959
      %998 = vmatpush.msra.mxu0 %v955
      %999 = vmatpush.msra.mxu0 %v951
      %1000 = vmatpush.msra.mxu0 %v947
      %1001 = vmatpush.msra.mxu0 %v943
      %1002 = vmatpush.msra.mxu0 %v939
      %1003 = vmatpush.msra.mxu0 %v935
      %1004 = vmatpush.msra.mxu0 %v931
      %1005 = vmatpush.msra.mxu0 %v927
      %1006 = vmatpush.msra.mxu0 %v923
      %1007 = vmatpush.msra.mxu0 %v919
      %1008 = vmatpush.msra.mxu0 %v915
      %1009 = vmatpush.msra.mxu0 %v911
      %1010 = vmatmul.f32.gmra.mxu0 0.0
      %v1011 = vpop.f32.mrf.mxu0
      %v1012 = vadd.f32 0.0, %v1011
      %1013 = vdwg.mxu0
      %1014 = vmatpush.msra.mxu0 %v972
      %1015 = vmatpush.msra.mxu0 %v968
      %1016 = vmatpush.msra.mxu0 %v964
      %1017 = vmatpush.msra.mxu0 %v960
      %1018 = vmatpush.msra.mxu0 %v956
      %1019 = vmatpush.msra.mxu0 %v952
      %1020 = vmatpush.msra.mxu0 %v948
      %1021 = vmatpush.msra.mxu0 %v944
      %1022 = vmatpush.msra.mxu0 %v940
      %1023 = vmatpush.msra.mxu0 %v936
      %1024 = vmatpush.msra.mxu0 %v932
      %1025 = vmatpush.msra.mxu0 %v928
      %1026 = vmatpush.msra.mxu0 %v924
      %1027 = vmatpush.msra.mxu0 %v920
      %1028 = vmatpush.msra.mxu0 %v916
      %1029 = vmatpush.msra.mxu0 %v912
      %1030 = vmatmul.f32.gmra.mxu0 0.0
      %v1031 = vpop.f32.mrf.mxu0
      %v1032 = vadd.f32 0.0, %v1031
      %1033 = vdwg.mxu0
      %1034 = vmatpush.msra.mxu0 %v973
      %1035 = vmatpush.msra.mxu0 %v969
      %1036 = vmatpush.msra.mxu0 %v965
      %1037 = vmatpush.msra.mxu0 %v961
      %1038 = vmatpush.msra.mxu0 %v957
      %1039 = vmatpush.msra.mxu0 %v953
      %1040 = vmatpush.msra.mxu0 %v949
      %1041 = vmatpush.msra.mxu0 %v945
      %1042 = vmatpush.msra.mxu0 %v941
      %1043 = vmatpush.msra.mxu0 %v937
      %1044 = vmatpush.msra.mxu0 %v933
      %1045 = vmatpush.msra.mxu0 %v929
      %1046 = vmatpush.msra.mxu0 %v925
      %1047 = vmatpush.msra.mxu0 %v921
      %1048 = vmatpush.msra.mxu0 %v917
      %1049 = vmatpush.msra.mxu0 %v913
      %1050 = vmatmul.f32.gmra.mxu0 0.0
      %v1051 = vpop.f32.mrf.mxu0
      %v1052 = vadd.f32 0.0, %v1051
      %1053 = vdwg.mxu0
      %v1054 = vadd.f32 %v906, %v992
      %v1055 = vadd.f32 %v907, %v1012
      %v1056 = vadd.f32 %v908, %v1032
      %v1057 = vadd.f32 %v909, %v1052
      %v1058 = vxor.u32 %v1054, 2147483648
      %v1059 = vmul.f32 %v1058, 1.442695
      %v1060 = vpow.pop %v1059
      %v1061 = vadd.f32 %v1060, 1.0
      %v1062 = vrcp.pop %v1061
      %v1063 = vmul.f32 %v1061, %v1062
      %v1064 = vsub.f32 1.0, %v1063
      %v1065 = vmul.f32 %v1062, %v1064
      %v1066 = vadd.f32 %v1062, %v1065
      %vm1067 = vweird.f32 %v1061
      %vm1068 = vweird.f32 %v1062
      %vm1069 = vmor %vm1067, %vm1068
      %v1070 = vsel %vm1069, %v1062, %v1066
      %v1071 = vand.u32 2147483647, %v1061
      %vm1072 = vcmp.eq.f32.partialorder %v1071, 8.507059e+37
      %v1073 = vand.u32 %v1061, 2147483648
      %v1074 = vor.u32 1.1754944e-38, %v1073
      %v1075 = vsel %vm1072, %v1074, %v1070
      %v1076 = vmul.f32 1.0, %v1075
      %v1077 = vxor.u32 %v1055, 2147483648
      %v1078 = vmul.f32 %v1077, 1.442695
      %v1079 = vpow.pop %v1078
      %v1080 = vadd.f32 %v1079, 1.0
      %v1081 = vrcp.pop %v1080
      %v1082 = vmul.f32 %v1080, %v1081
      %v1083 = vsub.f32 1.0, %v1082
      %v1084 = vmul.f32 %v1081, %v1083
      %v1085 = vadd.f32 %v1081, %v1084
      %vm1086 = vweird.f32 %v1080
      %vm1087 = vweird.f32 %v1081
      %vm1088 = vmor %vm1086, %vm1087
      %v1089 = vsel %vm1088, %v1081, %v1085
      %v1090 = vand.u32 2147483647, %v1080
      %vm1091 = vcmp.eq.f32.partialorder %v1090, 8.507059e+37
      %v1092 = vand.u32 %v1080, 2147483648
      %v1093 = vor.u32 1.1754944e-38, %v1092
      %v1094 = vsel %vm1091, %v1093, %v1089
      %v1095 = vmul.f32 1.0, %v1094
      %v1096 = vtanh.pop %v1056
      %v1097 = vxor.u32 %v1057, 2147483648
      %v1098 = vmul.f32 %v1097, 1.442695
      %v1099 = vpow.pop %v1098
      %v1100 = vadd.f32 %v1099, 1.0
      %v1101 = vrcp.pop %v1100
      %v1102 = vmul.f32 %v1100, %v1101
      %v1103 = vsub.f32 1.0, %v1102
      %v1104 = vmul.f32 %v1101, %v1103
      %v1105 = vadd.f32 %v1101, %v1104
      %vm1106 = vweird.f32 %v1100
      %vm1107 = vweird.f32 %v1101
      %vm1108 = vmor %vm1106, %vm1107
      %v1109 = vsel %vm1108, %v1101, %v1105
      %v1110 = vand.u32 2147483647, %v1100
      %vm1111 = vcmp.eq.f32.partialorder %v1110, 8.507059e+37
      %v1112 = vand.u32 %v1100, 2147483648
      %v1113 = vor.u32 1.1754944e-38, %v1112
      %v1114 = vsel %vm1111, %v1113, %v1109
      %v1115 = vmul.f32 1.0, %v1114
      %v1116 = vmul.f32 %v1095, 0.0
      %v1117 = vmul.f32 %v1076, %v1096
      %v1118 = vadd.f32 %v1116, %v1117
      %v1119 = vtanh.pop %v1118
      %v1120 = vmul.f32 %v1115, %v1119
      %1121 = vst [vmem:[#allocation2] sm:$0xff] %v1120
      %s1122 = scalar_lea.vmem [#allocation3], 32
      %v1123 = vld [vmem:[%s1122] sm:$0xff]
      %v1124 = vld [vmem:[%s1122 + $0x8] sm:$0xff]
      %v1125 = vld [vmem:[%s1122 + $0x10] sm:$0xff]
      %v1126 = vld [vmem:[%s1122 + $0x18] sm:$0xff]
      %v1127 = vld [vmem:[%s324] sm:$0xff]
      %v1128 = vld [vmem:[%s324 + $0x8] sm:$0xff]
      %v1129 = vld [vmem:[%s324 + $0x10] sm:$0xff]
      %v1130 = vld [vmem:[%s324 + $0x18] sm:$0xff]
      %v1131 = vld [vmem:[%s324 + $0x20] sm:$0xff]
      %v1132 = vld [vmem:[%s324 + $0x28] sm:$0xff]
      %v1133 = vld [vmem:[%s324 + $0x30] sm:$0xff]
      %v1134 = vld [vmem:[%s324 + $0x38] sm:$0xff]
      %v1135 = vld [vmem:[%s324 + $0x40] sm:$0xff]
      %v1136 = vld [vmem:[%s324 + $0x48] sm:$0xff]
      %v1137 = vld [vmem:[%s324 + $0x50] sm:$0xff]
      %v1138 = vld [vmem:[%s324 + $0x58] sm:$0xff]
      %v1139 = vld [vmem:[%s324 + $0x60] sm:$0xff]
      %v1140 = vld [vmem:[%s324 + $0x68] sm:$0xff]
      %v1141 = vld [vmem:[%s324 + $0x70] sm:$0xff]
      %v1142 = vld [vmem:[%s324 + $0x78] sm:$0xff]
      %v1143 = vld [vmem:[%s324 + $0x80] sm:$0xff]
      %v1144 = vld [vmem:[%s324 + $0x88] sm:$0xff]
      %v1145 = vld [vmem:[%s324 + $0x90] sm:$0xff]
      %v1146 = vld [vmem:[%s324 + $0x98] sm:$0xff]
      %v1147 = vld [vmem:[%s324 + $0xa0] sm:$0xff]
      %v1148 = vld [vmem:[%s324 + $0xa8] sm:$0xff]
      %v1149 = vld [vmem:[%s324 + $0xb0] sm:$0xff]
      %v1150 = vld [vmem:[%s324 + $0xb8] sm:$0xff]
      %v1151 = vld [vmem:[%s324 + $0xc0] sm:$0xff]
      %v1152 = vld [vmem:[%s324 + $0xc8] sm:$0xff]
      %v1153 = vld [vmem:[%s324 + $0xd0] sm:$0xff]
      %v1154 = vld [vmem:[%s324 + $0xd8] sm:$0xff]
      %v1155 = vld [vmem:[%s324 + $0xe0] sm:$0xff]
      %v1156 = vld [vmem:[%s324 + $0xe8] sm:$0xff]
      %v1157 = vld [vmem:[%s324 + $0xf0] sm:$0xff]
      %v1158 = vld [vmem:[%s324 + $0xf8] sm:$0xff]
      %v1159 = vld [vmem:[%s324 + $0x100] sm:$0xff]
      %v1160 = vld [vmem:[%s324 + $0x108] sm:$0xff]
      %v1161 = vld [vmem:[%s324 + $0x110] sm:$0xff]
      %v1162 = vld [vmem:[%s324 + $0x118] sm:$0xff]
      %v1163 = vld [vmem:[%s324 + $0x120] sm:$0xff]
      %v1164 = vld [vmem:[%s324 + $0x128] sm:$0xff]
      %v1165 = vld [vmem:[%s324 + $0x130] sm:$0xff]
      %v1166 = vld [vmem:[%s324 + $0x138] sm:$0xff]
      %v1167 = vld [vmem:[%s324 + $0x140] sm:$0xff]
      %v1168 = vld [vmem:[%s324 + $0x148] sm:$0xff]
      %v1169 = vld [vmem:[%s324 + $0x150] sm:$0xff]
      %v1170 = vld [vmem:[%s324 + $0x158] sm:$0xff]
      %v1171 = vld [vmem:[%s324 + $0x160] sm:$0xff]
      %v1172 = vld [vmem:[%s324 + $0x168] sm:$0xff]
      %v1173 = vld [vmem:[%s324 + $0x170] sm:$0xff]
      %v1174 = vld [vmem:[%s324 + $0x178] sm:$0xff]
      %v1175 = vld [vmem:[%s324 + $0x180] sm:$0xff]
      %v1176 = vld [vmem:[%s324 + $0x188] sm:$0xff]
      %v1177 = vld [vmem:[%s324 + $0x190] sm:$0xff]
      %v1178 = vld [vmem:[%s324 + $0x198] sm:$0xff]
      %v1179 = vld [vmem:[%s324 + $0x1a0] sm:$0xff]
      %v1180 = vld [vmem:[%s324 + $0x1a8] sm:$0xff]
      %v1181 = vld [vmem:[%s324 + $0x1b0] sm:$0xff]
      %v1182 = vld [vmem:[%s324 + $0x1b8] sm:$0xff]
      %v1183 = vld [vmem:[%s324 + $0x1c0] sm:$0xff]
      %v1184 = vld [vmem:[%s324 + $0x1c8] sm:$0xff]
      %v1185 = vld [vmem:[%s324 + $0x1d0] sm:$0xff]
      %v1186 = vld [vmem:[%s324 + $0x1d8] sm:$0xff]
      %v1187 = vld [vmem:[%s324 + $0x1e0] sm:$0xff]
      %v1188 = vld [vmem:[%s324 + $0x1e8] sm:$0xff]
      %v1189 = vld [vmem:[%s324 + $0x1f0] sm:$0xff]
      %v1190 = vld [vmem:[%s324 + $0x1f8] sm:$0xff]
      %1191 = vmatpush.msra.mxu0 %v1187
      %1192 = vmatpush.msra.mxu0 %v1183
      %1193 = vmatpush.msra.mxu0 %v1179
      %1194 = vmatpush.msra.mxu0 %v1175
      %1195 = vmatpush.msra.mxu0 %v1171
      %1196 = vmatpush.msra.mxu0 %v1167
      %1197 = vmatpush.msra.mxu0 %v1163
      %1198 = vmatpush.msra.mxu0 %v1159
      %1199 = vmatpush.msra.mxu0 %v1155
      %1200 = vmatpush.msra.mxu0 %v1151
      %1201 = vmatpush.msra.mxu0 %v1147
      %1202 = vmatpush.msra.mxu0 %v1143
      %1203 = vmatpush.msra.mxu0 %v1139
      %1204 = vmatpush.msra.mxu0 %v1135
      %1205 = vmatpush.msra.mxu0 %v1131
      %1206 = vmatpush.msra.mxu0 %v1127
      %1207 = vmatmul.f32.gmra.mxu0 %v1120
      %v1208 = vpop.f32.mrf.mxu0
      %v1209 = vadd.f32 0.0, %v1208
      %1210 = vdwg.mxu0
      %1211 = vmatpush.msra.mxu0 %v1188
      %1212 = vmatpush.msra.mxu0 %v1184
      %1213 = vmatpush.msra.mxu0 %v1180
      %1214 = vmatpush.msra.mxu0 %v1176
      %1215 = vmatpush.msra.mxu0 %v1172
      %1216 = vmatpush.msra.mxu0 %v1168
      %1217 = vmatpush.msra.mxu0 %v1164
      %1218 = vmatpush.msra.mxu0 %v1160
      %1219 = vmatpush.msra.mxu0 %v1156
      %1220 = vmatpush.msra.mxu0 %v1152
      %1221 = vmatpush.msra.mxu0 %v1148
      %1222 = vmatpush.msra.mxu0 %v1144
      %1223 = vmatpush.msra.mxu0 %v1140
      %1224 = vmatpush.msra.mxu0 %v1136
      %1225 = vmatpush.msra.mxu0 %v1132
      %1226 = vmatpush.msra.mxu0 %v1128
      %1227 = vmatmul.f32.gmra.mxu0 %v1120
      %v1228 = vpop.f32.mrf.mxu0
      %v1229 = vadd.f32 0.0, %v1228
      %1230 = vdwg.mxu0
      %1231 = vmatpush.msra.mxu0 %v1189
      %1232 = vmatpush.msra.mxu0 %v1185
      %1233 = vmatpush.msra.mxu0 %v1181
      %1234 = vmatpush.msra.mxu0 %v1177
      %1235 = vmatpush.msra.mxu0 %v1173
      %1236 = vmatpush.msra.mxu0 %v1169
      %1237 = vmatpush.msra.mxu0 %v1165
      %1238 = vmatpush.msra.mxu0 %v1161
      %1239 = vmatpush.msra.mxu0 %v1157
      %1240 = vmatpush.msra.mxu0 %v1153
      %1241 = vmatpush.msra.mxu0 %v1149
      %1242 = vmatpush.msra.mxu0 %v1145
      %1243 = vmatpush.msra.mxu0 %v1141
      %1244 = vmatpush.msra.mxu0 %v1137
      %1245 = vmatpush.msra.mxu0 %v1133
      %1246 = vmatpush.msra.mxu0 %v1129
      %1247 = vmatmul.f32.gmra.mxu0 %v1120
      %v1248 = vpop.f32.mrf.mxu0
      %v1249 = vadd.f32 0.0, %v1248
      %1250 = vdwg.mxu0
      %1251 = vmatpush.msra.mxu0 %v1190
      %1252 = vmatpush.msra.mxu0 %v1186
      %1253 = vmatpush.msra.mxu0 %v1182
      %1254 = vmatpush.msra.mxu0 %v1178
      %1255 = vmatpush.msra.mxu0 %v1174
      %1256 = vmatpush.msra.mxu0 %v1170
      %1257 = vmatpush.msra.mxu0 %v1166
      %1258 = vmatpush.msra.mxu0 %v1162
      %1259 = vmatpush.msra.mxu0 %v1158
      %1260 = vmatpush.msra.mxu0 %v1154
      %1261 = vmatpush.msra.mxu0 %v1150
      %1262 = vmatpush.msra.mxu0 %v1146
      %1263 = vmatpush.msra.mxu0 %v1142
      %1264 = vmatpush.msra.mxu0 %v1138
      %1265 = vmatpush.msra.mxu0 %v1134
      %1266 = vmatpush.msra.mxu0 %v1130
      %1267 = vmatmul.f32.gmra.mxu0 %v1120
      %v1268 = vpop.f32.mrf.mxu0
      %v1269 = vadd.f32 0.0, %v1268
      %1270 = vdwg.mxu0
      %v1271 = vadd.f32 %v1123, %v1209
      %v1272 = vadd.f32 %v1124, %v1229
      %v1273 = vadd.f32 %v1125, %v1249
      %v1274 = vadd.f32 %v1126, %v1269
      %v1275 = vxor.u32 %v1271, 2147483648
      %v1276 = vmul.f32 %v1275, 1.442695
      %v1277 = vpow.pop %v1276
      %v1278 = vadd.f32 %v1277, 1.0
      %v1279 = vrcp.pop %v1278
      %v1280 = vmul.f32 %v1278, %v1279
      %v1281 = vsub.f32 1.0, %v1280
      %v1282 = vmul.f32 %v1279, %v1281
      %v1283 = vadd.f32 %v1279, %v1282
      %vm1284 = vweird.f32 %v1278
      %vm1285 = vweird.f32 %v1279
      %vm1286 = vmor %vm1284, %vm1285
      %v1287 = vsel %vm1286, %v1279, %v1283
      %v1288 = vand.u32 2147483647, %v1278
      %vm1289 = vcmp.eq.f32.partialorder %v1288, 8.507059e+37
      %v1290 = vand.u32 %v1278, 2147483648
      %v1291 = vor.u32 1.1754944e-38, %v1290
      %v1292 = vsel %vm1289, %v1291, %v1287
      %v1293 = vmul.f32 1.0, %v1292
      %v1294 = vxor.u32 %v1272, 2147483648
      %v1295 = vmul.f32 %v1294, 1.442695
      %v1296 = vpow.pop %v1295
      %v1297 = vadd.f32 %v1296, 1.0
      %v1298 = vrcp.pop %v1297
      %v1299 = vmul.f32 %v1297, %v1298
      %v1300 = vsub.f32 1.0, %v1299
      %v1301 = vmul.f32 %v1298, %v1300
      %v1302 = vadd.f32 %v1298, %v1301
      %vm1303 = vweird.f32 %v1297
      %vm1304 = vweird.f32 %v1298
      %vm1305 = vmor %vm1303, %vm1304
      %v1306 = vsel %vm1305, %v1298, %v1302
      %v1307 = vand.u32 2147483647, %v1297
      %vm1308 = vcmp.eq.f32.partialorder %v1307, 8.507059e+37
      %v1309 = vand.u32 %v1297, 2147483648
      %v1310 = vor.u32 1.1754944e-38, %v1309
      %v1311 = vsel %vm1308, %v1310, %v1306
      %v1312 = vmul.f32 1.0, %v1311
      %v1313 = vtanh.pop %v1273
      %v1314 = vxor.u32 %v1274, 2147483648
      %v1315 = vmul.f32 %v1314, 1.442695
      %v1316 = vpow.pop %v1315
      %v1317 = vadd.f32 %v1316, 1.0
      %v1318 = vrcp.pop %v1317
      %v1319 = vmul.f32 %v1317, %v1318
      %v1320 = vsub.f32 1.0, %v1319
      %v1321 = vmul.f32 %v1318, %v1320
      %v1322 = vadd.f32 %v1318, %v1321
      %vm1323 = vweird.f32 %v1317
      %vm1324 = vweird.f32 %v1318
      %vm1325 = vmor %vm1323, %vm1324
      %v1326 = vsel %vm1325, %v1318, %v1322
      %v1327 = vand.u32 2147483647, %v1317
      %vm1328 = vcmp.eq.f32.partialorder %v1327, 8.507059e+37
      %v1329 = vand.u32 %v1317, 2147483648
      %v1330 = vor.u32 1.1754944e-38, %v1329
      %v1331 = vsel %vm1328, %v1330, %v1326
      %v1332 = vmul.f32 1.0, %v1331
      %v1333 = vmul.f32 %v1312, %v1118
      %v1334 = vmul.f32 %v1293, %v1313
      %v1335 = vadd.f32 %v1333, %v1334
      %v1336 = vtanh.pop %v1335
      %v1337 = vmul.f32 %v1332, %v1336
      %s1338 = scalar_lea.vmem [#allocation2], 8
      %1339 = vst [vmem:[%s1338] sm:$0xff] %v1337
      %s1340 = scalar_lea.vmem [#allocation3], 64
      %v1341 = vld [vmem:[%s1340] sm:$0xff]
      %v1342 = vld [vmem:[%s1340 + $0x8] sm:$0xff]
      %v1343 = vld [vmem:[%s1340 + $0x10] sm:$0xff]
      %v1344 = vld [vmem:[%s1340 + $0x18] sm:$0xff]
      %v1345 = vld [vmem:[%s324] sm:$0xff]
      %v1346 = vld [vmem:[%s324 + $0x8] sm:$0xff]
      %v1347 = vld [vmem:[%s324 + $0x10] sm:$0xff]
      %v1348 = vld [vmem:[%s324 + $0x18] sm:$0xff]
      %v1349 = vld [vmem:[%s324 + $0x20] sm:$0xff]
      %v1350 = vld [vmem:[%s324 + $0x28] sm:$0xff]
      %v1351 = vld [vmem:[%s324 + $0x30] sm:$0xff]
      %v1352 = vld [vmem:[%s324 + $0x38] sm:$0xff]
      %v1353 = vld [vmem:[%s324 + $0x40] sm:$0xff]
      %v1354 = vld [vmem:[%s324 + $0x48] sm:$0xff]
      %v1355 = vld [vmem:[%s324 + $0x50] sm:$0xff]
      %v1356 = vld [vmem:[%s324 + $0x58] sm:$0xff]
      %v1357 = vld [vmem:[%s324 + $0x60] sm:$0xff]
      %v1358 = vld [vmem:[%s324 + $0x68] sm:$0xff]
      %v1359 = vld [vmem:[%s324 + $0x70] sm:$0xff]
      %v1360 = vld [vmem:[%s324 + $0x78] sm:$0xff]
      %v1361 = vld [vmem:[%s324 + $0x80] sm:$0xff]
      %v1362 = vld [vmem:[%s324 + $0x88] sm:$0xff]
      %v1363 = vld [vmem:[%s324 + $0x90] sm:$0xff]
      %v1364 = vld [vmem:[%s324 + $0x98] sm:$0xff]
      %v1365 = vld [vmem:[%s324 + $0xa0] sm:$0xff]
      %v1366 = vld [vmem:[%s324 + $0xa8] sm:$0xff]
      %v1367 = vld [vmem:[%s324 + $0xb0] sm:$0xff]
      %v1368 = vld [vmem:[%s324 + $0xb8] sm:$0xff]
      %v1369 = vld [vmem:[%s324 + $0xc0] sm:$0xff]
      %v1370 = vld [vmem:[%s324 + $0xc8] sm:$0xff]
      %v1371 = vld [vmem:[%s324 + $0xd0] sm:$0xff]
      %v1372 = vld [vmem:[%s324 + $0xd8] sm:$0xff]
      %v1373 = vld [vmem:[%s324 + $0xe0] sm:$0xff]
      %v1374 = vld [vmem:[%s324 + $0xe8] sm:$0xff]
      %v1375 = vld [vmem:[%s324 + $0xf0] sm:$0xff]
      %v1376 = vld [vmem:[%s324 + $0xf8] sm:$0xff]
      %v1377 = vld [vmem:[%s324 + $0x100] sm:$0xff]
      %v1378 = vld [vmem:[%s324 + $0x108] sm:$0xff]
      %v1379 = vld [vmem:[%s324 + $0x110] sm:$0xff]
      %v1380 = vld [vmem:[%s324 + $0x118] sm:$0xff]
      %v1381 = vld [vmem:[%s324 + $0x120] sm:$0xff]
      %v1382 = vld [vmem:[%s324 + $0x128] sm:$0xff]
      %v1383 = vld [vmem:[%s324 + $0x130] sm:$0xff]
      %v1384 = vld [vmem:[%s324 + $0x138] sm:$0xff]
      %v1385 = vld [vmem:[%s324 + $0x140] sm:$0xff]
      %v1386 = vld [vmem:[%s324 + $0x148] sm:$0xff]
      %v1387 = vld [vmem:[%s324 + $0x150] sm:$0xff]
      %v1388 = vld [vmem:[%s324 + $0x158] sm:$0xff]
      %v1389 = vld [vmem:[%s324 + $0x160] sm:$0xff]
      %v1390 = vld [vmem:[%s324 + $0x168] sm:$0xff]
      %v1391 = vld [vmem:[%s324 + $0x170] sm:$0xff]
      %v1392 = vld [vmem:[%s324 + $0x178] sm:$0xff]
      %v1393 = vld [vmem:[%s324 + $0x180] sm:$0xff]
      %v1394 = vld [vmem:[%s324 + $0x188] sm:$0xff]
      %v1395 = vld [vmem:[%s324 + $0x190] sm:$0xff]
      %v1396 = vld [vmem:[%s324 + $0x198] sm:$0xff]
      %v1397 = vld [vmem:[%s324 + $0x1a0] sm:$0xff]
      %v1398 = vld [vmem:[%s324 + $0x1a8] sm:$0xff]
      %v1399 = vld [vmem:[%s324 + $0x1b0] sm:$0xff]
      %v1400 = vld [vmem:[%s324 + $0x1b8] sm:$0xff]
      %v1401 = vld [vmem:[%s324 + $0x1c0] sm:$0xff]
      %v1402 = vld [vmem:[%s324 + $0x1c8] sm:$0xff]
      %v1403 = vld [vmem:[%s324 + $0x1d0] sm:$0xff]
      %v1404 = vld [vmem:[%s324 + $0x1d8] sm:$0xff]
      %v1405 = vld [vmem:[%s324 + $0x1e0] sm:$0xff]
      %v1406 = vld [vmem:[%s324 + $0x1e8] sm:$0xff]
      %v1407 = vld [vmem:[%s324 + $0x1f0] sm:$0xff]
      %v1408 = vld [vmem:[%s324 + $0x1f8] sm:$0xff]
      %1409 = vmatpush.msra.mxu0 %v1405
      %1410 = vmatpush.msra.mxu0 %v1401
      %1411 = vmatpush.msra.mxu0 %v1397
      %1412 = vmatpush.msra.mxu0 %v1393
      %1413 = vmatpush.msra.mxu0 %v1389
      %1414 = vmatpush.msra.mxu0 %v1385
      %1415 = vmatpush.msra.mxu0 %v1381
      %1416 = vmatpush.msra.mxu0 %v1377
      %1417 = vmatpush.msra.mxu0 %v1373
      %1418 = vmatpush.msra.mxu0 %v1369
      %1419 = vmatpush.msra.mxu0 %v1365
      %1420 = vmatpush.msra.mxu0 %v1361
      %1421 = vmatpush.msra.mxu0 %v1357
      %1422 = vmatpush.msra.mxu0 %v1353
      %1423 = vmatpush.msra.mxu0 %v1349
      %1424 = vmatpush.msra.mxu0 %v1345
      %1425 = vmatmul.f32.gmra.mxu0 %v1337
      %v1426 = vpop.f32.mrf.mxu0
      %v1427 = vadd.f32 0.0, %v1426
      %1428 = vdwg.mxu0
      %1429 = vmatpush.msra.mxu0 %v1406
      %1430 = vmatpush.msra.mxu0 %v1402
      %1431 = vmatpush.msra.mxu0 %v1398
      %1432 = vmatpush.msra.mxu0 %v1394
      %1433 = vmatpush.msra.mxu0 %v1390
      %1434 = vmatpush.msra.mxu0 %v1386
      %1435 = vmatpush.msra.mxu0 %v1382
      %1436 = vmatpush.msra.mxu0 %v1378
      %1437 = vmatpush.msra.mxu0 %v1374
      %1438 = vmatpush.msra.mxu0 %v1370
      %1439 = vmatpush.msra.mxu0 %v1366
      %1440 = vmatpush.msra.mxu0 %v1362
      %1441 = vmatpush.msra.mxu0 %v1358
      %1442 = vmatpush.msra.mxu0 %v1354
      %1443 = vmatpush.msra.mxu0 %v1350
      %1444 = vmatpush.msra.mxu0 %v1346
      %1445 = vmatmul.f32.gmra.mxu0 %v1337
      %v1446 = vpop.f32.mrf.mxu0
      %v1447 = vadd.f32 0.0, %v1446
      %1448 = vdwg.mxu0
      %1449 = vmatpush.msra.mxu0 %v1407
      %1450 = vmatpush.msra.mxu0 %v1403
      %1451 = vmatpush.msra.mxu0 %v1399
      %1452 = vmatpush.msra.mxu0 %v1395
      %1453 = vmatpush.msra.mxu0 %v1391
      %1454 = vmatpush.msra.mxu0 %v1387
      %1455 = vmatpush.msra.mxu0 %v1383
      %1456 = vmatpush.msra.mxu0 %v1379
      %1457 = vmatpush.msra.mxu0 %v1375
      %1458 = vmatpush.msra.mxu0 %v1371
      %1459 = vmatpush.msra.mxu0 %v1367
      %1460 = vmatpush.msra.mxu0 %v1363
      %1461 = vmatpush.msra.mxu0 %v1359
      %1462 = vmatpush.msra.mxu0 %v1355
      %1463 = vmatpush.msra.mxu0 %v1351
      %1464 = vmatpush.msra.mxu0 %v1347
      %1465 = vmatmul.f32.gmra.mxu0 %v1337
      %v1466 = vpop.f32.mrf.mxu0
      %v1467 = vadd.f32 0.0, %v1466
      %1468 = vdwg.mxu0
      %1469 = vmatpush.msra.mxu0 %v1408
      %1470 = vmatpush.msra.mxu0 %v1404
      %1471 = vmatpush.msra.mxu0 %v1400
      %1472 = vmatpush.msra.mxu0 %v1396
      %1473 = vmatpush.msra.mxu0 %v1392
      %1474 = vmatpush.msra.mxu0 %v1388
      %1475 = vmatpush.msra.mxu0 %v1384
      %1476 = vmatpush.msra.mxu0 %v1380
      %1477 = vmatpush.msra.mxu0 %v1376
      %1478 = vmatpush.msra.mxu0 %v1372
      %1479 = vmatpush.msra.mxu0 %v1368
      %1480 = vmatpush.msra.mxu0 %v1364
      %1481 = vmatpush.msra.mxu0 %v1360
      %1482 = vmatpush.msra.mxu0 %v1356
      %1483 = vmatpush.msra.mxu0 %v1352
      %1484 = vmatpush.msra.mxu0 %v1348
      %1485 = vmatmul.f32.gmra.mxu0 %v1337
      %v1486 = vpop.f32.mrf.mxu0
      %v1487 = vadd.f32 0.0, %v1486
      %1488 = vdwg.mxu0
      %v1489 = vadd.f32 %v1341, %v1427
      %v1490 = vadd.f32 %v1342, %v1447
      %v1491 = vadd.f32 %v1343, %v1467
      %v1492 = vadd.f32 %v1344, %v1487
      %v1493 = vxor.u32 %v1489, 2147483648
      %v1494 = vmul.f32 %v1493, 1.442695
      %v1495 = vpow.pop %v1494
      %v1496 = vadd.f32 %v1495, 1.0
      %v1497 = vrcp.pop %v1496
      %v1498 = vmul.f32 %v1496, %v1497
      %v1499 = vsub.f32 1.0, %v1498
      %v1500 = vmul.f32 %v1497, %v1499
      %v1501 = vadd.f32 %v1497, %v1500
      %vm1502 = vweird.f32 %v1496
      %vm1503 = vweird.f32 %v1497
      %vm1504 = vmor %vm1502, %vm1503
      %v1505 = vsel %vm1504, %v1497, %v1501
      %v1506 = vand.u32 2147483647, %v1496
      %vm1507 = vcmp.eq.f32.partialorder %v1506, 8.507059e+37
      %v1508 = vand.u32 %v1496, 2147483648
      %v1509 = vor.u32 1.1754944e-38, %v1508
      %v1510 = vsel %vm1507, %v1509, %v1505
      %v1511 = vmul.f32 1.0, %v1510
      %v1512 = vxor.u32 %v1490, 2147483648
      %v1513 = vmul.f32 %v1512, 1.442695
      %v1514 = vpow.pop %v1513
      %v1515 = vadd.f32 %v1514, 1.0
      %v1516 = vrcp.pop %v1515
      %v1517 = vmul.f32 %v1515, %v1516
      %v1518 = vsub.f32 1.0, %v1517
      %v1519 = vmul.f32 %v1516, %v1518
      %v1520 = vadd.f32 %v1516, %v1519
      %vm1521 = vweird.f32 %v1515
      %vm1522 = vweird.f32 %v1516
      %vm1523 = vmor %vm1521, %vm1522
      %v1524 = vsel %vm1523, %v1516, %v1520
      %v1525 = vand.u32 2147483647, %v1515
      %vm1526 = vcmp.eq.f32.partialorder %v1525, 8.507059e+37
      %v1527 = vand.u32 %v1515, 2147483648
      %v1528 = vor.u32 1.1754944e-38, %v1527
      %v1529 = vsel %vm1526, %v1528, %v1524
      %v1530 = vmul.f32 1.0, %v1529
      %v1531 = vtanh.pop %v1491
      %v1532 = vxor.u32 %v1492, 2147483648
      %v1533 = vmul.f32 %v1532, 1.442695
      %v1534 = vpow.pop %v1533
      %v1535 = vadd.f32 %v1534, 1.0
      %v1536 = vrcp.pop %v1535
      %v1537 = vmul.f32 %v1535, %v1536
      %v1538 = vsub.f32 1.0, %v1537
      %v1539 = vmul.f32 %v1536, %v1538
      %v1540 = vadd.f32 %v1536, %v1539
      %vm1541 = vweird.f32 %v1535
      %vm1542 = vweird.f32 %v1536
      %vm1543 = vmor %vm1541, %vm1542
      %v1544 = vsel %vm1543, %v1536, %v1540
      %v1545 = vand.u32 2147483647, %v1535
      %vm1546 = vcmp.eq.f32.partialorder %v1545, 8.507059e+37
      %v1547 = vand.u32 %v1535, 2147483648
      %v1548 = vor.u32 1.1754944e-38, %v1547
      %v1549 = vsel %vm1546, %v1548, %v1544
      %v1550 = vmul.f32 1.0, %v1549
      %v1551 = vmul.f32 %v1530, %v1335
      %v1552 = vmul.f32 %v1511, %v1531
      %v1553 = vadd.f32 %v1551, %v1552
      %v1554 = vtanh.pop %v1553
      %v1555 = vmul.f32 %v1550, %v1554
      %s1556 = scalar_lea.vmem [#allocation2], 16
      %1557 = vst [vmem:[%s1556] sm:$0xff] %v1555
      %s1558 = scalar_lea.vmem [#allocation3], 96
      %v1559 = vld [vmem:[%s1558] sm:$0xff]
      %v1560 = vld [vmem:[%s1558 + $0x8] sm:$0xff]
      %v1561 = vld [vmem:[%s1558 + $0x10] sm:$0xff]
      %v1562 = vld [vmem:[%s1558 + $0x18] sm:$0xff]
      %v1563 = vld [vmem:[%s324] sm:$0xff]
      %v1564 = vld [vmem:[%s324 + $0x8] sm:$0xff]
      %v1565 = vld [vmem:[%s324 + $0x10] sm:$0xff]
      %v1566 = vld [vmem:[%s324 + $0x18] sm:$0xff]
      %v1567 = vld [vmem:[%s324 + $0x20] sm:$0xff]
      %v1568 = vld [vmem:[%s324 + $0x28] sm:$0xff]
      %v1569 = vld [vmem:[%s324 + $0x30] sm:$0xff]
      %v1570 = vld [vmem:[%s324 + $0x38] sm:$0xff]
      %v1571 = vld [vmem:[%s324 + $0x40] sm:$0xff]
      %v1572 = vld [vmem:[%s324 + $0x48] sm:$0xff]
      %v1573 = vld [vmem:[%s324 + $0x50] sm:$0xff]
      %v1574 = vld [vmem:[%s324 + $0x58] sm:$0xff]
      %v1575 = vld [vmem:[%s324 + $0x60] sm:$0xff]
      %v1576 = vld [vmem:[%s324 + $0x68] sm:$0xff]
      %v1577 = vld [vmem:[%s324 + $0x70] sm:$0xff]
      %v1578 = vld [vmem:[%s324 + $0x78] sm:$0xff]
      %v1579 = vld [vmem:[%s324 + $0x80] sm:$0xff]
      %v1580 = vld [vmem:[%s324 + $0x88] sm:$0xff]
      %v1581 = vld [vmem:[%s324 + $0x90] sm:$0xff]
      %v1582 = vld [vmem:[%s324 + $0x98] sm:$0xff]
      %v1583 = vld [vmem:[%s324 + $0xa0] sm:$0xff]
      %v1584 = vld [vmem:[%s324 + $0xa8] sm:$0xff]
      %v1585 = vld [vmem:[%s324 + $0xb0] sm:$0xff]
      %v1586 = vld [vmem:[%s324 + $0xb8] sm:$0xff]
      %v1587 = vld [vmem:[%s324 + $0xc0] sm:$0xff]
      %v1588 = vld [vmem:[%s324 + $0xc8] sm:$0xff]
      %v1589 = vld [vmem:[%s324 + $0xd0] sm:$0xff]
      %v1590 = vld [vmem:[%s324 + $0xd8] sm:$0xff]
      %v1591 = vld [vmem:[%s324 + $0xe0] sm:$0xff]
      %v1592 = vld [vmem:[%s324 + $0xe8] sm:$0xff]
      %v1593 = vld [vmem:[%s324 + $0xf0] sm:$0xff]
      %v1594 = vld [vmem:[%s324 + $0xf8] sm:$0xff]
      %v1595 = vld [vmem:[%s324 + $0x100] sm:$0xff]
      %v1596 = vld [vmem:[%s324 + $0x108] sm:$0xff]
      %v1597 = vld [vmem:[%s324 + $0x110] sm:$0xff]
      %v1598 = vld [vmem:[%s324 + $0x118] sm:$0xff]
      %v1599 = vld [vmem:[%s324 + $0x120] sm:$0xff]
      %v1600 = vld [vmem:[%s324 + $0x128] sm:$0xff]
      %v1601 = vld [vmem:[%s324 + $0x130] sm:$0xff]
      %v1602 = vld [vmem:[%s324 + $0x138] sm:$0xff]
      %v1603 = vld [vmem:[%s324 + $0x140] sm:$0xff]
      %v1604 = vld [vmem:[%s324 + $0x148] sm:$0xff]
      %v1605 = vld [vmem:[%s324 + $0x150] sm:$0xff]
      %v1606 = vld [vmem:[%s324 + $0x158] sm:$0xff]
      %v1607 = vld [vmem:[%s324 + $0x160] sm:$0xff]
      %v1608 = vld [vmem:[%s324 + $0x168] sm:$0xff]
      %v1609 = vld [vmem:[%s324 + $0x170] sm:$0xff]
      %v1610 = vld [vmem:[%s324 + $0x178] sm:$0xff]
      %v1611 = vld [vmem:[%s324 + $0x180] sm:$0xff]
      %v1612 = vld [vmem:[%s324 + $0x188] sm:$0xff]
      %v1613 = vld [vmem:[%s324 + $0x190] sm:$0xff]
      %v1614 = vld [vmem:[%s324 + $0x198] sm:$0xff]
      %v1615 = vld [vmem:[%s324 + $0x1a0] sm:$0xff]
      %v1616 = vld [vmem:[%s324 + $0x1a8] sm:$0xff]
      %v1617 = vld [vmem:[%s324 + $0x1b0] sm:$0xff]
      %v1618 = vld [vmem:[%s324 + $0x1b8] sm:$0xff]
      %v1619 = vld [vmem:[%s324 + $0x1c0] sm:$0xff]
      %v1620 = vld [vmem:[%s324 + $0x1c8] sm:$0xff]
      %v1621 = vld [vmem:[%s324 + $0x1d0] sm:$0xff]
      %v1622 = vld [vmem:[%s324 + $0x1d8] sm:$0xff]
      %v1623 = vld [vmem:[%s324 + $0x1e0] sm:$0xff]
      %v1624 = vld [vmem:[%s324 + $0x1e8] sm:$0xff]
      %v1625 = vld [vmem:[%s324 + $0x1f0] sm:$0xff]
      %v1626 = vld [vmem:[%s324 + $0x1f8] sm:$0xff]
      %1627 = vmatpush.msra.mxu0 %v1623
      %1628 = vmatpush.msra.mxu0 %v1619
      %1629 = vmatpush.msra.mxu0 %v1615
      %1630 = vmatpush.msra.mxu0 %v1611
      %1631 = vmatpush.msra.mxu0 %v1607
      %1632 = vmatpush.msra.mxu0 %v1603
      %1633 = vmatpush.msra.mxu0 %v1599
      %1634 = vmatpush.msra.mxu0 %v1595
      %1635 = vmatpush.msra.mxu0 %v1591
      %1636 = vmatpush.msra.mxu0 %v1587
      %1637 = vmatpush.msra.mxu0 %v1583
      %1638 = vmatpush.msra.mxu0 %v1579
      %1639 = vmatpush.msra.mxu0 %v1575
      %1640 = vmatpush.msra.mxu0 %v1571
      %1641 = vmatpush.msra.mxu0 %v1567
      %1642 = vmatpush.msra.mxu0 %v1563
      %1643 = vmatmul.f32.gmra.mxu0 %v1555
      %v1644 = vpop.f32.mrf.mxu0
      %v1645 = vadd.f32 0.0, %v1644
      %1646 = vdwg.mxu0
      %1647 = vmatpush.msra.mxu0 %v1624
      %1648 = vmatpush.msra.mxu0 %v1620
      %1649 = vmatpush.msra.mxu0 %v1616
      %1650 = vmatpush.msra.mxu0 %v1612
      %1651 = vmatpush.msra.mxu0 %v1608
      %1652 = vmatpush.msra.mxu0 %v1604
      %1653 = vmatpush.msra.mxu0 %v1600
      %1654 = vmatpush.msra.mxu0 %v1596
      %1655 = vmatpush.msra.mxu0 %v1592
      %1656 = vmatpush.msra.mxu0 %v1588
      %1657 = vmatpush.msra.mxu0 %v1584
      %1658 = vmatpush.msra.mxu0 %v1580
      %1659 = vmatpush.msra.mxu0 %v1576
      %1660 = vmatpush.msra.mxu0 %v1572
      %1661 = vmatpush.msra.mxu0 %v1568
      %1662 = vmatpush.msra.mxu0 %v1564
      %1663 = vmatmul.f32.gmra.mxu0 %v1555
      %v1664 = vpop.f32.mrf.mxu0
      %v1665 = vadd.f32 0.0, %v1664
      %1666 = vdwg.mxu0
      %1667 = vmatpush.msra.mxu0 %v1625
      %1668 = vmatpush.msra.mxu0 %v1621
      %1669 = vmatpush.msra.mxu0 %v1617
      %1670 = vmatpush.msra.mxu0 %v1613
      %1671 = vmatpush.msra.mxu0 %v1609
      %1672 = vmatpush.msra.mxu0 %v1605
      %1673 = vmatpush.msra.mxu0 %v1601
      %1674 = vmatpush.msra.mxu0 %v1597
      %1675 = vmatpush.msra.mxu0 %v1593
      %1676 = vmatpush.msra.mxu0 %v1589
      %1677 = vmatpush.msra.mxu0 %v1585
      %1678 = vmatpush.msra.mxu0 %v1581
      %1679 = vmatpush.msra.mxu0 %v1577
      %1680 = vmatpush.msra.mxu0 %v1573
      %1681 = vmatpush.msra.mxu0 %v1569
      %1682 = vmatpush.msra.mxu0 %v1565
      %1683 = vmatmul.f32.gmra.mxu0 %v1555
      %v1684 = vpop.f32.mrf.mxu0
      %v1685 = vadd.f32 0.0, %v1684
      %1686 = vdwg.mxu0
      %1687 = vmatpush.msra.mxu0 %v1626
      %1688 = vmatpush.msra.mxu0 %v1622
      %1689 = vmatpush.msra.mxu0 %v1618
      %1690 = vmatpush.msra.mxu0 %v1614
      %1691 = vmatpush.msra.mxu0 %v1610
      %1692 = vmatpush.msra.mxu0 %v1606
      %1693 = vmatpush.msra.mxu0 %v1602
      %1694 = vmatpush.msra.mxu0 %v1598
      %1695 = vmatpush.msra.mxu0 %v1594
      %1696 = vmatpush.msra.mxu0 %v1590
      %1697 = vmatpush.msra.mxu0 %v1586
      %1698 = vmatpush.msra.mxu0 %v1582
      %1699 = vmatpush.msra.mxu0 %v1578
      %1700 = vmatpush.msra.mxu0 %v1574
      %1701 = vmatpush.msra.mxu0 %v1570
      %1702 = vmatpush.msra.mxu0 %v1566
      %1703 = vmatmul.f32.gmra.mxu0 %v1555
      %v1704 = vpop.f32.mrf.mxu0
      %v1705 = vadd.f32 0.0, %v1704
      %1706 = vdwg.mxu0
      %v1707 = vadd.f32 %v1559, %v1645
      %v1708 = vadd.f32 %v1560, %v1665
      %v1709 = vadd.f32 %v1561, %v1685
      %v1710 = vadd.f32 %v1562, %v1705
      %v1711 = vxor.u32 %v1707, 2147483648
      %v1712 = vmul.f32 %v1711, 1.442695
      %v1713 = vpow.pop %v1712
      %v1714 = vadd.f32 %v1713, 1.0
      %v1715 = vrcp.pop %v1714
      %v1716 = vmul.f32 %v1714, %v1715
      %v1717 = vsub.f32 1.0, %v1716
      %v1718 = vmul.f32 %v1715, %v1717
      %v1719 = vadd.f32 %v1715, %v1718
      %vm1720 = vweird.f32 %v1714
      %vm1721 = vweird.f32 %v1715
      %vm1722 = vmor %vm1720, %vm1721
      %v1723 = vsel %vm1722, %v1715, %v1719
      %v1724 = vand.u32 2147483647, %v1714
      %vm1725 = vcmp.eq.f32.partialorder %v1724, 8.507059e+37
      %v1726 = vand.u32 %v1714, 2147483648
      %v1727 = vor.u32 1.1754944e-38, %v1726
      %v1728 = vsel %vm1725, %v1727, %v1723
      %v1729 = vmul.f32 1.0, %v1728
      %v1730 = vxor.u32 %v1708, 2147483648
      %v1731 = vmul.f32 %v1730, 1.442695
      %v1732 = vpow.pop %v1731
      %v1733 = vadd.f32 %v1732, 1.0
      %v1734 = vrcp.pop %v1733
      %v1735 = vmul.f32 %v1733, %v1734
      %v1736 = vsub.f32 1.0, %v1735
      %v1737 = vmul.f32 %v1734, %v1736
      %v1738 = vadd.f32 %v1734, %v1737
      %vm1739 = vweird.f32 %v1733
      %vm1740 = vweird.f32 %v1734
      %vm1741 = vmor %vm1739, %vm1740
      %v1742 = vsel %vm1741, %v1734, %v1738
      %v1743 = vand.u32 2147483647, %v1733
      %vm1744 = vcmp.eq.f32.partialorder %v1743, 8.507059e+37
      %v1745 = vand.u32 %v1733, 2147483648
      %v1746 = vor.u32 1.1754944e-38, %v1745
      %v1747 = vsel %vm1744, %v1746, %v1742
      %v1748 = vmul.f32 1.0, %v1747
      %v1749 = vtanh.pop %v1709
      %v1750 = vxor.u32 %v1710, 2147483648
      %v1751 = vmul.f32 %v1750, 1.442695
      %v1752 = vpow.pop %v1751
      %v1753 = vadd.f32 %v1752, 1.0
      %v1754 = vrcp.pop %v1753
      %v1755 = vmul.f32 %v1753, %v1754
      %v1756 = vsub.f32 1.0, %v1755
      %v1757 = vmul.f32 %v1754, %v1756
      %v1758 = vadd.f32 %v1754, %v1757
      %vm1759 = vweird.f32 %v1753
      %vm1760 = vweird.f32 %v1754
      %vm1761 = vmor %vm1759, %vm1760
      %v1762 = vsel %vm1761, %v1754, %v1758
      %v1763 = vand.u32 2147483647, %v1753
      %vm1764 = vcmp.eq.f32.partialorder %v1763, 8.507059e+37
      %v1765 = vand.u32 %v1753, 2147483648
      %v1766 = vor.u32 1.1754944e-38, %v1765
      %v1767 = vsel %vm1764, %v1766, %v1762
      %v1768 = vmul.f32 1.0, %v1767
      %v1769 = vmul.f32 %v1748, %v1553
      %v1770 = vmul.f32 %v1729, %v1749
      %v1771 = vadd.f32 %v1769, %v1770
      %v1772 = vtanh.pop %v1771
      %v1773 = vmul.f32 %v1768, %v1772
      %s1774 = scalar_lea.vmem [#allocation2], 24
      %1775 = vst [vmem:[%s1774] sm:$0xff] %v1773
      %s1776 = scalar_lea.vmem [#allocation3], 128
      %v1777 = vld [vmem:[%s1776] sm:$0xff]
      %v1778 = vld [vmem:[%s1776 + $0x8] sm:$0xff]
      %v1779 = vld [vmem:[%s1776 + $0x10] sm:$0xff]
      %v1780 = vld [vmem:[%s1776 + $0x18] sm:$0xff]
      %v1781 = vld [vmem:[%s324] sm:$0xff]
      %v1782 = vld [vmem:[%s324 + $0x8] sm:$0xff]
      %v1783 = vld [vmem:[%s324 + $0x10] sm:$0xff]
      %v1784 = vld [vmem:[%s324 + $0x18] sm:$0xff]
      %v1785 = vld [vmem:[%s324 + $0x20] sm:$0xff]
      %v1786 = vld [vmem:[%s324 + $0x28] sm:$0xff]
      %v1787 = vld [vmem:[%s324 + $0x30] sm:$0xff]
      %v1788 = vld [vmem:[%s324 + $0x38] sm:$0xff]
      %v1789 = vld [vmem:[%s324 + $0x40] sm:$0xff]
      %v1790 = vld [vmem:[%s324 + $0x48] sm:$0xff]
      %v1791 = vld [vmem:[%s324 + $0x50] sm:$0xff]
      %v1792 = vld [vmem:[%s324 + $0x58] sm:$0xff]
      %v1793 = vld [vmem:[%s324 + $0x60] sm:$0xff]
      %v1794 = vld [vmem:[%s324 + $0x68] sm:$0xff]
      %v1795 = vld [vmem:[%s324 + $0x70] sm:$0xff]
      %v1796 = vld [vmem:[%s324 + $0x78] sm:$0xff]
      %v1797 = vld [vmem:[%s324 + $0x80] sm:$0xff]
      %v1798 = vld [vmem:[%s324 + $0x88] sm:$0xff]
      %v1799 = vld [vmem:[%s324 + $0x90] sm:$0xff]
      %v1800 = vld [vmem:[%s324 + $0x98] sm:$0xff]
      %v1801 = vld [vmem:[%s324 + $0xa0] sm:$0xff]
      %v1802 = vld [vmem:[%s324 + $0xa8] sm:$0xff]
      %v1803 = vld [vmem:[%s324 + $0xb0] sm:$0xff]
      %v1804 = vld [vmem:[%s324 + $0xb8] sm:$0xff]
      %v1805 = vld [vmem:[%s324 + $0xc0] sm:$0xff]
      %v1806 = vld [vmem:[%s324 + $0xc8] sm:$0xff]
      %v1807 = vld [vmem:[%s324 + $0xd0] sm:$0xff]
      %v1808 = vld [vmem:[%s324 + $0xd8] sm:$0xff]
      %v1809 = vld [vmem:[%s324 + $0xe0] sm:$0xff]
      %v1810 = vld [vmem:[%s324 + $0xe8] sm:$0xff]
      %v1811 = vld [vmem:[%s324 + $0xf0] sm:$0xff]
      %v1812 = vld [vmem:[%s324 + $0xf8] sm:$0xff]
      %v1813 = vld [vmem:[%s324 + $0x100] sm:$0xff]
      %v1814 = vld [vmem:[%s324 + $0x108] sm:$0xff]
      %v1815 = vld [vmem:[%s324 + $0x110] sm:$0xff]
      %v1816 = vld [vmem:[%s324 + $0x118] sm:$0xff]
      %v1817 = vld [vmem:[%s324 + $0x120] sm:$0xff]
      %v1818 = vld [vmem:[%s324 + $0x128] sm:$0xff]
      %v1819 = vld [vmem:[%s324 + $0x130] sm:$0xff]
      %v1820 = vld [vmem:[%s324 + $0x138] sm:$0xff]
      %v1821 = vld [vmem:[%s324 + $0x140] sm:$0xff]
      %v1822 = vld [vmem:[%s324 + $0x148] sm:$0xff]
      %v1823 = vld [vmem:[%s324 + $0x150] sm:$0xff]
      %v1824 = vld [vmem:[%s324 + $0x158] sm:$0xff]
      %v1825 = vld [vmem:[%s324 + $0x160] sm:$0xff]
      %v1826 = vld [vmem:[%s324 + $0x168] sm:$0xff]
      %v1827 = vld [vmem:[%s324 + $0x170] sm:$0xff]
      %v1828 = vld [vmem:[%s324 + $0x178] sm:$0xff]
      %v1829 = vld [vmem:[%s324 + $0x180] sm:$0xff]
      %v1830 = vld [vmem:[%s324 + $0x188] sm:$0xff]
      %v1831 = vld [vmem:[%s324 + $0x190] sm:$0xff]
      %v1832 = vld [vmem:[%s324 + $0x198] sm:$0xff]
      %v1833 = vld [vmem:[%s324 + $0x1a0] sm:$0xff]
      %v1834 = vld [vmem:[%s324 + $0x1a8] sm:$0xff]
      %v1835 = vld [vmem:[%s324 + $0x1b0] sm:$0xff]
      %v1836 = vld [vmem:[%s324 + $0x1b8] sm:$0xff]
      %v1837 = vld [vmem:[%s324 + $0x1c0] sm:$0xff]
      %v1838 = vld [vmem:[%s324 + $0x1c8] sm:$0xff]
      %v1839 = vld [vmem:[%s324 + $0x1d0] sm:$0xff]
      %v1840 = vld [vmem:[%s324 + $0x1d8] sm:$0xff]
      %v1841 = vld [vmem:[%s324 + $0x1e0] sm:$0xff]
      %v1842 = vld [vmem:[%s324 + $0x1e8] sm:$0xff]
      %v1843 = vld [vmem:[%s324 + $0x1f0] sm:$0xff]
      %v1844 = vld [vmem:[%s324 + $0x1f8] sm:$0xff]
      %1845 = vmatpush.msra.mxu0 %v1841
      %1846 = vmatpush.msra.mxu0 %v1837
      %1847 = vmatpush.msra.mxu0 %v1833
      %1848 = vmatpush.msra.mxu0 %v1829
      %1849 = vmatpush.msra.mxu0 %v1825
      %1850 = vmatpush.msra.mxu0 %v1821
      %1851 = vmatpush.msra.mxu0 %v1817
      %1852 = vmatpush.msra.mxu0 %v1813
      %1853 = vmatpush.msra.mxu0 %v1809
      %1854 = vmatpush.msra.mxu0 %v1805
      %1855 = vmatpush.msra.mxu0 %v1801
      %1856 = vmatpush.msra.mxu0 %v1797
      %1857 = vmatpush.msra.mxu0 %v1793
      %1858 = vmatpush.msra.mxu0 %v1789
      %1859 = vmatpush.msra.mxu0 %v1785
      %1860 = vmatpush.msra.mxu0 %v1781
      %1861 = vmatmul.f32.gmra.mxu0 %v1773
      %v1862 = vpop.f32.mrf.mxu0
      %v1863 = vadd.f32 0.0, %v1862
      %1864 = vdwg.mxu0
      %1865 = vmatpush.msra.mxu0 %v1842
      %1866 = vmatpush.msra.mxu0 %v1838
      %1867 = vmatpush.msra.mxu0 %v1834
      %1868 = vmatpush.msra.mxu0 %v1830
      %1869 = vmatpush.msra.mxu0 %v1826
      %1870 = vmatpush.msra.mxu0 %v1822
      %1871 = vmatpush.msra.mxu0 %v1818
      %1872 = vmatpush.msra.mxu0 %v1814
      %1873 = vmatpush.msra.mxu0 %v1810
      %1874 = vmatpush.msra.mxu0 %v1806
      %1875 = vmatpush.msra.mxu0 %v1802
      %1876 = vmatpush.msra.mxu0 %v1798
      %1877 = vmatpush.msra.mxu0 %v1794
      %1878 = vmatpush.msra.mxu0 %v1790
      %1879 = vmatpush.msra.mxu0 %v1786
      %1880 = vmatpush.msra.mxu0 %v1782
      %1881 = vmatmul.f32.gmra.mxu0 %v1773
      %v1882 = vpop.f32.mrf.mxu0
      %v1883 = vadd.f32 0.0, %v1882
      %1884 = vdwg.mxu0
      %1885 = vmatpush.msra.mxu0 %v1843
      %1886 = vmatpush.msra.mxu0 %v1839
      %1887 = vmatpush.msra.mxu0 %v1835
      %1888 = vmatpush.msra.mxu0 %v1831
      %1889 = vmatpush.msra.mxu0 %v1827
      %1890 = vmatpush.msra.mxu0 %v1823
      %1891 = vmatpush.msra.mxu0 %v1819
      %1892 = vmatpush.msra.mxu0 %v1815
      %1893 = vmatpush.msra.mxu0 %v1811
      %1894 = vmatpush.msra.mxu0 %v1807
      %1895 = vmatpush.msra.mxu0 %v1803
      %1896 = vmatpush.msra.mxu0 %v1799
      %1897 = vmatpush.msra.mxu0 %v1795
      %1898 = vmatpush.msra.mxu0 %v1791
      %1899 = vmatpush.msra.mxu0 %v1787
      %1900 = vmatpush.msra.mxu0 %v1783
      %1901 = vmatmul.f32.gmra.mxu0 %v1773
      %v1902 = vpop.f32.mrf.mxu0
      %v1903 = vadd.f32 0.0, %v1902
      %1904 = vdwg.mxu0
      %1905 = vmatpush.msra.mxu0 %v1844
      %1906 = vmatpush.msra.mxu0 %v1840
      %1907 = vmatpush.msra.mxu0 %v1836
      %1908 = vmatpush.msra.mxu0 %v1832
      %1909 = vmatpush.msra.mxu0 %v1828
      %1910 = vmatpush.msra.mxu0 %v1824
      %1911 = vmatpush.msra.mxu0 %v1820
      %1912 = vmatpush.msra.mxu0 %v1816
      %1913 = vmatpush.msra.mxu0 %v1812
      %1914 = vmatpush.msra.mxu0 %v1808
      %1915 = vmatpush.msra.mxu0 %v1804
      %1916 = vmatpush.msra.mxu0 %v1800
      %1917 = vmatpush.msra.mxu0 %v1796
      %1918 = vmatpush.msra.mxu0 %v1792
      %1919 = vmatpush.msra.mxu0 %v1788
      %1920 = vmatpush.msra.mxu0 %v1784
      %1921 = vmatmul.f32.gmra.mxu0 %v1773
      %v1922 = vpop.f32.mrf.mxu0
      %v1923 = vadd.f32 0.0, %v1922
      %1924 = vdwg.mxu0
      %v1925 = vadd.f32 %v1777, %v1863
      %v1926 = vadd.f32 %v1778, %v1883
      %v1927 = vadd.f32 %v1779, %v1903
      %v1928 = vadd.f32 %v1780, %v1923
      %v1929 = vxor.u32 %v1925, 2147483648
      %v1930 = vmul.f32 %v1929, 1.442695
      %v1931 = vpow.pop %v1930
      %v1932 = vadd.f32 %v1931, 1.0
      %v1933 = vrcp.pop %v1932
      %v1934 = vmul.f32 %v1932, %v1933
      %v1935 = vsub.f32 1.0, %v1934
      %v1936 = vmul.f32 %v1933, %v1935
      %v1937 = vadd.f32 %v1933, %v1936
      %vm1938 = vweird.f32 %v1932
      %vm1939 = vweird.f32 %v1933
      %vm1940 = vmor %vm1938, %vm1939
      %v1941 = vsel %vm1940, %v1933, %v1937
      %v1942 = vand.u32 2147483647, %v1932
      %vm1943 = vcmp.eq.f32.partialorder %v1942, 8.507059e+37
      %v1944 = vand.u32 %v1932, 2147483648
      %v1945 = vor.u32 1.1754944e-38, %v1944
      %v1946 = vsel %vm1943, %v1945, %v1941
      %v1947 = vmul.f32 1.0, %v1946
      %v1948 = vxor.u32 %v1926, 2147483648
      %v1949 = vmul.f32 %v1948, 1.442695
      %v1950 = vpow.pop %v1949
      %v1951 = vadd.f32 %v1950, 1.0
      %v1952 = vrcp.pop %v1951
      %v1953 = vmul.f32 %v1951, %v1952
      %v1954 = vsub.f32 1.0, %v1953
      %v1955 = vmul.f32 %v1952, %v1954
      %v1956 = vadd.f32 %v1952, %v1955
      %vm1957 = vweird.f32 %v1951
      %vm1958 = vweird.f32 %v1952
      %vm1959 = vmor %vm1957, %vm1958
      %v1960 = vsel %vm1959, %v1952, %v1956
      %v1961 = vand.u32 2147483647, %v1951
      %vm1962 = vcmp.eq.f32.partialorder %v1961, 8.507059e+37
      %v1963 = vand.u32 %v1951, 2147483648
      %v1964 = vor.u32 1.1754944e-38, %v1963
      %v1965 = vsel %vm1962, %v1964, %v1960
      %v1966 = vmul.f32 1.0, %v1965
      %v1967 = vtanh.pop %v1927
      %v1968 = vxor.u32 %v1928, 2147483648
      %v1969 = vmul.f32 %v1968, 1.442695
      %v1970 = vpow.pop %v1969
      %v1971 = vadd.f32 %v1970, 1.0
      %v1972 = vrcp.pop %v1971
      %v1973 = vmul.f32 %v1971, %v1972
      %v1974 = vsub.f32 1.0, %v1973
      %v1975 = vmul.f32 %v1972, %v1974
      %v1976 = vadd.f32 %v1972, %v1975
      %vm1977 = vweird.f32 %v1971
      %vm1978 = vweird.f32 %v1972
      %vm1979 = vmor %vm1977, %vm1978
      %v1980 = vsel %vm1979, %v1972, %v1976
      %v1981 = vand.u32 2147483647, %v1971
      %vm1982 = vcmp.eq.f32.partialorder %v1981, 8.507059e+37
      %v1983 = vand.u32 %v1971, 2147483648
      %v1984 = vor.u32 1.1754944e-38, %v1983
      %v1985 = vsel %vm1982, %v1984, %v1980
      %v1986 = vmul.f32 1.0, %v1985
      %v1987 = vmul.f32 %v1966, %v1771
      %v1988 = vmul.f32 %v1947, %v1967
      %v1989 = vadd.f32 %v1987, %v1988
      %v1990 = vtanh.pop %v1989
      %v1991 = vmul.f32 %v1986, %v1990
      %s1992 = scalar_lea.vmem [#allocation2], 32
      %1993 = vst [vmem:[%s1992] sm:$0xff] %v1991
      %s1994 = scalar_lea.vmem [#allocation3], 160
      %v1995 = vld [vmem:[%s1994] sm:$0xff]
      %v1996 = vld [vmem:[%s1994 + $0x8] sm:$0xff]
      %v1997 = vld [vmem:[%s1994 + $0x10] sm:$0xff]
      %v1998 = vld [vmem:[%s1994 + $0x18] sm:$0xff]
      %v1999 = vld [vmem:[%s324] sm:$0xff]
      %v2000 = vld [vmem:[%s324 + $0x8] sm:$0xff]
      %v2001 = vld [vmem:[%s324 + $0x10] sm:$0xff]
      %v2002 = vld [vmem:[%s324 + $0x18] sm:$0xff]
      %v2003 = vld [vmem:[%s324 + $0x20] sm:$0xff]
      %v2004 = vld [vmem:[%s324 + $0x28] sm:$0xff]
      %v2005 = vld [vmem:[%s324 + $0x30] sm:$0xff]
      %v2006 = vld [vmem:[%s324 + $0x38] sm:$0xff]
      %v2007 = vld [vmem:[%s324 + $0x40] sm:$0xff]
      %v2008 = vld [vmem:[%s324 + $0x48] sm:$0xff]
      %v2009 = vld [vmem:[%s324 + $0x50] sm:$0xff]
      %v2010 = vld [vmem:[%s324 + $0x58] sm:$0xff]
      %v2011 = vld [vmem:[%s324 + $0x60] sm:$0xff]
      %v2012 = vld [vmem:[%s324 + $0x68] sm:$0xff]
      %v2013 = vld [vmem:[%s324 + $0x70] sm:$0xff]
      %v2014 = vld [vmem:[%s324 + $0x78] sm:$0xff]
      %v2015 = vld [vmem:[%s324 + $0x80] sm:$0xff]
      %v2016 = vld [vmem:[%s324 + $0x88] sm:$0xff]
      %v2017 = vld [vmem:[%s324 + $0x90] sm:$0xff]
      %v2018 = vld [vmem:[%s324 + $0x98] sm:$0xff]
      %v2019 = vld [vmem:[%s324 + $0xa0] sm:$0xff]
      %v2020 = vld [vmem:[%s324 + $0xa8] sm:$0xff]
      %v2021 = vld [vmem:[%s324 + $0xb0] sm:$0xff]
      %v2022 = vld [vmem:[%s324 + $0xb8] sm:$0xff]
      %v2023 = vld [vmem:[%s324 + $0xc0] sm:$0xff]
      %v2024 = vld [vmem:[%s324 + $0xc8] sm:$0xff]
      %v2025 = vld [vmem:[%s324 + $0xd0] sm:$0xff]
      %v2026 = vld [vmem:[%s324 + $0xd8] sm:$0xff]
      %v2027 = vld [vmem:[%s324 + $0xe0] sm:$0xff]
      %v2028 = vld [vmem:[%s324 + $0xe8] sm:$0xff]
      %v2029 = vld [vmem:[%s324 + $0xf0] sm:$0xff]
      %v2030 = vld [vmem:[%s324 + $0xf8] sm:$0xff]
      %v2031 = vld [vmem:[%s324 + $0x100] sm:$0xff]
      %v2032 = vld [vmem:[%s324 + $0x108] sm:$0xff]
      %v2033 = vld [vmem:[%s324 + $0x110] sm:$0xff]
      %v2034 = vld [vmem:[%s324 + $0x118] sm:$0xff]
      %v2035 = vld [vmem:[%s324 + $0x120] sm:$0xff]
      %v2036 = vld [vmem:[%s324 + $0x128] sm:$0xff]
      %v2037 = vld [vmem:[%s324 + $0x130] sm:$0xff]
      %v2038 = vld [vmem:[%s324 + $0x138] sm:$0xff]
      %v2039 = vld [vmem:[%s324 + $0x140] sm:$0xff]
      %v2040 = vld [vmem:[%s324 + $0x148] sm:$0xff]
      %v2041 = vld [vmem:[%s324 + $0x150] sm:$0xff]
      %v2042 = vld [vmem:[%s324 + $0x158] sm:$0xff]
      %v2043 = vld [vmem:[%s324 + $0x160] sm:$0xff]
      %v2044 = vld [vmem:[%s324 + $0x168] sm:$0xff]
      %v2045 = vld [vmem:[%s324 + $0x170] sm:$0xff]
      %v2046 = vld [vmem:[%s324 + $0x178] sm:$0xff]
      %v2047 = vld [vmem:[%s324 + $0x180] sm:$0xff]
      %v2048 = vld [vmem:[%s324 + $0x188] sm:$0xff]
      %v2049 = vld [vmem:[%s324 + $0x190] sm:$0xff]
      %v2050 = vld [vmem:[%s324 + $0x198] sm:$0xff]
      %v2051 = vld [vmem:[%s324 + $0x1a0] sm:$0xff]
      %v2052 = vld [vmem:[%s324 + $0x1a8] sm:$0xff]
      %v2053 = vld [vmem:[%s324 + $0x1b0] sm:$0xff]
      %v2054 = vld [vmem:[%s324 + $0x1b8] sm:$0xff]
      %v2055 = vld [vmem:[%s324 + $0x1c0] sm:$0xff]
      %v2056 = vld [vmem:[%s324 + $0x1c8] sm:$0xff]
      %v2057 = vld [vmem:[%s324 + $0x1d0] sm:$0xff]
      %v2058 = vld [vmem:[%s324 + $0x1d8] sm:$0xff]
      %v2059 = vld [vmem:[%s324 + $0x1e0] sm:$0xff]
      %v2060 = vld [vmem:[%s324 + $0x1e8] sm:$0xff]
      %v2061 = vld [vmem:[%s324 + $0x1f0] sm:$0xff]
      %v2062 = vld [vmem:[%s324 + $0x1f8] sm:$0xff]
      %2063 = vmatpush.msra.mxu0 %v2059
      %2064 = vmatpush.msra.mxu0 %v2055
      %2065 = vmatpush.msra.mxu0 %v2051
      %2066 = vmatpush.msra.mxu0 %v2047
      %2067 = vmatpush.msra.mxu0 %v2043
      %2068 = vmatpush.msra.mxu0 %v2039
      %2069 = vmatpush.msra.mxu0 %v2035
      %2070 = vmatpush.msra.mxu0 %v2031
      %2071 = vmatpush.msra.mxu0 %v2027
      %2072 = vmatpush.msra.mxu0 %v2023
      %2073 = vmatpush.msra.mxu0 %v2019
      %2074 = vmatpush.msra.mxu0 %v2015
      %2075 = vmatpush.msra.mxu0 %v2011
      %2076 = vmatpush.msra.mxu0 %v2007
      %2077 = vmatpush.msra.mxu0 %v2003
      %2078 = vmatpush.msra.mxu0 %v1999
      %2079 = vmatmul.f32.gmra.mxu0 %v1991
      %v2080 = vpop.f32.mrf.mxu0
      %v2081 = vadd.f32 0.0, %v2080
      %2082 = vdwg.mxu0
      %2083 = vmatpush.msra.mxu0 %v2060
      %2084 = vmatpush.msra.mxu0 %v2056
      %2085 = vmatpush.msra.mxu0 %v2052
      %2086 = vmatpush.msra.mxu0 %v2048
      %2087 = vmatpush.msra.mxu0 %v2044
      %2088 = vmatpush.msra.mxu0 %v2040
      %2089 = vmatpush.msra.mxu0 %v2036
      %2090 = vmatpush.msra.mxu0 %v2032
      %2091 = vmatpush.msra.mxu0 %v2028
      %2092 = vmatpush.msra.mxu0 %v2024
      %2093 = vmatpush.msra.mxu0 %v2020
      %2094 = vmatpush.msra.mxu0 %v2016
      %2095 = vmatpush.msra.mxu0 %v2012
      %2096 = vmatpush.msra.mxu0 %v2008
      %2097 = vmatpush.msra.mxu0 %v2004
      %2098 = vmatpush.msra.mxu0 %v2000
      %2099 = vmatmul.f32.gmra.mxu0 %v1991
      %v2100 = vpop.f32.mrf.mxu0
      %v2101 = vadd.f32 0.0, %v2100
      %2102 = vdwg.mxu0
      %2103 = vmatpush.msra.mxu0 %v2061
      %2104 = vmatpush.msra.mxu0 %v2057
      %2105 = vmatpush.msra.mxu0 %v2053
      %2106 = vmatpush.msra.mxu0 %v2049
      %2107 = vmatpush.msra.mxu0 %v2045
      %2108 = vmatpush.msra.mxu0 %v2041
      %2109 = vmatpush.msra.mxu0 %v2037
      %2110 = vmatpush.msra.mxu0 %v2033
      %2111 = vmatpush.msra.mxu0 %v2029
      %2112 = vmatpush.msra.mxu0 %v2025
      %2113 = vmatpush.msra.mxu0 %v2021
      %2114 = vmatpush.msra.mxu0 %v2017
      %2115 = vmatpush.msra.mxu0 %v2013
      %2116 = vmatpush.msra.mxu0 %v2009
      %2117 = vmatpush.msra.mxu0 %v2005
      %2118 = vmatpush.msra.mxu0 %v2001
      %2119 = vmatmul.f32.gmra.mxu0 %v1991
      %v2120 = vpop.f32.mrf.mxu0
      %v2121 = vadd.f32 0.0, %v2120
      %2122 = vdwg.mxu0
      %2123 = vmatpush.msra.mxu0 %v2062
      %2124 = vmatpush.msra.mxu0 %v2058
      %2125 = vmatpush.msra.mxu0 %v2054
      %2126 = vmatpush.msra.mxu0 %v2050
      %2127 = vmatpush.msra.mxu0 %v2046
      %2128 = vmatpush.msra.mxu0 %v2042
      %2129 = vmatpush.msra.mxu0 %v2038
      %2130 = vmatpush.msra.mxu0 %v2034
      %2131 = vmatpush.msra.mxu0 %v2030
      %2132 = vmatpush.msra.mxu0 %v2026
      %2133 = vmatpush.msra.mxu0 %v2022
      %2134 = vmatpush.msra.mxu0 %v2018
      %2135 = vmatpush.msra.mxu0 %v2014
      %2136 = vmatpush.msra.mxu0 %v2010
      %2137 = vmatpush.msra.mxu0 %v2006
      %2138 = vmatpush.msra.mxu0 %v2002
      %2139 = vmatmul.f32.gmra.mxu0 %v1991
      %v2140 = vpop.f32.mrf.mxu0
      %v2141 = vadd.f32 0.0, %v2140
      %2142 = vdwg.mxu0
      %v2143 = vadd.f32 %v1995, %v2081
      %v2144 = vadd.f32 %v1996, %v2101
      %v2145 = vadd.f32 %v1997, %v2121
      %v2146 = vadd.f32 %v1998, %v2141
      %v2147 = vxor.u32 %v2143, 2147483648
      %v2148 = vmul.f32 %v2147, 1.442695
      %v2149 = vpow.pop %v2148
      %v2150 = vadd.f32 %v2149, 1.0
      %v2151 = vrcp.pop %v2150
      %v2152 = vmul.f32 %v2150, %v2151
      %v2153 = vsub.f32 1.0, %v2152
      %v2154 = vmul.f32 %v2151, %v2153
      %v2155 = vadd.f32 %v2151, %v2154
      %vm2156 = vweird.f32 %v2150
      %vm2157 = vweird.f32 %v2151
      %vm2158 = vmor %vm2156, %vm2157
      %v2159 = vsel %vm2158, %v2151, %v2155
      %v2160 = vand.u32 2147483647, %v2150
      %vm2161 = vcmp.eq.f32.partialorder %v2160, 8.507059e+37
      %v2162 = vand.u32 %v2150, 2147483648
      %v2163 = vor.u32 1.1754944e-38, %v2162
      %v2164 = vsel %vm2161, %v2163, %v2159
      %v2165 = vmul.f32 1.0, %v2164
      %v2166 = vxor.u32 %v2144, 2147483648
      %v2167 = vmul.f32 %v2166, 1.442695
      %v2168 = vpow.pop %v2167
      %v2169 = vadd.f32 %v2168, 1.0
      %v2170 = vrcp.pop %v2169
      %v2171 = vmul.f32 %v2169, %v2170
      %v2172 = vsub.f32 1.0, %v2171
      %v2173 = vmul.f32 %v2170, %v2172
      %v2174 = vadd.f32 %v2170, %v2173
      %vm2175 = vweird.f32 %v2169
      %vm2176 = vweird.f32 %v2170
      %vm2177 = vmor %vm2175, %vm2176
      %v2178 = vsel %vm2177, %v2170, %v2174
      %v2179 = vand.u32 2147483647, %v2169
      %vm2180 = vcmp.eq.f32.partialorder %v2179, 8.507059e+37
      %v2181 = vand.u32 %v2169, 2147483648
      %v2182 = vor.u32 1.1754944e-38, %v2181
      %v2183 = vsel %vm2180, %v2182, %v2178
      %v2184 = vmul.f32 1.0, %v2183
      %v2185 = vtanh.pop %v2145
      %v2186 = vxor.u32 %v2146, 2147483648
      %v2187 = vmul.f32 %v2186, 1.442695
      %v2188 = vpow.pop %v2187
      %v2189 = vadd.f32 %v2188, 1.0
      %v2190 = vrcp.pop %v2189
      %v2191 = vmul.f32 %v2189, %v2190
      %v2192 = vsub.f32 1.0, %v2191
      %v2193 = vmul.f32 %v2190, %v2192
      %v2194 = vadd.f32 %v2190, %v2193
      %vm2195 = vweird.f32 %v2189
      %vm2196 = vweird.f32 %v2190
      %vm2197 = vmor %vm2195, %vm2196
      %v2198 = vsel %vm2197, %v2190, %v2194
      %v2199 = vand.u32 2147483647, %v2189
      %vm2200 = vcmp.eq.f32.partialorder %v2199, 8.507059e+37
      %v2201 = vand.u32 %v2189, 2147483648
      %v2202 = vor.u32 1.1754944e-38, %v2201
      %v2203 = vsel %vm2200, %v2202, %v2198
      %v2204 = vmul.f32 1.0, %v2203
      %v2205 = vmul.f32 %v2184, %v1989
      %v2206 = vmul.f32 %v2165, %v2185
      %v2207 = vadd.f32 %v2205, %v2206
      %v2208 = vtanh.pop %v2207
      %v2209 = vmul.f32 %v2204, %v2208
      %s2210 = scalar_lea.vmem [#allocation2], 40
      %2211 = vst [vmem:[%s2210] sm:$0xff] %v2209
      %s2212 = scalar_lea.vmem [#allocation3], 192
      %v2213 = vld [vmem:[%s2212] sm:$0xff]
      %v2214 = vld [vmem:[%s2212 + $0x8] sm:$0xff]
      %v2215 = vld [vmem:[%s2212 + $0x10] sm:$0xff]
      %v2216 = vld [vmem:[%s2212 + $0x18] sm:$0xff]
      %v2217 = vld [vmem:[%s324] sm:$0xff]
      %v2218 = vld [vmem:[%s324 + $0x8] sm:$0xff]
      %v2219 = vld [vmem:[%s324 + $0x10] sm:$0xff]
      %v2220 = vld [vmem:[%s324 + $0x18] sm:$0xff]
      %v2221 = vld [vmem:[%s324 + $0x20] sm:$0xff]
      %v2222 = vld [vmem:[%s324 + $0x28] sm:$0xff]
      %v2223 = vld [vmem:[%s324 + $0x30] sm:$0xff]
      %v2224 = vld [vmem:[%s324 + $0x38] sm:$0xff]
      %v2225 = vld [vmem:[%s324 + $0x40] sm:$0xff]
      %v2226 = vld [vmem:[%s324 + $0x48] sm:$0xff]
      %v2227 = vld [vmem:[%s324 + $0x50] sm:$0xff]
      %v2228 = vld [vmem:[%s324 + $0x58] sm:$0xff]
      %v2229 = vld [vmem:[%s324 + $0x60] sm:$0xff]
      %v2230 = vld [vmem:[%s324 + $0x68] sm:$0xff]
      %v2231 = vld [vmem:[%s324 + $0x70] sm:$0xff]
      %v2232 = vld [vmem:[%s324 + $0x78] sm:$0xff]
      %v2233 = vld [vmem:[%s324 + $0x80] sm:$0xff]
      %v2234 = vld [vmem:[%s324 + $0x88] sm:$0xff]
      %v2235 = vld [vmem:[%s324 + $0x90] sm:$0xff]
      %v2236 = vld [vmem:[%s324 + $0x98] sm:$0xff]
      %v2237 = vld [vmem:[%s324 + $0xa0] sm:$0xff]
      %v2238 = vld [vmem:[%s324 + $0xa8] sm:$0xff]
      %v2239 = vld [vmem:[%s324 + $0xb0] sm:$0xff]
      %v2240 = vld [vmem:[%s324 + $0xb8] sm:$0xff]
      %v2241 = vld [vmem:[%s324 + $0xc0] sm:$0xff]
      %v2242 = vld [vmem:[%s324 + $0xc8] sm:$0xff]
      %v2243 = vld [vmem:[%s324 + $0xd0] sm:$0xff]
      %v2244 = vld [vmem:[%s324 + $0xd8] sm:$0xff]
      %v2245 = vld [vmem:[%s324 + $0xe0] sm:$0xff]
      %v2246 = vld [vmem:[%s324 + $0xe8] sm:$0xff]
      %v2247 = vld [vmem:[%s324 + $0xf0] sm:$0xff]
      %v2248 = vld [vmem:[%s324 + $0xf8] sm:$0xff]
      %v2249 = vld [vmem:[%s324 + $0x100] sm:$0xff]
      %v2250 = vld [vmem:[%s324 + $0x108] sm:$0xff]
      %v2251 = vld [vmem:[%s324 + $0x110] sm:$0xff]
      %v2252 = vld [vmem:[%s324 + $0x118] sm:$0xff]
      %v2253 = vld [vmem:[%s324 + $0x120] sm:$0xff]
      %v2254 = vld [vmem:[%s324 + $0x128] sm:$0xff]
      %v2255 = vld [vmem:[%s324 + $0x130] sm:$0xff]
      %v2256 = vld [vmem:[%s324 + $0x138] sm:$0xff]
      %v2257 = vld [vmem:[%s324 + $0x140] sm:$0xff]
      %v2258 = vld [vmem:[%s324 + $0x148] sm:$0xff]
      %v2259 = vld [vmem:[%s324 + $0x150] sm:$0xff]
      %v2260 = vld [vmem:[%s324 + $0x158] sm:$0xff]
      %v2261 = vld [vmem:[%s324 + $0x160] sm:$0xff]
      %v2262 = vld [vmem:[%s324 + $0x168] sm:$0xff]
      %v2263 = vld [vmem:[%s324 + $0x170] sm:$0xff]
      %v2264 = vld [vmem:[%s324 + $0x178] sm:$0xff]
      %v2265 = vld [vmem:[%s324 + $0x180] sm:$0xff]
      %v2266 = vld [vmem:[%s324 + $0x188] sm:$0xff]
      %v2267 = vld [vmem:[%s324 + $0x190] sm:$0xff]
      %v2268 = vld [vmem:[%s324 + $0x198] sm:$0xff]
      %v2269 = vld [vmem:[%s324 + $0x1a0] sm:$0xff]
      %v2270 = vld [vmem:[%s324 + $0x1a8] sm:$0xff]
      %v2271 = vld [vmem:[%s324 + $0x1b0] sm:$0xff]
      %v2272 = vld [vmem:[%s324 + $0x1b8] sm:$0xff]
      %v2273 = vld [vmem:[%s324 + $0x1c0] sm:$0xff]
      %v2274 = vld [vmem:[%s324 + $0x1c8] sm:$0xff]
      %v2275 = vld [vmem:[%s324 + $0x1d0] sm:$0xff]
      %v2276 = vld [vmem:[%s324 + $0x1d8] sm:$0xff]
      %v2277 = vld [vmem:[%s324 + $0x1e0] sm:$0xff]
      %v2278 = vld [vmem:[%s324 + $0x1e8] sm:$0xff]
      %v2279 = vld [vmem:[%s324 + $0x1f0] sm:$0xff]
      %v2280 = vld [vmem:[%s324 + $0x1f8] sm:$0xff]
      %2281 = vmatpush.msra.mxu0 %v2277
      %2282 = vmatpush.msra.mxu0 %v2273
      %2283 = vmatpush.msra.mxu0 %v2269
      %2284 = vmatpush.msra.mxu0 %v2265
      %2285 = vmatpush.msra.mxu0 %v2261
      %2286 = vmatpush.msra.mxu0 %v2257
      %2287 = vmatpush.msra.mxu0 %v2253
      %2288 = vmatpush.msra.mxu0 %v2249
      %2289 = vmatpush.msra.mxu0 %v2245
      %2290 = vmatpush.msra.mxu0 %v2241
      %2291 = vmatpush.msra.mxu0 %v2237
      %2292 = vmatpush.msra.mxu0 %v2233
      %2293 = vmatpush.msra.mxu0 %v2229
      %2294 = vmatpush.msra.mxu0 %v2225
      %2295 = vmatpush.msra.mxu0 %v2221
      %2296 = vmatpush.msra.mxu0 %v2217
      %2297 = vmatmul.f32.gmra.mxu0 %v2209
      %v2298 = vpop.f32.mrf.mxu0
      %v2299 = vadd.f32 0.0, %v2298
      %2300 = vdwg.mxu0
      %2301 = vmatpush.msra.mxu0 %v2278
      %2302 = vmatpush.msra.mxu0 %v2274
      %2303 = vmatpush.msra.mxu0 %v2270
      %2304 = vmatpush.msra.mxu0 %v2266
      %2305 = vmatpush.msra.mxu0 %v2262
      %2306 = vmatpush.msra.mxu0 %v2258
      %2307 = vmatpush.msra.mxu0 %v2254
      %2308 = vmatpush.msra.mxu0 %v2250
      %2309 = vmatpush.msra.mxu0 %v2246
      %2310 = vmatpush.msra.mxu0 %v2242
      %2311 = vmatpush.msra.mxu0 %v2238
      %2312 = vmatpush.msra.mxu0 %v2234
      %2313 = vmatpush.msra.mxu0 %v2230
      %2314 = vmatpush.msra.mxu0 %v2226
      %2315 = vmatpush.msra.mxu0 %v2222
      %2316 = vmatpush.msra.mxu0 %v2218
      %2317 = vmatmul.f32.gmra.mxu0 %v2209
      %v2318 = vpop.f32.mrf.mxu0
      %v2319 = vadd.f32 0.0, %v2318
      %2320 = vdwg.mxu0
      %2321 = vmatpush.msra.mxu0 %v2279
      %2322 = vmatpush.msra.mxu0 %v2275
      %2323 = vmatpush.msra.mxu0 %v2271
      %2324 = vmatpush.msra.mxu0 %v2267
      %2325 = vmatpush.msra.mxu0 %v2263
      %2326 = vmatpush.msra.mxu0 %v2259
      %2327 = vmatpush.msra.mxu0 %v2255
      %2328 = vmatpush.msra.mxu0 %v2251
      %2329 = vmatpush.msra.mxu0 %v2247
      %2330 = vmatpush.msra.mxu0 %v2243
      %2331 = vmatpush.msra.mxu0 %v2239
      %2332 = vmatpush.msra.mxu0 %v2235
      %2333 = vmatpush.msra.mxu0 %v2231
      %2334 = vmatpush.msra.mxu0 %v2227
      %2335 = vmatpush.msra.mxu0 %v2223
      %2336 = vmatpush.msra.mxu0 %v2219
      %2337 = vmatmul.f32.gmra.mxu0 %v2209
      %v2338 = vpop.f32.mrf.mxu0
      %v2339 = vadd.f32 0.0, %v2338
      %2340 = vdwg.mxu0
      %2341 = vmatpush.msra.mxu0 %v2280
      %2342 = vmatpush.msra.mxu0 %v2276
      %2343 = vmatpush.msra.mxu0 %v2272
      %2344 = vmatpush.msra.mxu0 %v2268
      %2345 = vmatpush.msra.mxu0 %v2264
      %2346 = vmatpush.msra.mxu0 %v2260
      %2347 = vmatpush.msra.mxu0 %v2256
      %2348 = vmatpush.msra.mxu0 %v2252
      %2349 = vmatpush.msra.mxu0 %v2248
      %2350 = vmatpush.msra.mxu0 %v2244
      %2351 = vmatpush.msra.mxu0 %v2240
      %2352 = vmatpush.msra.mxu0 %v2236
      %2353 = vmatpush.msra.mxu0 %v2232
      %2354 = vmatpush.msra.mxu0 %v2228
      %2355 = vmatpush.msra.mxu0 %v2224
      %2356 = vmatpush.msra.mxu0 %v2220
      %2357 = vmatmul.f32.gmra.mxu0 %v2209
      %v2358 = vpop.f32.mrf.mxu0
      %v2359 = vadd.f32 0.0, %v2358
      %2360 = vdwg.mxu0
      %v2361 = vadd.f32 %v2213, %v2299
      %v2362 = vadd.f32 %v2214, %v2319
      %v2363 = vadd.f32 %v2215, %v2339
      %v2364 = vadd.f32 %v2216, %v2359
      %v2365 = vxor.u32 %v2361, 2147483648
      %v2366 = vmul.f32 %v2365, 1.442695
      %v2367 = vpow.pop %v2366
      %v2368 = vadd.f32 %v2367, 1.0
      %v2369 = vrcp.pop %v2368
      %v2370 = vmul.f32 %v2368, %v2369
      %v2371 = vsub.f32 1.0, %v2370
      %v2372 = vmul.f32 %v2369, %v2371
      %v2373 = vadd.f32 %v2369, %v2372
      %vm2374 = vweird.f32 %v2368
      %vm2375 = vweird.f32 %v2369
      %vm2376 = vmor %vm2374, %vm2375
      %v2377 = vsel %vm2376, %v2369, %v2373
      %v2378 = vand.u32 2147483647, %v2368
      %vm2379 = vcmp.eq.f32.partialorder %v2378, 8.507059e+37
      %v2380 = vand.u32 %v2368, 2147483648
      %v2381 = vor.u32 1.1754944e-38, %v2380
      %v2382 = vsel %vm2379, %v2381, %v2377
      %v2383 = vmul.f32 1.0, %v2382
      %v2384 = vxor.u32 %v2362, 2147483648
      %v2385 = vmul.f32 %v2384, 1.442695
      %v2386 = vpow.pop %v2385
      %v2387 = vadd.f32 %v2386, 1.0
      %v2388 = vrcp.pop %v2387
      %v2389 = vmul.f32 %v2387, %v2388
      %v2390 = vsub.f32 1.0, %v2389
      %v2391 = vmul.f32 %v2388, %v2390
      %v2392 = vadd.f32 %v2388, %v2391
      %vm2393 = vweird.f32 %v2387
      %vm2394 = vweird.f32 %v2388
      %vm2395 = vmor %vm2393, %vm2394
      %v2396 = vsel %vm2395, %v2388, %v2392
      %v2397 = vand.u32 2147483647, %v2387
      %vm2398 = vcmp.eq.f32.partialorder %v2397, 8.507059e+37
      %v2399 = vand.u32 %v2387, 2147483648
      %v2400 = vor.u32 1.1754944e-38, %v2399
      %v2401 = vsel %vm2398, %v2400, %v2396
      %v2402 = vmul.f32 1.0, %v2401
      %v2403 = vtanh.pop %v2363
      %v2404 = vxor.u32 %v2364, 2147483648
      %v2405 = vmul.f32 %v2404, 1.442695
      %v2406 = vpow.pop %v2405
      %v2407 = vadd.f32 %v2406, 1.0
      %v2408 = vrcp.pop %v2407
      %v2409 = vmul.f32 %v2407, %v2408
      %v2410 = vsub.f32 1.0, %v2409
      %v2411 = vmul.f32 %v2408, %v2410
      %v2412 = vadd.f32 %v2408, %v2411
      %vm2413 = vweird.f32 %v2407
      %vm2414 = vweird.f32 %v2408
      %vm2415 = vmor %vm2413, %vm2414
      %v2416 = vsel %vm2415, %v2408, %v2412
      %v2417 = vand.u32 2147483647, %v2407
      %vm2418 = vcmp.eq.f32.partialorder %v2417, 8.507059e+37
      %v2419 = vand.u32 %v2407, 2147483648
      %v2420 = vor.u32 1.1754944e-38, %v2419
      %v2421 = vsel %vm2418, %v2420, %v2416
      %v2422 = vmul.f32 1.0, %v2421
      %v2423 = vmul.f32 %v2402, %v2207
      %v2424 = vmul.f32 %v2383, %v2403
      %v2425 = vadd.f32 %v2423, %v2424
      %v2426 = vtanh.pop %v2425
      %v2427 = vmul.f32 %v2422, %v2426
      %s2428 = scalar_lea.vmem [#allocation2], 48
      %2429 = vst [vmem:[%s2428] sm:$0xff] %v2427
      %s2430 = scalar_lea.vmem [#allocation3], 224
      %v2431 = vld [vmem:[%s2430] sm:$0xff]
      %v2432 = vld [vmem:[%s2430 + $0x8] sm:$0xff]
      %v2433 = vld [vmem:[%s2430 + $0x10] sm:$0xff]
      %v2434 = vld [vmem:[%s2430 + $0x18] sm:$0xff]
      %v2435 = vld [vmem:[%s324] sm:$0xff]
      %v2436 = vld [vmem:[%s324 + $0x8] sm:$0xff]
      %v2437 = vld [vmem:[%s324 + $0x10] sm:$0xff]
      %v2438 = vld [vmem:[%s324 + $0x18] sm:$0xff]
      %v2439 = vld [vmem:[%s324 + $0x20] sm:$0xff]
      %v2440 = vld [vmem:[%s324 + $0x28] sm:$0xff]
      %v2441 = vld [vmem:[%s324 + $0x30] sm:$0xff]
      %v2442 = vld [vmem:[%s324 + $0x38] sm:$0xff]
      %v2443 = vld [vmem:[%s324 + $0x40] sm:$0xff]
      %v2444 = vld [vmem:[%s324 + $0x48] sm:$0xff]
      %v2445 = vld [vmem:[%s324 + $0x50] sm:$0xff]
      %v2446 = vld [vmem:[%s324 + $0x58] sm:$0xff]
      %v2447 = vld [vmem:[%s324 + $0x60] sm:$0xff]
      %v2448 = vld [vmem:[%s324 + $0x68] sm:$0xff]
      %v2449 = vld [vmem:[%s324 + $0x70] sm:$0xff]
      %v2450 = vld [vmem:[%s324 + $0x78] sm:$0xff]
      %v2451 = vld [vmem:[%s324 + $0x80] sm:$0xff]
      %v2452 = vld [vmem:[%s324 + $0x88] sm:$0xff]
      %v2453 = vld [vmem:[%s324 + $0x90] sm:$0xff]
      %v2454 = vld [vmem:[%s324 + $0x98] sm:$0xff]
      %v2455 = vld [vmem:[%s324 + $0xa0] sm:$0xff]
      %v2456 = vld [vmem:[%s324 + $0xa8] sm:$0xff]
      %v2457 = vld [vmem:[%s324 + $0xb0] sm:$0xff]
      %v2458 = vld [vmem:[%s324 + $0xb8] sm:$0xff]
      %v2459 = vld [vmem:[%s324 + $0xc0] sm:$0xff]
      %v2460 = vld [vmem:[%s324 + $0xc8] sm:$0xff]
      %v2461 = vld [vmem:[%s324 + $0xd0] sm:$0xff]
      %v2462 = vld [vmem:[%s324 + $0xd8] sm:$0xff]
      %v2463 = vld [vmem:[%s324 + $0xe0] sm:$0xff]
      %v2464 = vld [vmem:[%s324 + $0xe8] sm:$0xff]
      %v2465 = vld [vmem:[%s324 + $0xf0] sm:$0xff]
      %v2466 = vld [vmem:[%s324 + $0xf8] sm:$0xff]
      %v2467 = vld [vmem:[%s324 + $0x100] sm:$0xff]
      %v2468 = vld [vmem:[%s324 + $0x108] sm:$0xff]
      %v2469 = vld [vmem:[%s324 + $0x110] sm:$0xff]
      %v2470 = vld [vmem:[%s324 + $0x118] sm:$0xff]
      %v2471 = vld [vmem:[%s324 + $0x120] sm:$0xff]
      %v2472 = vld [vmem:[%s324 + $0x128] sm:$0xff]
      %v2473 = vld [vmem:[%s324 + $0x130] sm:$0xff]
      %v2474 = vld [vmem:[%s324 + $0x138] sm:$0xff]
      %v2475 = vld [vmem:[%s324 + $0x140] sm:$0xff]
      %v2476 = vld [vmem:[%s324 + $0x148] sm:$0xff]
      %v2477 = vld [vmem:[%s324 + $0x150] sm:$0xff]
      %v2478 = vld [vmem:[%s324 + $0x158] sm:$0xff]
      %v2479 = vld [vmem:[%s324 + $0x160] sm:$0xff]
      %v2480 = vld [vmem:[%s324 + $0x168] sm:$0xff]
      %v2481 = vld [vmem:[%s324 + $0x170] sm:$0xff]
      %v2482 = vld [vmem:[%s324 + $0x178] sm:$0xff]
      %v2483 = vld [vmem:[%s324 + $0x180] sm:$0xff]
      %v2484 = vld [vmem:[%s324 + $0x188] sm:$0xff]
      %v2485 = vld [vmem:[%s324 + $0x190] sm:$0xff]
      %v2486 = vld [vmem:[%s324 + $0x198] sm:$0xff]
      %v2487 = vld [vmem:[%s324 + $0x1a0] sm:$0xff]
      %v2488 = vld [vmem:[%s324 + $0x1a8] sm:$0xff]
      %v2489 = vld [vmem:[%s324 + $0x1b0] sm:$0xff]
      %v2490 = vld [vmem:[%s324 + $0x1b8] sm:$0xff]
      %v2491 = vld [vmem:[%s324 + $0x1c0] sm:$0xff]
      %v2492 = vld [vmem:[%s324 + $0x1c8] sm:$0xff]
      %v2493 = vld [vmem:[%s324 + $0x1d0] sm:$0xff]
      %v2494 = vld [vmem:[%s324 + $0x1d8] sm:$0xff]
      %v2495 = vld [vmem:[%s324 + $0x1e0] sm:$0xff]
      %v2496 = vld [vmem:[%s324 + $0x1e8] sm:$0xff]
      %v2497 = vld [vmem:[%s324 + $0x1f0] sm:$0xff]
      %v2498 = vld [vmem:[%s324 + $0x1f8] sm:$0xff]
      %2499 = vmatpush.msra.mxu0 %v2495
      %2500 = vmatpush.msra.mxu0 %v2491
      %2501 = vmatpush.msra.mxu0 %v2487
      %2502 = vmatpush.msra.mxu0 %v2483
      %2503 = vmatpush.msra.mxu0 %v2479
      %2504 = vmatpush.msra.mxu0 %v2475
      %2505 = vmatpush.msra.mxu0 %v2471
      %2506 = vmatpush.msra.mxu0 %v2467
      %2507 = vmatpush.msra.mxu0 %v2463
      %2508 = vmatpush.msra.mxu0 %v2459
      %2509 = vmatpush.msra.mxu0 %v2455
      %2510 = vmatpush.msra.mxu0 %v2451
      %2511 = vmatpush.msra.mxu0 %v2447
      %2512 = vmatpush.msra.mxu0 %v2443
      %2513 = vmatpush.msra.mxu0 %v2439
      %2514 = vmatpush.msra.mxu0 %v2435
      %2515 = vmatmul.f32.gmra.mxu0 %v2427
      %v2516 = vpop.f32.mrf.mxu0
      %v2517 = vadd.f32 0.0, %v2516
      %2518 = vdwg.mxu0
      %2519 = vmatpush.msra.mxu0 %v2496
      %2520 = vmatpush.msra.mxu0 %v2492
      %2521 = vmatpush.msra.mxu0 %v2488
      %2522 = vmatpush.msra.mxu0 %v2484
      %2523 = vmatpush.msra.mxu0 %v2480
      %2524 = vmatpush.msra.mxu0 %v2476
      %2525 = vmatpush.msra.mxu0 %v2472
      %2526 = vmatpush.msra.mxu0 %v2468
      %2527 = vmatpush.msra.mxu0 %v2464
      %2528 = vmatpush.msra.mxu0 %v2460
      %2529 = vmatpush.msra.mxu0 %v2456
      %2530 = vmatpush.msra.mxu0 %v2452
      %2531 = vmatpush.msra.mxu0 %v2448
      %2532 = vmatpush.msra.mxu0 %v2444
      %2533 = vmatpush.msra.mxu0 %v2440
      %2534 = vmatpush.msra.mxu0 %v2436
      %2535 = vmatmul.f32.gmra.mxu0 %v2427
      %v2536 = vpop.f32.mrf.mxu0
      %v2537 = vadd.f32 0.0, %v2536
      %2538 = vdwg.mxu0
      %2539 = vmatpush.msra.mxu0 %v2497
      %2540 = vmatpush.msra.mxu0 %v2493
      %2541 = vmatpush.msra.mxu0 %v2489
      %2542 = vmatpush.msra.mxu0 %v2485
      %2543 = vmatpush.msra.mxu0 %v2481
      %2544 = vmatpush.msra.mxu0 %v2477
      %2545 = vmatpush.msra.mxu0 %v2473
      %2546 = vmatpush.msra.mxu0 %v2469
      %2547 = vmatpush.msra.mxu0 %v2465
      %2548 = vmatpush.msra.mxu0 %v2461
      %2549 = vmatpush.msra.mxu0 %v2457
      %2550 = vmatpush.msra.mxu0 %v2453
      %2551 = vmatpush.msra.mxu0 %v2449
      %2552 = vmatpush.msra.mxu0 %v2445
      %2553 = vmatpush.msra.mxu0 %v2441
      %2554 = vmatpush.msra.mxu0 %v2437
      %2555 = vmatmul.f32.gmra.mxu0 %v2427
      %v2556 = vpop.f32.mrf.mxu0
      %v2557 = vadd.f32 0.0, %v2556
      %2558 = vdwg.mxu0
      %2559 = vmatpush.msra.mxu0 %v2498
      %2560 = vmatpush.msra.mxu0 %v2494
      %2561 = vmatpush.msra.mxu0 %v2490
      %2562 = vmatpush.msra.mxu0 %v2486
      %2563 = vmatpush.msra.mxu0 %v2482
      %2564 = vmatpush.msra.mxu0 %v2478
      %2565 = vmatpush.msra.mxu0 %v2474
      %2566 = vmatpush.msra.mxu0 %v2470
      %2567 = vmatpush.msra.mxu0 %v2466
      %2568 = vmatpush.msra.mxu0 %v2462
      %2569 = vmatpush.msra.mxu0 %v2458
      %2570 = vmatpush.msra.mxu0 %v2454
      %2571 = vmatpush.msra.mxu0 %v2450
      %2572 = vmatpush.msra.mxu0 %v2446
      %2573 = vmatpush.msra.mxu0 %v2442
      %2574 = vmatpush.msra.mxu0 %v2438
      %2575 = vmatmul.f32.gmra.mxu0 %v2427
      %v2576 = vpop.f32.mrf.mxu0
      %v2577 = vadd.f32 0.0, %v2576
      %2578 = vdwg.mxu0
      %v2579 = vadd.f32 %v2431, %v2517
      %v2580 = vadd.f32 %v2432, %v2537
      %v2581 = vadd.f32 %v2433, %v2557
      %v2582 = vadd.f32 %v2434, %v2577
      %v2583 = vxor.u32 %v2579, 2147483648
      %v2584 = vmul.f32 %v2583, 1.442695
      %v2585 = vpow.pop %v2584
      %v2586 = vadd.f32 %v2585, 1.0
      %v2587 = vrcp.pop %v2586
      %v2588 = vmul.f32 %v2586, %v2587
      %v2589 = vsub.f32 1.0, %v2588
      %v2590 = vmul.f32 %v2587, %v2589
      %v2591 = vadd.f32 %v2587, %v2590
      %vm2592 = vweird.f32 %v2586
      %vm2593 = vweird.f32 %v2587
      %vm2594 = vmor %vm2592, %vm2593
      %v2595 = vsel %vm2594, %v2587, %v2591
      %v2596 = vand.u32 2147483647, %v2586
      %vm2597 = vcmp.eq.f32.partialorder %v2596, 8.507059e+37
      %v2598 = vand.u32 %v2586, 2147483648
      %v2599 = vor.u32 1.1754944e-38, %v2598
      %v2600 = vsel %vm2597, %v2599, %v2595
      %v2601 = vmul.f32 1.0, %v2600
      %v2602 = vxor.u32 %v2580, 2147483648
      %v2603 = vmul.f32 %v2602, 1.442695
      %v2604 = vpow.pop %v2603
      %v2605 = vadd.f32 %v2604, 1.0
      %v2606 = vrcp.pop %v2605
      %v2607 = vmul.f32 %v2605, %v2606
      %v2608 = vsub.f32 1.0, %v2607
      %v2609 = vmul.f32 %v2606, %v2608
      %v2610 = vadd.f32 %v2606, %v2609
      %vm2611 = vweird.f32 %v2605
      %vm2612 = vweird.f32 %v2606
      %vm2613 = vmor %vm2611, %vm2612
      %v2614 = vsel %vm2613, %v2606, %v2610
      %v2615 = vand.u32 2147483647, %v2605
      %vm2616 = vcmp.eq.f32.partialorder %v2615, 8.507059e+37
      %v2617 = vand.u32 %v2605, 2147483648
      %v2618 = vor.u32 1.1754944e-38, %v2617
      %v2619 = vsel %vm2616, %v2618, %v2614
      %v2620 = vmul.f32 1.0, %v2619
      %v2621 = vtanh.pop %v2581
      %v2622 = vxor.u32 %v2582, 2147483648
      %v2623 = vmul.f32 %v2622, 1.442695
      %v2624 = vpow.pop %v2623
      %v2625 = vadd.f32 %v2624, 1.0
      %v2626 = vrcp.pop %v2625
      %v2627 = vmul.f32 %v2625, %v2626
      %v2628 = vsub.f32 1.0, %v2627
      %v2629 = vmul.f32 %v2626, %v2628
      %v2630 = vadd.f32 %v2626, %v2629
      %vm2631 = vweird.f32 %v2625
      %vm2632 = vweird.f32 %v2626
      %vm2633 = vmor %vm2631, %vm2632
      %v2634 = vsel %vm2633, %v2626, %v2630
      %v2635 = vand.u32 2147483647, %v2625
      %vm2636 = vcmp.eq.f32.partialorder %v2635, 8.507059e+37
      %v2637 = vand.u32 %v2625, 2147483648
      %v2638 = vor.u32 1.1754944e-38, %v2637
      %v2639 = vsel %vm2636, %v2638, %v2634
      %v2640 = vmul.f32 1.0, %v2639
      %v2641 = vmul.f32 %v2620, %v2425
      %v2642 = vmul.f32 %v2601, %v2621
      %v2643 = vadd.f32 %v2641, %v2642
      %v2644 = vtanh.pop %v2643
      %v2645 = vmul.f32 %v2640, %v2644
      %s2646 = scalar_lea.vmem [#allocation2], 56
      %2647 = vst [vmem:[%s2646] sm:$0xff] %v2645
      %2648 = vst [vmem:[%s335] sm:$0xff] %v2645
      %2649 = vst [vmem:[%s342] sm:$0xff] %v2643
      %p2650 = scmp.lt.s32.totalorder %s23, 1
      %s2651 = scalar_select %p2650, %s23, 1
      %p2652 = scmp.lt.s32.totalorder %s22, 0
      %s2653 = scalar_select %p2652, %s22, 0
      %s2654 = sadd.s32 %s2653, %s2651
      %s2655 = smul.addr %s2654, 8
      %s2656 = scalar_lea.vmem %s5, %s2655
      %p2657 = scmp.lt.s32.totalorder %s23, 1
      %s2658 = scalar_select %p2657, %s23, 1
      %p2659 = scmp.lt.s32.totalorder %s22, 0
      %s2660 = scalar_select %p2659, %s22, 0
      %s2661 = sadd.s32 %s2660, %s2658
      %s2662 = smul.addr %s2661, 8
      %s2663 = scalar_lea.vmem %s6, %s2662
      // Predicated region
      $region49: #{encoder_forward.1} parent=39 // pred_check
        %p2664 = pneg %p175
      $region50: #{encoder_forward.1} parent=39 // pred_check_branch
        %2666 = sbr.rel (%p2664) target = $region52
      $region51: #{encoder_forward.1} parent=39 // pred_region
        _
      $region52: #{encoder_forward.1} parent=39 // pred_fallthru
        _
      // Predicated region
      $region53: #{encoder_forward.1} parent=39 // pred_check
        %p2667 = pneg %p203
      $region54: #{encoder_forward.1} parent=39 // pred_check_branch
        %2669 = sbr.rel (%p2667) target = $region56
      $region55: #{encoder_forward.1} parent=39 // pred_region
        _
      $region56: #{encoder_forward.1} parent=39 // pred_fallthru
        _
    $region40: #{encoder_forward.1} parent=5 // pred_fallthru
      _
    %p2670 = scmp.le.s32.totalorder 2, %s13
    // Predicated region
    $region57: #{encoder_forward.1} parent=5 // pred_check
      %p2671 = pneg %p2670
    $region58: #{encoder_forward.1} parent=5 // pred_check_branch
      %2673 = sbr.rel (%p2671) target = $region60
    $region59: #{encoder_forward.1} parent=5 // pred_region
      %s2674 = ssub.s32 %s13, 2
      // Predicated region
      $region61: #{encoder_forward.1} parent=59 // pred_check
        %p2675 = pneg %p181
      $region62: #{encoder_forward.1} parent=59 // pred_check_branch
        %2677 = sbr.rel (%p2675) target = $region64
      $region63: #{encoder_forward.1} parent=59 // pred_region
        %p2678 = scmp.lt.s32.totalorder %s25, 1
        %s2679 = scalar_select %p2678, %s25, 1
        %p2680 = scmp.lt.s32.totalorder %s24, 0
        %s2681 = scalar_select %p2680, %s24, 0
        %s2682 = sadd.s32 %s2681, %s2679
        %s2683 = smul.addr %s2682, 8
        %s2684 = scalar_lea.vmem %s5, %s2683
      $region64: #{encoder_forward.1} parent=59 // pred_fallthru
        _
      // Predicated region
      $region65: #{encoder_forward.1} parent=59 // pred_check
        %p2685 = pneg %p209
      $region66: #{encoder_forward.1} parent=59 // pred_check_branch
        %2687 = sbr.rel (%p2685) target = $region68
      $region67: #{encoder_forward.1} parent=59 // pred_region
        %p2688 = scmp.lt.s32.totalorder %s25, 1
        %s2689 = scalar_select %p2688, %s25, 1
        %p2690 = scmp.lt.s32.totalorder %s24, 0
        %s2691 = scalar_select %p2690, %s24, 0
        %s2692 = sadd.s32 %s2691, %s2689
        %s2693 = smul.addr %s2692, 8
        %s2694 = scalar_lea.vmem %s6, %s2693
      $region68: #{encoder_forward.1} parent=59 // pred_fallthru
        _
    $region60: #{encoder_forward.1} parent=5 // pred_fallthru
      _
  $region6: #{encoder_forward.1} parent=0 // loop_footer
    %s17 = sadd.s32 1, %s13
  $region7: #{encoder_forward.1} parent=0 // loop_footer_branch
    %12 = sbr.rel target = $region3
  $region8: #{encoder_forward.1} parent=0 // loop_exit
    _

</llo_original>
